<compile_context>
chip_gen: v7x
topology: tpu7x:2x2x1
jax: 0.10.0
libtpu: 0.0.40
codegen_flags: <defaults>
</compile_context>

<pallas_src>
import functools

import jax
import jax.numpy as jnp
import numpy as np
from jax.experimental import pallas as pl
from jax.experimental.pallas import tpu as pltpu


# ----------------------------------------------------------------------------
# Fused Pallas kernel: the whole layer (pooling, convs, LN, attention, proj)
# for the whole batch in a single invocation.
# ----------------------------------------------------------------------------
def _p2m_fused_kernel(
    x_ref,        # (B*N, C)  f32   spatial tokens (flattened batch)
    m_ref,        # (B*L, C)  f32   memory tokens (flattened batch)
    gather_ref,   # (1+kh*kw, S_tot, B*N) bf16  [0]=placed avg-pool, rest=max corners
    convw_ref,    # (5, C, C) bf16  residual 1x1 conv weights, pre-folded (W^T + I)
    qkvpe_ref,    # (5, C, C) bf16  [q*scale, k, v, proj, eye]
    masks_ref,    # (S_tot, 8) f32  per-scale row masks (cols 0..4), cols 5..7 zero
    vec_ref,      # (8, C)    f32   [b_s1..b_s4, b_max, ln_g, ln_b, proj_b]
    amask_ref,    # (B*L, S_tot) f32 additive attention mask (0 / -1e30)
    mout_ref,     # (B*L, C)  f32   out: attention output (pre-reshape)
    mxout_ref,    # (B*C, n_mx) f32 out: conv'd max-pool tokens, transposed per batch
    kv_scr,       # (S_tot, C) f32  VMEM scratch: aligned kv-input layout
    *, B, L, C, num_heads, S_pad, mx_off, m_off, n_mx, n_gather,
):
    f32 = jnp.float32
    bf16 = jnp.bfloat16
    x16 = x_ref[...].astype(bf16)                                    # (B*N, C)

    # ---- pyramid pooling (placed layout, no concats) ----
    # avg scales: one block-diagonal matmul; max scale: corner gathers + maxima.
    pooled = jnp.dot(gather_ref[0], x16, preferred_element_type=f32)  # (S_tot, C)
    mx = jnp.dot(gather_ref[1], x16, preferred_element_type=f32)
    for g in range(2, n_gather):
        mx = jnp.maximum(mx, jnp.dot(gather_ref[g], x16, preferred_element_type=f32))
    pooled = pooled + mx            # rows are disjoint (avg rows vs max rows)

    # ---- residual 1x1 convs for all 5 scales (row-masked, no slicing) ----
    masks_f = masks_ref[...]                                          # (S_tot, 8)
    vec_all = vec_ref[...]                                            # (8, C)
    conv = jnp.dot(masks_f, vec_all, preferred_element_type=f32)      # placed biases
    pooled16 = pooled.astype(bf16)
    masks16 = masks_f.astype(bf16)
    for s in range(5):
        conv = conv + jnp.dot(masks16[:, s:s + 1] * pooled16, convw_ref[s],
                              preferred_element_type=f32)

    # ---- returned max_pool: conv'd max rows, transposed (C, n_mx) via eye-matmul ----
    eye = qkvpe_ref[4].astype(f32)                                    # exact 0/1
    for b in range(B):
        seg = conv[b * S_pad + mx_off:b * S_pad + mx_off + n_mx, :]   # (n_mx, C) aligned
        mxout_ref[b * C:(b + 1) * C, :] = jax.lax.dot_general(
            eye, seg, (((1,), (1,)), ((), ())), preferred_element_type=f32)

    # ---- LayerNorm (row-wise; pad/m rows are harmless and m rows get overwritten) ----
    mu = jnp.mean(conv, axis=-1, keepdims=True)
    var = jnp.mean(jnp.square(conv - mu), axis=-1, keepdims=True)
    normed = (conv - mu) * jax.lax.rsqrt(var + 1e-5) * vec_all[5:6, :] + vec_all[6:7, :]

    # ---- build kv input in the 8-aligned scratch: [avg | pad | max | m] per batch ----
    kv_scr[...] = normed
    m_f = m_ref[...]                                                  # (B*L, C)
    for b in range(B):
        kv_scr[b * S_pad + m_off:b * S_pad + m_off + L, :] = m_f[b * L:(b + 1) * L, :]
    kv16 = kv_scr[...].astype(bf16)

    # ---- q / k / v: three full-width projections (scale pre-folded into q weight) ----
    q16 = jnp.dot(m_f.astype(bf16), qkvpe_ref[0], preferred_element_type=f32).astype(bf16)
    k16 = jnp.dot(kv16, qkvpe_ref[1], preferred_element_type=f32).astype(bf16)
    v16 = jnp.dot(kv16, qkvpe_ref[2], preferred_element_type=f32).astype(bf16)

    # ---- per-head attention: only score / out matmuls per head; heads lane-concat ----
    amask = amask_ref[...]                            # blocks cross-batch & pad keys
    hd = C // num_heads
    outs = []
    for h in range(num_heads):
        sl = slice(h * hd, (h + 1) * hd)
        s_h = jax.lax.dot_general(q16[:, sl], k16[:, sl], (((1,), (1,)), ((), ())),
                                  preferred_element_type=f32) + amask  # (B*L, S_tot)
        s_h = s_h - jnp.max(s_h, axis=-1, keepdims=True)
        e = jnp.exp(s_h)
        p_h = e / jnp.sum(e, axis=-1, keepdims=True)  # exact divide (review note)
        outs.append(jnp.dot(p_h.astype(bf16), v16[:, sl], preferred_element_type=f32))
    o_full = jnp.concatenate(outs, axis=-1)                           # (B*L, C)

    # ---- output projection + bias ----
    mout_ref[...] = jnp.dot(o_full.astype(bf16), qkvpe_ref[3],
                            preferred_element_type=f32) + vec_all[7:8, :]


# ----------------------------------------------------------------------------
# Trace-time layout constants (numpy; PyTorch-exact adaptive pooling)
# ----------------------------------------------------------------------------
def _pool_bins(size, out):
    return [((i * size) // out, -(-((i + 1) * size) // out)) for i in range(out)]


def _build_layout_constants(B, H, W, L, patch_size, out_sizes):
    N = H * W
    n_avg = sum(o * o for o in out_sizes)
    mh, mw = H * 4 // patch_size, W * 4 // patch_size
    n_mx = mh * mw
    rup = lambda v: ((v + 7) // 8) * 8
    mx_off = rup(n_avg)
    m_off = mx_off + rup(n_mx)
    S_pad = m_off + rup(L)
    S_tot = B * S_pad

    pavg = np.zeros((S_tot, B * N), np.float32)
    masks = np.zeros((S_tot, 8), np.float32)
    r = 0
    for s, o in enumerate(out_sizes):
        hb, wb = _pool_bins(H, o), _pool_bins(W, o)
        for b in range(B):
            idx = 0
            for (h0, h1) in hb:
                for (w0, w1) in wb:
                    row = b * S_pad + r + idx
                    inv = 1.0 / ((h1 - h0) * (w1 - w0))
                    for hh in range(h0, h1):
                        pavg[row, b * N + hh * W + w0:b * N + hh * W + w1] = inv
                    masks[row, s] = 1.0
                    idx += 1
        r += o * o

    hb, wb = _pool_bins(H, mh), _pool_bins(W, mw)
    kh = max(h1 - h0 for h0, h1 in hb)
    kw = max(w1 - w0 for w0, w1 in wb)
    sels = np.zeros((kh * kw, S_tot, B * N), np.float32)
    for b in range(B):
        for i, (h0, h1) in enumerate(hb):
            for j, (w0, w1) in enumerate(wb):
                row = b * S_pad + mx_off + i * mw + j
                masks[row, 4] = 1.0
                for di in range(kh):
                    for dj in range(kw):
                        hh = h0 + min(di, h1 - h0 - 1)
                        ww = w0 + min(dj, w1 - w0 - 1)
                        sels[di * kw + dj, row, b * N + hh * W + ww] = 1.0
    gather = np.concatenate([pavg[None], sels], axis=0)

    amask = np.full((B * L, S_tot), -1e30, np.float32)
    for b in range(B):
        qs = slice(b * L, (b + 1) * L)
        amask[qs, b * S_pad:b * S_pad + n_avg] = 0.0
        amask[qs, b * S_pad + mx_off:b * S_pad + mx_off + n_mx] = 0.0
        amask[qs, b * S_pad + m_off:b * S_pad + m_off + L] = 0.0
    return gather, masks, amask, (S_pad, mx_off, m_off, n_mx, mh, mw)


# ----------------------------------------------------------------------------
# Forward wrapper: a single pallas_call for the whole layer
# ----------------------------------------------------------------------------
@functools.partial(jax.jit, static_argnums=(3, 4, 5, 6))
def p2m_attention_forward(kp, x, m, H, W, patch_size, num_heads):
    B, L, C = m.shape
    N = x.shape[1]
    assert N == H * W and C % num_heads == 0

    # NOTE: Python round() (banker's rounding) here matches the in-file reference; the
    # PyTorch module uses the same expression, so exact-.5 cases behave identically.
    out_sizes = [round(H * 4 / 12), round(H * 4 / 16),
                 round(H * 4 / 20), round(H * 4 / 24)]
    gather_np, masks_np, amask_np, meta = _build_layout_constants(
        B, H, W, L, patch_size, out_sizes)
    S_pad, mx_off, m_off, n_mx, mh, mw = meta
    S_tot = B * S_pad

    x_flat = x.reshape(B * N, C)
    m_flat = m.reshape(B * L, C)
    gather = jnp.asarray(gather_np, dtype=jnp.bfloat16)
    masks = jnp.asarray(masks_np)
    amask = jnp.asarray(amask_np)

    kernel = functools.partial(
        _p2m_fused_kernel, B=B, L=L, C=C, num_heads=num_heads, S_pad=S_pad,
        mx_off=mx_off, m_off=m_off, n_mx=n_mx, n_gather=int(gather.shape[0]))

    def fullspec(shape):
        zeros = (0,) * len(shape)
        return pl.BlockSpec(tuple(shape), lambda i, z=zeros: z)

    operands = (x_flat, m_flat, gather, kp["convw"], kp["qkvpe"], masks,
                kp["vec"], amask)

    mout, mxout = pl.pallas_call(
        kernel,
        out_shape=(jax.ShapeDtypeStruct((B * L, C), jnp.float32),
                   jax.ShapeDtypeStruct((B * C, n_mx), jnp.float32)),
        grid=(1,),
        in_specs=[fullspec(op.shape) for op in operands],
        out_specs=(fullspec((B * L, C)), fullspec((B * C, n_mx))),
        scratch_shapes=[pltpu.VMEM((S_tot, C), jnp.float32)],
        compiler_params=pltpu.CompilerParams(dimension_semantics=("arbitrary",)),
    )(*operands)

    m_out = mout.reshape(B, L, C)                     # contiguous, free reshape
    max_pool = mxout.reshape(B, C, mh, mw)            # contiguous, free reshape
    return m_out, max_pool


# ----------------------------------------------------------------------------
# Parameters (PyTorch layout) + one-time kernel re-layout
# ----------------------------------------------------------------------------
def init_params(key, dim):
    """Parameters in PyTorch layout (Conv2d / Linear store (out, in))."""
    ks = jax.random.split(key, 14)

    def w(k, shape, s=0.05):
        return s * jax.random.normal(k, shape, dtype=jnp.float32)

    names = ["s1", "s2", "s3", "s4", "max"]
    p = {}
    for i, n in enumerate(names):
        p[f"pool_{n}_w"] = w(ks[i], (dim, dim))             # Conv2d 1x1 (Cout, Cin)
        p[f"pool_{n}_b"] = w(ks[5 + i], (dim,), 0.02)
    p["ln_g"] = jnp.ones((dim,), jnp.float32)
    p["ln_b"] = jnp.zeros((dim,), jnp.float32)
    p["q_w"] = w(ks[10], (dim, dim))                        # Linear (out, in), no bias
    p["kv_w"] = w(ks[11], (2 * dim, dim))                   # Linear (out, in), no bias
    p["proj_w"] = w(ks[12], (dim, dim))
    p["proj_b"] = w(ks[13], (dim,), 0.02)
    return p


def prepare_params(p, dim, num_heads):
    """One-time re-layout: fold the residual identity into the conv weights, fold the
    attention scale into q, stack everything into a few bf16/f32 operands."""
    names = ["s1", "s2", "s3", "s4", "max"]
    eye = jnp.eye(dim, dtype=jnp.float32)
    scale = (dim // num_heads) ** (-0.5)
    kvt = p["kv_w"].T                                        # (C, 2C)
    convw = jnp.stack([p[f"pool_{n}_w"].T + eye for n in names])          # (5, C, C)
    qkvpe = jnp.stack([p["q_w"].T * scale, kvt[:, :dim], kvt[:, dim:],
                       p["proj_w"].T, eye])                               # (5, C, C)
    vec = jnp.stack([p[f"pool_{n}_b"] for n in names]
                    + [p["ln_g"], p["ln_b"], p["proj_b"]])                # (8, C)
    return {"convw": convw.astype(jnp.bfloat16),
            "qkvpe": qkvpe.astype(jnp.bfloat16),
            "vec": vec.astype(jnp.float32)}


# ----------------------------------------------------------------------------
# Pure-JAX reference (mirrors the PyTorch module exactly) for validation
# ----------------------------------------------------------------------------
def reference_forward(p, x, m, H, W, patch_size, num_heads):
    B, L, C = m.shape
    hd = C // num_heads
    scale = hd ** (-0.5)
    q = (m @ p["q_w"].T).reshape(B, L, num_heads, hd).transpose(0, 2, 1, 3)
    x_ = x.transpose(0, 2, 1).reshape(B, C, H, W)

    def apool(t, oh, ow, mode):
        Hh, Ww = t.shape[-2:]
        rows = []
        for i in range(oh):
            h0, h1 = (i * Hh) // oh, -(-((i + 1) * Hh) // oh)
            cols = []
            for j in range(ow):
                w0, w1 = (j * Ww) // ow, -(-((j + 1) * Ww) // ow)
                patch = t[:, :, h0:h1, w0:w1]
                cols.append(jnp.mean(patch, axis=(-2, -1)) if mode == "avg"
                            else jnp.max(patch, axis=(-2, -1)))
            rows.append(jnp.stack(cols, axis=-1))
        return jnp.stack(rows, axis=-2)

    def conv_res(t, w, b):
        return t + jnp.einsum("oc,bchw->bohw", w, t) + b[None, :, None, None]

    pooled = []
    for d, n in zip([12, 16, 20, 24], ["s1", "s2", "s3", "s4"]):
        o = round(H * 4 / d)
        pooled.append(conv_res(apool(x_, o, o, "avg"),
                               p[f"pool_{n}_w"], p[f"pool_{n}_b"]))
    mh, mw = H * 4 // patch_size, W * 4 // patch_size
    mx = conv_res(apool(x_, mh, mw, "max"), p["pool_max_w"], p["pool_max_b"])

    toks = [t.reshape(B, C, -1).transpose(0, 2, 1) for t in pooled + [mx]]
    pc = jnp.concatenate(toks, axis=1)
    mu = jnp.mean(pc, axis=-1, keepdims=True)
    var = jnp.mean(jnp.square(pc - mu), axis=-1, keepdims=True)
    pc = (pc - mu) / jnp.sqrt(var + 1e-5) * p["ln_g"] + p["ln_b"]

    pm = jnp.concatenate([pc, m], axis=1)
    kv = (pm @ p["kv_w"].T).reshape(B, -1, 2, num_heads, hd).transpose(2, 0, 3, 1, 4)
    k, v = kv[0], kv[1]
    attn = jax.nn.softmax((q @ k.transpose(0, 1, 3, 2)) * scale, axis=-1)
    o = (attn @ v).transpose(0, 2, 1, 3).reshape(B, L, C)
    m_out = o @ p["proj_w"].T + p["proj_b"]
    return m_out, mx


# ----------------------------------------------------------------------------
if __name__ == "__main__":
    B, dim, num_heads = 2, 32, 8
    H = W = 8
    patch_size = 8
    N, L = H * W, 8

    key = jax.random.PRNGKey(0)
    kx, km, kpar = jax.random.split(key, 3)
    x = jax.random.normal(kx, (B, N, dim), dtype=jnp.float32)
    m = jax.random.normal(km, (B, L, dim), dtype=jnp.float32)
    params = init_params(kpar, dim)
    kparams = prepare_params(params, dim, num_heads)

    m_out, max_pool = p2m_attention_forward(kparams, x, m, H, W, patch_size, num_heads)
    jax.block_until_ready((m_out, max_pool))

    assert m_out.shape == (B, L, dim)
    assert max_pool.shape == (B, dim, H * 4 // patch_size, W * 4 // patch_size)

    with jax.default_matmul_precision("float32"):
        m_ref, mx_ref = reference_forward(params, x, m, H, W, patch_size, num_heads)
    assert jnp.allclose(m_out, m_ref, atol=5e-2, rtol=5e-2), \
        float(jnp.max(jnp.abs(m_out - m_ref)))
    assert jnp.allclose(max_pool, mx_ref, atol=5e-2, rtol=5e-2), \
        float(jnp.max(jnp.abs(max_pool - mx_ref)))
    print("KERNEL_OK")
</pallas_src>

<mosaic_0001>
module attributes {stable_mosaic.version = 11 : i64} {
  func.func @_p2m_fused_kernel(%arg0: i32, %arg1: memref<128x32xf32, #tpu.memory_space<vmem>>, %arg2: memref<16x32xf32, #tpu.memory_space<vmem>>, %arg3: memref<5x96x128xbf16, #tpu.memory_space<vmem>>, %arg4: memref<5x32x32xbf16, #tpu.memory_space<vmem>>, %arg5: memref<5x32x32xbf16, #tpu.memory_space<vmem>>, %arg6: memref<96x8xf32, #tpu.memory_space<vmem>>, %arg7: memref<8x32xf32, #tpu.memory_space<vmem>>, %arg8: memref<16x96xf32, #tpu.memory_space<vmem>>, %arg9: memref<16x32xf32, #tpu.memory_space<vmem>>, %arg10: memref<64x16xf32, #tpu.memory_space<vmem>>, %arg11: memref<96x32xf32, #tpu.memory_space<vmem>>) attributes {dimension_semantics = [#tpu.dimension_semantics<arbitrary>], iteration_bounds = array<i64: 1>, scalar_prefetch = 0 : i64, scratch_operands = 1 : i64, tpu.core_type = #tpu.core_type<tc>, window_params = [{pipeline_mode = #tpu.pipeline_mode<synchronous>, transform_indices = @transform_0, window_bounds = array<i64: 128, 32>}, {pipeline_mode = #tpu.pipeline_mode<synchronous>, transform_indices = @transform_1, window_bounds = array<i64: 16, 32>}, {pipeline_mode = #tpu.pipeline_mode<synchronous>, transform_indices = @transform_2, window_bounds = array<i64: 5, 96, 128>}, {pipeline_mode = #tpu.pipeline_mode<synchronous>, transform_indices = @transform_3, window_bounds = array<i64: 5, 32, 32>}, {pipeline_mode = #tpu.pipeline_mode<synchronous>, transform_indices = @transform_4, window_bounds = array<i64: 5, 32, 32>}, {pipeline_mode = #tpu.pipeline_mode<synchronous>, transform_indices = @transform_5, window_bounds = array<i64: 96, 8>}, {pipeline_mode = #tpu.pipeline_mode<synchronous>, transform_indices = @transform_6, window_bounds = array<i64: 8, 32>}, {pipeline_mode = #tpu.pipeline_mode<synchronous>, transform_indices = @transform_7, window_bounds = array<i64: 16, 96>}, {pipeline_mode = #tpu.pipeline_mode<synchronous>, transform_indices = @transform_8, window_bounds = array<i64: 16, 32>}, {pipeline_mode = #tpu.pipeline_mode<synchronous>, transform_indices = @transform_9, window_bounds = array<i64: 64, 16>}]} {
    %c0 = arith.constant 0 : index
    %c0_0 = arith.constant 0 : index
    %0 = vector.load %arg1[%c0, %c0_0] : memref<128x32xf32, #tpu.memory_space<vmem>>, vector<128x32xf32>
    %1 = arith.truncf %0 : vector<128x32xf32> to vector<128x32xbf16>
    %c0_1 = arith.constant 0 : index
    %c0_2 = arith.constant 0 : index
    %c0_3 = arith.constant 0 : index
    %2 = vector.load %arg3[%c0_1, %c0_2, %c0_3] : memref<5x96x128xbf16, #tpu.memory_space<vmem>>, vector<1x96x128xbf16>
    %3 = vector.shape_cast %2 : vector<1x96x128xbf16> to vector<96x128xbf16>
    %cst = arith.constant dense<0.000000e+00> : vector<96x32xf32>
    %4 = tpu.matmul %3, %1, %cst {dimension_numbers = #tpu.dot_dimension_numbers<[1], [0], [0], [1], [0, 0, 1, 1], [], []>} : vector<96x128xbf16>, vector<128x32xbf16>, vector<96x32xf32> -> vector<96x32xf32>
    %c1 = arith.constant 1 : index
    %c0_4 = arith.constant 0 : index
    %c0_5 = arith.constant 0 : index
    %5 = vector.load %arg3[%c1, %c0_4, %c0_5] : memref<5x96x128xbf16, #tpu.memory_space<vmem>>, vector<1x96x128xbf16>
    %6 = vector.shape_cast %5 : vector<1x96x128xbf16> to vector<96x128xbf16>
    %cst_6 = arith.constant dense<0.000000e+00> : vector<96x32xf32>
    %7 = tpu.matmul %6, %1, %cst_6 {dimension_numbers = #tpu.dot_dimension_numbers<[1], [0], [0], [1], [0, 0, 1, 1], [], []>} : vector<96x128xbf16>, vector<128x32xbf16>, vector<96x32xf32> -> vector<96x32xf32>
    %c2 = arith.constant 2 : index
    %c0_7 = arith.constant 0 : index
    %c0_8 = arith.constant 0 : index
    %8 = vector.load %arg3[%c2, %c0_7, %c0_8] : memref<5x96x128xbf16, #tpu.memory_space<vmem>>, vector<1x96x128xbf16>
    %9 = vector.shape_cast %8 : vector<1x96x128xbf16> to vector<96x128xbf16>
    %cst_9 = arith.constant dense<0.000000e+00> : vector<96x32xf32>
    %10 = tpu.matmul %9, %1, %cst_9 {dimension_numbers = #tpu.dot_dimension_numbers<[1], [0], [0], [1], [0, 0, 1, 1], [], []>} : vector<96x128xbf16>, vector<128x32xbf16>, vector<96x32xf32> -> vector<96x32xf32>
    %11 = arith.maximumf %7, %10 : vector<96x32xf32>
    %c3 = arith.constant 3 : index
    %c0_10 = arith.constant 0 : index
    %c0_11 = arith.constant 0 : index
    %12 = vector.load %arg3[%c3, %c0_10, %c0_11] : memref<5x96x128xbf16, #tpu.memory_space<vmem>>, vector<1x96x128xbf16>
    %13 = vector.shape_cast %12 : vector<1x96x128xbf16> to vector<96x128xbf16>
    %cst_12 = arith.constant dense<0.000000e+00> : vector<96x32xf32>
    %14 = tpu.matmul %13, %1, %cst_12 {dimension_numbers = #tpu.dot_dimension_numbers<[1], [0], [0], [1], [0, 0, 1, 1], [], []>} : vector<96x128xbf16>, vector<128x32xbf16>, vector<96x32xf32> -> vector<96x32xf32>
    %15 = arith.maximumf %11, %14 : vector<96x32xf32>
    %c4 = arith.constant 4 : index
    %c0_13 = arith.constant 0 : index
    %c0_14 = arith.constant 0 : index
    %16 = vector.load %arg3[%c4, %c0_13, %c0_14] : memref<5x96x128xbf16, #tpu.memory_space<vmem>>, vector<1x96x128xbf16>
    %17 = vector.shape_cast %16 : vector<1x96x128xbf16> to vector<96x128xbf16>
    %cst_15 = arith.constant dense<0.000000e+00> : vector<96x32xf32>
    %18 = tpu.matmul %17, %1, %cst_15 {dimension_numbers = #tpu.dot_dimension_numbers<[1], [0], [0], [1], [0, 0, 1, 1], [], []>} : vector<96x128xbf16>, vector<128x32xbf16>, vector<96x32xf32> -> vector<96x32xf32>
    %19 = arith.maximumf %15, %18 : vector<96x32xf32>
    %20 = arith.addf %4, %19 : vector<96x32xf32>
    %c0_16 = arith.constant 0 : index
    %c0_17 = arith.constant 0 : index
    %21 = vector.load %arg6[%c0_16, %c0_17] : memref<96x8xf32, #tpu.memory_space<vmem>>, vector<96x8xf32>
    %c0_18 = arith.constant 0 : index
    %c0_19 = arith.constant 0 : index
    %22 = vector.load %arg7[%c0_18, %c0_19] : memref<8x32xf32, #tpu.memory_space<vmem>>, vector<8x32xf32>
    %cst_20 = arith.constant dense<0.000000e+00> : vector<96x32xf32>
    %23 = tpu.matmul %21, %22, %cst_20 {dimension_numbers = #tpu.dot_dimension_numbers<[1], [0], [0], [1], [0, 0, 1, 1], [], []>} : vector<96x8xf32>, vector<8x32xf32>, vector<96x32xf32> -> vector<96x32xf32>
    %24 = arith.truncf %20 : vector<96x32xf32> to vector<96x32xbf16>
    %25 = arith.truncf %21 : vector<96x8xf32> to vector<96x8xbf16>
    %26 = vector.extract_strided_slice %25 {offsets = [0, 0], sizes = [96, 1], strides = [1, 1]} : vector<96x8xbf16> to vector<96x1xbf16>
    %27 = vector.broadcast %26 : vector<96x1xbf16> to vector<96x32xbf16>
    %28 = arith.mulf %27, %24 : vector<96x32xbf16>
    %c0_21 = arith.constant 0 : index
    %c0_22 = arith.constant 0 : index
    %c0_23 = arith.constant 0 : index
    %29 = vector.load %arg4[%c0_21, %c0_22, %c0_23] : memref<5x32x32xbf16, #tpu.memory_space<vmem>>, vector<1x32x32xbf16>
    %30 = vector.shape_cast %29 : vector<1x32x32xbf16> to vector<32x32xbf16>
    %cst_24 = arith.constant dense<0.000000e+00> : vector<96x32xf32>
    %31 = tpu.matmul %28, %30, %cst_24 {dimension_numbers = #tpu.dot_dimension_numbers<[1], [0], [0], [1], [0, 0, 1, 1], [], []>} : vector<96x32xbf16>, vector<32x32xbf16>, vector<96x32xf32> -> vector<96x32xf32>
    %32 = arith.addf %23, %31 : vector<96x32xf32>
    %33 = vector.extract_strided_slice %25 {offsets = [0, 1], sizes = [96, 1], strides = [1, 1]} : vector<96x8xbf16> to vector<96x1xbf16>
    %34 = vector.broadcast %33 : vector<96x1xbf16> to vector<96x32xbf16>
    %35 = arith.mulf %34, %24 : vector<96x32xbf16>
    %c1_25 = arith.constant 1 : index
    %c0_26 = arith.constant 0 : index
    %c0_27 = arith.constant 0 : index
    %36 = vector.load %arg4[%c1_25, %c0_26, %c0_27] : memref<5x32x32xbf16, #tpu.memory_space<vmem>>, vector<1x32x32xbf16>
    %37 = vector.shape_cast %36 : vector<1x32x32xbf16> to vector<32x32xbf16>
    %cst_28 = arith.constant dense<0.000000e+00> : vector<96x32xf32>
    %38 = tpu.matmul %35, %37, %cst_28 {dimension_numbers = #tpu.dot_dimension_numbers<[1], [0], [0], [1], [0, 0, 1, 1], [], []>} : vector<96x32xbf16>, vector<32x32xbf16>, vector<96x32xf32> -> vector<96x32xf32>
    %39 = arith.addf %32, %38 : vector<96x32xf32>
    %40 = vector.extract_strided_slice %25 {offsets = [0, 2], sizes = [96, 1], strides = [1, 1]} : vector<96x8xbf16> to vector<96x1xbf16>
    %41 = vector.broadcast %40 : vector<96x1xbf16> to vector<96x32xbf16>
    %42 = arith.mulf %41, %24 : vector<96x32xbf16>
    %c2_29 = arith.constant 2 : index
    %c0_30 = arith.constant 0 : index
    %c0_31 = arith.constant 0 : index
    %43 = vector.load %arg4[%c2_29, %c0_30, %c0_31] : memref<5x32x32xbf16, #tpu.memory_space<vmem>>, vector<1x32x32xbf16>
    %44 = vector.shape_cast %43 : vector<1x32x32xbf16> to vector<32x32xbf16>
    %cst_32 = arith.constant dense<0.000000e+00> : vector<96x32xf32>
    %45 = tpu.matmul %42, %44, %cst_32 {dimension_numbers = #tpu.dot_dimension_numbers<[1], [0], [0], [1], [0, 0, 1, 1], [], []>} : vector<96x32xbf16>, vector<32x32xbf16>, vector<96x32xf32> -> vector<96x32xf32>
    %46 = arith.addf %39, %45 : vector<96x32xf32>
    %47 = vector.extract_strided_slice %25 {offsets = [0, 3], sizes = [96, 1], strides = [1, 1]} : vector<96x8xbf16> to vector<96x1xbf16>
    %48 = vector.broadcast %47 : vector<96x1xbf16> to vector<96x32xbf16>
    %49 = arith.mulf %48, %24 : vector<96x32xbf16>
    %c3_33 = arith.constant 3 : index
    %c0_34 = arith.constant 0 : index
    %c0_35 = arith.constant 0 : index
    %50 = vector.load %arg4[%c3_33, %c0_34, %c0_35] : memref<5x32x32xbf16, #tpu.memory_space<vmem>>, vector<1x32x32xbf16>
    %51 = vector.shape_cast %50 : vector<1x32x32xbf16> to vector<32x32xbf16>
    %cst_36 = arith.constant dense<0.000000e+00> : vector<96x32xf32>
    %52 = tpu.matmul %49, %51, %cst_36 {dimension_numbers = #tpu.dot_dimension_numbers<[1], [0], [0], [1], [0, 0, 1, 1], [], []>} : vector<96x32xbf16>, vector<32x32xbf16>, vector<96x32xf32> -> vector<96x32xf32>
    %53 = arith.addf %46, %52 : vector<96x32xf32>
    %54 = vector.extract_strided_slice %25 {offsets = [0, 4], sizes = [96, 1], strides = [1, 1]} : vector<96x8xbf16> to vector<96x1xbf16>
    %55 = vector.broadcast %54 : vector<96x1xbf16> to vector<96x32xbf16>
    %56 = arith.mulf %55, %24 : vector<96x32xbf16>
    %c4_37 = arith.constant 4 : index
    %c0_38 = arith.constant 0 : index
    %c0_39 = arith.constant 0 : index
    %57 = vector.load %arg4[%c4_37, %c0_38, %c0_39] : memref<5x32x32xbf16, #tpu.memory_space<vmem>>, vector<1x32x32xbf16>
    %58 = vector.shape_cast %57 : vector<1x32x32xbf16> to vector<32x32xbf16>
    %cst_40 = arith.constant dense<0.000000e+00> : vector<96x32xf32>
    %59 = tpu.matmul %56, %58, %cst_40 {dimension_numbers = #tpu.dot_dimension_numbers<[1], [0], [0], [1], [0, 0, 1, 1], [], []>} : vector<96x32xbf16>, vector<32x32xbf16>, vector<96x32xf32> -> vector<96x32xf32>
    %60 = arith.addf %53, %59 : vector<96x32xf32>
    %c4_41 = arith.constant 4 : index
    %c0_42 = arith.constant 0 : index
    %c0_43 = arith.constant 0 : index
    %61 = vector.load %arg5[%c4_41, %c0_42, %c0_43] : memref<5x32x32xbf16, #tpu.memory_space<vmem>>, vector<1x32x32xbf16>
    %62 = vector.shape_cast %61 : vector<1x32x32xbf16> to vector<32x32xbf16>
    %63 = arith.extf %62 : vector<32x32xbf16> to vector<32x32xf32>
    %64 = vector.extract_strided_slice %60 {offsets = [24, 0], sizes = [16, 32], strides = [1, 1]} : vector<96x32xf32> to vector<16x32xf32>
    %cst_44 = arith.constant dense<0.000000e+00> : vector<32x16xf32>
    %65 = tpu.matmul %63, %64, %cst_44 {dimension_numbers = #tpu.dot_dimension_numbers<[1], [1], [0], [0], [0, 0, 1, 0], [], []>} : vector<32x32xf32>, vector<16x32xf32>, vector<32x16xf32> -> vector<32x16xf32>
    %c0_45 = arith.constant 0 : index
    %c0_46 = arith.constant 0 : index
    %66 = vector.load %arg10[%c0_45, %c0_46] : memref<64x16xf32, #tpu.memory_space<vmem>>, vector<32x16xf32>
    tpu.vector_store %arg10[%c0_45, %c0_46], %65 {strides = array<i32>} : memref<64x16xf32, #tpu.memory_space<vmem>>, vector<32x16xf32>,
    %67 = vector.extract_strided_slice %60 {offsets = [72, 0], sizes = [16, 32], strides = [1, 1]} : vector<96x32xf32> to vector<16x32xf32>
    %cst_47 = arith.constant dense<0.000000e+00> : vector<32x16xf32>
    %68 = tpu.matmul %63, %67, %cst_47 {dimension_numbers = #tpu.dot_dimension_numbers<[1], [1], [0], [0], [0, 0, 1, 0], [], []>} : vector<32x32xf32>, vector<16x32xf32>, vector<32x16xf32> -> vector<32x16xf32>
    %c32 = arith.constant 32 : index
    %c0_48 = arith.constant 0 : index
    %69 = vector.load %arg10[%c32, %c0_48] : memref<64x16xf32, #tpu.memory_space<vmem>>, vector<32x16xf32>
    tpu.vector_store %arg10[%c32, %c0_48], %68 {strides = array<i32>} : memref<64x16xf32, #tpu.memory_space<vmem>>, vector<32x16xf32>,
    %cst_49 = arith.constant dense<0.000000e+00> : vector<96xf32>
    %70 = vector.multi_reduction <add>, %60, %cst_49 [1] : vector<96x32xf32> to vector<96xf32>
    %71 = vector.shape_cast %70 : vector<96xf32> to vector<96x1xf32>
    %cst_50 = arith.constant 3.200000e+01 : f32
    %72 = vector.broadcast %cst_50 : f32 to vector<96x1xf32>
    %73 = arith.divf %71, %72 : vector<96x1xf32>
    %74 = vector.broadcast %73 : vector<96x1xf32> to vector<96x32xf32>
    %75 = arith.subf %60, %74 : vector<96x32xf32>
    %76 = arith.mulf %75, %75 : vector<96x32xf32>
    %cst_51 = arith.constant dense<0.000000e+00> : vector<96xf32>
    %77 = vector.multi_reduction <add>, %76, %cst_51 [1] : vector<96x32xf32> to vector<96xf32>
    %78 = vector.shape_cast %77 : vector<96xf32> to vector<96x1xf32>
    %cst_52 = arith.constant 3.200000e+01 : f32
    %79 = vector.broadcast %cst_52 : f32 to vector<96x1xf32>
    %80 = arith.divf %78, %79 : vector<96x1xf32>
    %81 = vector.broadcast %73 : vector<96x1xf32> to vector<96x32xf32>
    %82 = arith.subf %60, %81 : vector<96x32xf32>
    %cst_53 = arith.constant 9.99999974E-6 : f32
    %83 = vector.broadcast %cst_53 : f32 to vector<96x1xf32>
    %84 = arith.addf %80, %83 : vector<96x1xf32>
    %85 = math.rsqrt %84 : vector<96x1xf32>
    %86 = vector.broadcast %85 : vector<96x1xf32> to vector<96x32xf32>
    %87 = arith.mulf %82, %86 : vector<96x32xf32>
    %88 = vector.extract_strided_slice %22 {offsets = [5, 0], sizes = [1, 32], strides = [1, 1]} : vector<8x32xf32> to vector<1x32xf32>
    %89 = vector.broadcast %88 : vector<1x32xf32> to vector<96x32xf32>
    %90 = arith.mulf %87, %89 : vector<96x32xf32>
    %91 = vector.extract_strided_slice %22 {offsets = [6, 0], sizes = [1, 32], strides = [1, 1]} : vector<8x32xf32> to vector<1x32xf32>
    %92 = vector.broadcast %91 : vector<1x32xf32> to vector<96x32xf32>
    %93 = arith.addf %90, %92 : vector<96x32xf32>
    %c0_54 = arith.constant 0 : index
    %c0_55 = arith.constant 0 : index
    %94 = vector.load %arg11[%c0_54, %c0_55] : memref<96x32xf32, #tpu.memory_space<vmem>>, vector<96x32xf32>
    tpu.vector_store %arg11[%c0_54, %c0_55], %93 {strides = array<i32>} : memref<96x32xf32, #tpu.memory_space<vmem>>, vector<96x32xf32>,
    %c0_56 = arith.constant 0 : index
    %c0_57 = arith.constant 0 : index
    %95 = vector.load %arg2[%c0_56, %c0_57] : memref<16x32xf32, #tpu.memory_space<vmem>>, vector<16x32xf32>
    %96 = vector.extract_strided_slice %95 {offsets = [0, 0], sizes = [8, 32], strides = [1, 1]} : vector<16x32xf32> to vector<8x32xf32>
    %c40 = arith.constant 40 : index
    %c0_58 = arith.constant 0 : index
    %97 = vector.load %arg11[%c40, %c0_58] : memref<96x32xf32, #tpu.memory_space<vmem>>, vector<8x32xf32>
    tpu.vector_store %arg11[%c40, %c0_58], %96 {strides = array<i32>} : memref<96x32xf32, #tpu.memory_space<vmem>>, vector<8x32xf32>,
    %98 = vector.extract_strided_slice %95 {offsets = [8, 0], sizes = [8, 32], strides = [1, 1]} : vector<16x32xf32> to vector<8x32xf32>
    %c88 = arith.constant 88 : index
    %c0_59 = arith.constant 0 : index
    %99 = vector.load %arg11[%c88, %c0_59] : memref<96x32xf32, #tpu.memory_space<vmem>>, vector<8x32xf32>
    tpu.vector_store %arg11[%c88, %c0_59], %98 {strides = array<i32>} : memref<96x32xf32, #tpu.memory_space<vmem>>, vector<8x32xf32>,
    %c0_60 = arith.constant 0 : index
    %c0_61 = arith.constant 0 : index
    %100 = vector.load %arg11[%c0_60, %c0_61] : memref<96x32xf32, #tpu.memory_space<vmem>>, vector<96x32xf32>
    %101 = arith.truncf %100 : vector<96x32xf32> to vector<96x32xbf16>
    %102 = arith.truncf %95 : vector<16x32xf32> to vector<16x32xbf16>
    %c0_62 = arith.constant 0 : index
    %c0_63 = arith.constant 0 : index
    %c0_64 = arith.constant 0 : index
    %103 = vector.load %arg5[%c0_62, %c0_63, %c0_64] : memref<5x32x32xbf16, #tpu.memory_space<vmem>>, vector<1x32x32xbf16>
    %104 = vector.shape_cast %103 : vector<1x32x32xbf16> to vector<32x32xbf16>
    %cst_65 = arith.constant dense<0.000000e+00> : vector<16x32xf32>
    %105 = tpu.matmul %102, %104, %cst_65 {dimension_numbers = #tpu.dot_dimension_numbers<[1], [0], [0], [1], [0, 0, 1, 1], [], []>} : vector<16x32xbf16>, vector<32x32xbf16>, vector<16x32xf32> -> vector<16x32xf32>
    %106 = arith.truncf %105 : vector<16x32xf32> to vector<16x32xbf16>
    %c1_66 = arith.constant 1 : index
    %c0_67 = arith.constant 0 : index
    %c0_68 = arith.constant 0 : index
    %107 = vector.load %arg5[%c1_66, %c0_67, %c0_68] : memref<5x32x32xbf16, #tpu.memory_space<vmem>>, vector<1x32x32xbf16>
    %108 = vector.shape_cast %107 : vector<1x32x32xbf16> to vector<32x32xbf16>
    %cst_69 = arith.constant dense<0.000000e+00> : vector<96x32xf32>
    %109 = tpu.matmul %101, %108, %cst_69 {dimension_numbers = #tpu.dot_dimension_numbers<[1], [0], [0], [1], [0, 0, 1, 1], [], []>} : vector<96x32xbf16>, vector<32x32xbf16>, vector<96x32xf32> -> vector<96x32xf32>
    %110 = arith.truncf %109 : vector<96x32xf32> to vector<96x32xbf16>
    %c2_70 = arith.constant 2 : index
    %c0_71 = arith.constant 0 : index
    %c0_72 = arith.constant 0 : index
    %111 = vector.load %arg5[%c2_70, %c0_71, %c0_72] : memref<5x32x32xbf16, #tpu.memory_space<vmem>>, vector<1x32x32xbf16>
    %112 = vector.shape_cast %111 : vector<1x32x32xbf16> to vector<32x32xbf16>
    %cst_73 = arith.constant dense<0.000000e+00> : vector<96x32xf32>
    %113 = tpu.matmul %101, %112, %cst_73 {dimension_numbers = #tpu.dot_dimension_numbers<[1], [0], [0], [1], [0, 0, 1, 1], [], []>} : vector<96x32xbf16>, vector<32x32xbf16>, vector<96x32xf32> -> vector<96x32xf32>
    %114 = arith.truncf %113 : vector<96x32xf32> to vector<96x32xbf16>
    %c0_74 = arith.constant 0 : index
    %c0_75 = arith.constant 0 : index
    %115 = vector.load %arg8[%c0_74, %c0_75] : memref<16x96xf32, #tpu.memory_space<vmem>>, vector<16x96xf32>
    %116 = vector.extract_strided_slice %106 {offsets = [0, 0], sizes = [16, 4], strides = [1, 1]} : vector<16x32xbf16> to vector<16x4xbf16>
    %117 = vector.extract_strided_slice %110 {offsets = [0, 0], sizes = [96, 4], strides = [1, 1]} : vector<96x32xbf16> to vector<96x4xbf16>
    %cst_76 = arith.constant dense<0.000000e+00> : vector<16x96xf32>
    %118 = tpu.matmul %116, %117, %cst_76 {dimension_numbers = #tpu.dot_dimension_numbers<[1], [1], [0], [0], [0, 0, 1, 0], [], []>} : vector<16x4xbf16>, vector<96x4xbf16>, vector<16x96xf32> -> vector<16x96xf32>
    %119 = arith.addf %118, %115 : vector<16x96xf32>
    %cst_77 = arith.constant dense<0xFF800000> : vector<16xf32>
    %120 = vector.multi_reduction <maximumf>, %119, %cst_77 [1] : vector<16x96xf32> to vector<16xf32>
    %121 = vector.shape_cast %120 : vector<16xf32> to vector<16x1xf32>
    %122 = vector.broadcast %121 : vector<16x1xf32> to vector<16x96xf32>
    %123 = arith.subf %119, %122 : vector<16x96xf32>
    %124 = math.exp %123 : vector<16x96xf32>
    %cst_78 = arith.constant dense<0.000000e+00> : vector<16xf32>
    %125 = vector.multi_reduction <add>, %124, %cst_78 [1] : vector<16x96xf32> to vector<16xf32>
    %126 = vector.shape_cast %125 : vector<16xf32> to vector<16x1xf32>
    %127 = vector.broadcast %126 : vector<16x1xf32> to vector<16x96xf32>
    %128 = arith.divf %124, %127 : vector<16x96xf32>
    %129 = arith.truncf %128 : vector<16x96xf32> to vector<16x96xbf16>
    %130 = vector.extract_strided_slice %114 {offsets = [0, 0], sizes = [96, 4], strides = [1, 1]} : vector<96x32xbf16> to vector<96x4xbf16>
    %cst_79 = arith.constant dense<0.000000e+00> : vector<16x4xf32>
    %131 = tpu.matmul %129, %130, %cst_79 {dimension_numbers = #tpu.dot_dimension_numbers<[1], [0], [0], [1], [0, 0, 1, 1], [], []>} : vector<16x96xbf16>, vector<96x4xbf16>, vector<16x4xf32> -> vector<16x4xf32>
    %132 = vector.extract_strided_slice %106 {offsets = [0, 4], sizes = [16, 4], strides = [1, 1]} : vector<16x32xbf16> to vector<16x4xbf16>
    %133 = vector.extract_strided_slice %110 {offsets = [0, 4], sizes = [96, 4], strides = [1, 1]} : vector<96x32xbf16> to vector<96x4xbf16>
    %cst_80 = arith.constant dense<0.000000e+00> : vector<16x96xf32>
    %134 = tpu.matmul %132, %133, %cst_80 {dimension_numbers = #tpu.dot_dimension_numbers<[1], [1], [0], [0], [0, 0, 1, 0], [], []>} : vector<16x4xbf16>, vector<96x4xbf16>, vector<16x96xf32> -> vector<16x96xf32>
    %135 = arith.addf %134, %115 : vector<16x96xf32>
    %cst_81 = arith.constant dense<0xFF800000> : vector<16xf32>
    %136 = vector.multi_reduction <maximumf>, %135, %cst_81 [1] : vector<16x96xf32> to vector<16xf32>
    %137 = vector.shape_cast %136 : vector<16xf32> to vector<16x1xf32>
    %138 = vector.broadcast %137 : vector<16x1xf32> to vector<16x96xf32>
    %139 = arith.subf %135, %138 : vector<16x96xf32>
    %140 = math.exp %139 : vector<16x96xf32>
    %cst_82 = arith.constant dense<0.000000e+00> : vector<16xf32>
    %141 = vector.multi_reduction <add>, %140, %cst_82 [1] : vector<16x96xf32> to vector<16xf32>
    %142 = vector.shape_cast %141 : vector<16xf32> to vector<16x1xf32>
    %143 = vector.broadcast %142 : vector<16x1xf32> to vector<16x96xf32>
    %144 = arith.divf %140, %143 : vector<16x96xf32>
    %145 = arith.truncf %144 : vector<16x96xf32> to vector<16x96xbf16>
    %146 = vector.extract_strided_slice %114 {offsets = [0, 4], sizes = [96, 4], strides = [1, 1]} : vector<96x32xbf16> to vector<96x4xbf16>
    %cst_83 = arith.constant dense<0.000000e+00> : vector<16x4xf32>
    %147 = tpu.matmul %145, %146, %cst_83 {dimension_numbers = #tpu.dot_dimension_numbers<[1], [0], [0], [1], [0, 0, 1, 1], [], []>} : vector<16x96xbf16>, vector<96x4xbf16>, vector<16x4xf32> -> vector<16x4xf32>
    %148 = vector.extract_strided_slice %106 {offsets = [0, 8], sizes = [16, 4], strides = [1, 1]} : vector<16x32xbf16> to vector<16x4xbf16>
    %149 = vector.extract_strided_slice %110 {offsets = [0, 8], sizes = [96, 4], strides = [1, 1]} : vector<96x32xbf16> to vector<96x4xbf16>
    %cst_84 = arith.constant dense<0.000000e+00> : vector<16x96xf32>
    %150 = tpu.matmul %148, %149, %cst_84 {dimension_numbers = #tpu.dot_dimension_numbers<[1], [1], [0], [0], [0, 0, 1, 0], [], []>} : vector<16x4xbf16>, vector<96x4xbf16>, vector<16x96xf32> -> vector<16x96xf32>
    %151 = arith.addf %150, %115 : vector<16x96xf32>
    %cst_85 = arith.constant dense<0xFF800000> : vector<16xf32>
    %152 = vector.multi_reduction <maximumf>, %151, %cst_85 [1] : vector<16x96xf32> to vector<16xf32>
    %153 = vector.shape_cast %152 : vector<16xf32> to vector<16x1xf32>
    %154 = vector.broadcast %153 : vector<16x1xf32> to vector<16x96xf32>
    %155 = arith.subf %151, %154 : vector<16x96xf32>
    %156 = math.exp %155 : vector<16x96xf32>
    %cst_86 = arith.constant dense<0.000000e+00> : vector<16xf32>
    %157 = vector.multi_reduction <add>, %156, %cst_86 [1] : vector<16x96xf32> to vector<16xf32>
    %158 = vector.shape_cast %157 : vector<16xf32> to vector<16x1xf32>
    %159 = vector.broadcast %158 : vector<16x1xf32> to vector<16x96xf32>
    %160 = arith.divf %156, %159 : vector<16x96xf32>
    %161 = arith.truncf %160 : vector<16x96xf32> to vector<16x96xbf16>
    %162 = vector.extract_strided_slice %114 {offsets = [0, 8], sizes = [96, 4], strides = [1, 1]} : vector<96x32xbf16> to vector<96x4xbf16>
    %cst_87 = arith.constant dense<0.000000e+00> : vector<16x4xf32>
    %163 = tpu.matmul %161, %162, %cst_87 {dimension_numbers = #tpu.dot_dimension_numbers<[1], [0], [0], [1], [0, 0, 1, 1], [], []>} : vector<16x96xbf16>, vector<96x4xbf16>, vector<16x4xf32> -> vector<16x4xf32>
    %164 = vector.extract_strided_slice %106 {offsets = [0, 12], sizes = [16, 4], strides = [1, 1]} : vector<16x32xbf16> to vector<16x4xbf16>
    %165 = vector.extract_strided_slice %110 {offsets = [0, 12], sizes = [96, 4], strides = [1, 1]} : vector<96x32xbf16> to vector<96x4xbf16>
    %cst_88 = arith.constant dense<0.000000e+00> : vector<16x96xf32>
    %166 = tpu.matmul %164, %165, %cst_88 {dimension_numbers = #tpu.dot_dimension_numbers<[1], [1], [0], [0], [0, 0, 1, 0], [], []>} : vector<16x4xbf16>, vector<96x4xbf16>, vector<16x96xf32> -> vector<16x96xf32>
    %167 = arith.addf %166, %115 : vector<16x96xf32>
    %cst_89 = arith.constant dense<0xFF800000> : vector<16xf32>
    %168 = vector.multi_reduction <maximumf>, %167, %cst_89 [1] : vector<16x96xf32> to vector<16xf32>
    %169 = vector.shape_cast %168 : vector<16xf32> to vector<16x1xf32>
    %170 = vector.broadcast %169 : vector<16x1xf32> to vector<16x96xf32>
    %171 = arith.subf %167, %170 : vector<16x96xf32>
    %172 = math.exp %171 : vector<16x96xf32>
    %cst_90 = arith.constant dense<0.000000e+00> : vector<16xf32>
    %173 = vector.multi_reduction <add>, %172, %cst_90 [1] : vector<16x96xf32> to vector<16xf32>
    %174 = vector.shape_cast %173 : vector<16xf32> to vector<16x1xf32>
    %175 = vector.broadcast %174 : vector<16x1xf32> to vector<16x96xf32>
    %176 = arith.divf %172, %175 : vector<16x96xf32>
    %177 = arith.truncf %176 : vector<16x96xf32> to vector<16x96xbf16>
    %178 = vector.extract_strided_slice %114 {offsets = [0, 12], sizes = [96, 4], strides = [1, 1]} : vector<96x32xbf16> to vector<96x4xbf16>
    %cst_91 = arith.constant dense<0.000000e+00> : vector<16x4xf32>
    %179 = tpu.matmul %177, %178, %cst_91 {dimension_numbers = #tpu.dot_dimension_numbers<[1], [0], [0], [1], [0, 0, 1, 1], [], []>} : vector<16x96xbf16>, vector<96x4xbf16>, vector<16x4xf32> -> vector<16x4xf32>
    %180 = vector.extract_strided_slice %106 {offsets = [0, 16], sizes = [16, 4], strides = [1, 1]} : vector<16x32xbf16> to vector<16x4xbf16>
    %181 = vector.extract_strided_slice %110 {offsets = [0, 16], sizes = [96, 4], strides = [1, 1]} : vector<96x32xbf16> to vector<96x4xbf16>
    %cst_92 = arith.constant dense<0.000000e+00> : vector<16x96xf32>
    %182 = tpu.matmul %180, %181, %cst_92 {dimension_numbers = #tpu.dot_dimension_numbers<[1], [1], [0], [0], [0, 0, 1, 0], [], []>} : vector<16x4xbf16>, vector<96x4xbf16>, vector<16x96xf32> -> vector<16x96xf32>
    %183 = arith.addf %182, %115 : vector<16x96xf32>
    %cst_93 = arith.constant dense<0xFF800000> : vector<16xf32>
    %184 = vector.multi_reduction <maximumf>, %183, %cst_93 [1] : vector<16x96xf32> to vector<16xf32>
    %185 = vector.shape_cast %184 : vector<16xf32> to vector<16x1xf32>
    %186 = vector.broadcast %185 : vector<16x1xf32> to vector<16x96xf32>
    %187 = arith.subf %183, %186 : vector<16x96xf32>
    %188 = math.exp %187 : vector<16x96xf32>
    %cst_94 = arith.constant dense<0.000000e+00> : vector<16xf32>
    %189 = vector.multi_reduction <add>, %188, %cst_94 [1] : vector<16x96xf32> to vector<16xf32>
    %190 = vector.shape_cast %189 : vector<16xf32> to vector<16x1xf32>
    %191 = vector.broadcast %190 : vector<16x1xf32> to vector<16x96xf32>
    %192 = arith.divf %188, %191 : vector<16x96xf32>
    %193 = arith.truncf %192 : vector<16x96xf32> to vector<16x96xbf16>
    %194 = vector.extract_strided_slice %114 {offsets = [0, 16], sizes = [96, 4], strides = [1, 1]} : vector<96x32xbf16> to vector<96x4xbf16>
    %cst_95 = arith.constant dense<0.000000e+00> : vector<16x4xf32>
    %195 = tpu.matmul %193, %194, %cst_95 {dimension_numbers = #tpu.dot_dimension_numbers<[1], [0], [0], [1], [0, 0, 1, 1], [], []>} : vector<16x96xbf16>, vector<96x4xbf16>, vector<16x4xf32> -> vector<16x4xf32>
    %196 = vector.extract_strided_slice %106 {offsets = [0, 20], sizes = [16, 4], strides = [1, 1]} : vector<16x32xbf16> to vector<16x4xbf16>
    %197 = vector.extract_strided_slice %110 {offsets = [0, 20], sizes = [96, 4], strides = [1, 1]} : vector<96x32xbf16> to vector<96x4xbf16>
    %cst_96 = arith.constant dense<0.000000e+00> : vector<16x96xf32>
    %198 = tpu.matmul %196, %197, %cst_96 {dimension_numbers = #tpu.dot_dimension_numbers<[1], [1], [0], [0], [0, 0, 1, 0], [], []>} : vector<16x4xbf16>, vector<96x4xbf16>, vector<16x96xf32> -> vector<16x96xf32>
    %199 = arith.addf %198, %115 : vector<16x96xf32>
    %cst_97 = arith.constant dense<0xFF800000> : vector<16xf32>
    %200 = vector.multi_reduction <maximumf>, %199, %cst_97 [1] : vector<16x96xf32> to vector<16xf32>
    %201 = vector.shape_cast %200 : vector<16xf32> to vector<16x1xf32>
    %202 = vector.broadcast %201 : vector<16x1xf32> to vector<16x96xf32>
    %203 = arith.subf %199, %202 : vector<16x96xf32>
    %204 = math.exp %203 : vector<16x96xf32>
    %cst_98 = arith.constant dense<0.000000e+00> : vector<16xf32>
    %205 = vector.multi_reduction <add>, %204, %cst_98 [1] : vector<16x96xf32> to vector<16xf32>
    %206 = vector.shape_cast %205 : vector<16xf32> to vector<16x1xf32>
    %207 = vector.broadcast %206 : vector<16x1xf32> to vector<16x96xf32>
    %208 = arith.divf %204, %207 : vector<16x96xf32>
    %209 = arith.truncf %208 : vector<16x96xf32> to vector<16x96xbf16>
    %210 = vector.extract_strided_slice %114 {offsets = [0, 20], sizes = [96, 4], strides = [1, 1]} : vector<96x32xbf16> to vector<96x4xbf16>
    %cst_99 = arith.constant dense<0.000000e+00> : vector<16x4xf32>
    %211 = tpu.matmul %209, %210, %cst_99 {dimension_numbers = #tpu.dot_dimension_numbers<[1], [0], [0], [1], [0, 0, 1, 1], [], []>} : vector<16x96xbf16>, vector<96x4xbf16>, vector<16x4xf32> -> vector<16x4xf32>
    %212 = vector.extract_strided_slice %106 {offsets = [0, 24], sizes = [16, 4], strides = [1, 1]} : vector<16x32xbf16> to vector<16x4xbf16>
    %213 = vector.extract_strided_slice %110 {offsets = [0, 24], sizes = [96, 4], strides = [1, 1]} : vector<96x32xbf16> to vector<96x4xbf16>
    %cst_100 = arith.constant dense<0.000000e+00> : vector<16x96xf32>
    %214 = tpu.matmul %212, %213, %cst_100 {dimension_numbers = #tpu.dot_dimension_numbers<[1], [1], [0], [0], [0, 0, 1, 0], [], []>} : vector<16x4xbf16>, vector<96x4xbf16>, vector<16x96xf32> -> vector<16x96xf32>
    %215 = arith.addf %214, %115 : vector<16x96xf32>
    %cst_101 = arith.constant dense<0xFF800000> : vector<16xf32>
    %216 = vector.multi_reduction <maximumf>, %215, %cst_101 [1] : vector<16x96xf32> to vector<16xf32>
    %217 = vector.shape_cast %216 : vector<16xf32> to vector<16x1xf32>
    %218 = vector.broadcast %217 : vector<16x1xf32> to vector<16x96xf32>
    %219 = arith.subf %215, %218 : vector<16x96xf32>
    %220 = math.exp %219 : vector<16x96xf32>
    %cst_102 = arith.constant dense<0.000000e+00> : vector<16xf32>
    %221 = vector.multi_reduction <add>, %220, %cst_102 [1] : vector<16x96xf32> to vector<16xf32>
    %222 = vector.shape_cast %221 : vector<16xf32> to vector<16x1xf32>
    %223 = vector.broadcast %222 : vector<16x1xf32> to vector<16x96xf32>
    %224 = arith.divf %220, %223 : vector<16x96xf32>
    %225 = arith.truncf %224 : vector<16x96xf32> to vector<16x96xbf16>
    %226 = vector.extract_strided_slice %114 {offsets = [0, 24], sizes = [96, 4], strides = [1, 1]} : vector<96x32xbf16> to vector<96x4xbf16>
    %cst_103 = arith.constant dense<0.000000e+00> : vector<16x4xf32>
    %227 = tpu.matmul %225, %226, %cst_103 {dimension_numbers = #tpu.dot_dimension_numbers<[1], [0], [0], [1], [0, 0, 1, 1], [], []>} : vector<16x96xbf16>, vector<96x4xbf16>, vector<16x4xf32> -> vector<16x4xf32>
    %228 = vector.extract_strided_slice %106 {offsets = [0, 28], sizes = [16, 4], strides = [1, 1]} : vector<16x32xbf16> to vector<16x4xbf16>
    %229 = vector.extract_strided_slice %110 {offsets = [0, 28], sizes = [96, 4], strides = [1, 1]} : vector<96x32xbf16> to vector<96x4xbf16>
    %cst_104 = arith.constant dense<0.000000e+00> : vector<16x96xf32>
    %230 = tpu.matmul %228, %229, %cst_104 {dimension_numbers = #tpu.dot_dimension_numbers<[1], [1], [0], [0], [0, 0, 1, 0], [], []>} : vector<16x4xbf16>, vector<96x4xbf16>, vector<16x96xf32> -> vector<16x96xf32>
    %231 = arith.addf %230, %115 : vector<16x96xf32>
    %cst_105 = arith.constant dense<0xFF800000> : vector<16xf32>
    %232 = vector.multi_reduction <maximumf>, %231, %cst_105 [1] : vector<16x96xf32> to vector<16xf32>
    %233 = vector.shape_cast %232 : vector<16xf32> to vector<16x1xf32>
    %234 = vector.broadcast %233 : vector<16x1xf32> to vector<16x96xf32>
    %235 = arith.subf %231, %234 : vector<16x96xf32>
    %236 = math.exp %235 : vector<16x96xf32>
    %cst_106 = arith.constant dense<0.000000e+00> : vector<16xf32>
    %237 = vector.multi_reduction <add>, %236, %cst_106 [1] : vector<16x96xf32> to vector<16xf32>
    %238 = vector.shape_cast %237 : vector<16xf32> to vector<16x1xf32>
    %239 = vector.broadcast %238 : vector<16x1xf32> to vector<16x96xf32>
    %240 = arith.divf %236, %239 : vector<16x96xf32>
    %241 = arith.truncf %240 : vector<16x96xf32> to vector<16x96xbf16>
    %242 = vector.extract_strided_slice %114 {offsets = [0, 28], sizes = [96, 4], strides = [1, 1]} : vector<96x32xbf16> to vector<96x4xbf16>
    %cst_107 = arith.constant dense<0.000000e+00> : vector<16x4xf32>
    %243 = tpu.matmul %241, %242, %cst_107 {dimension_numbers = #tpu.dot_dimension_numbers<[1], [0], [0], [1], [0, 0, 1, 1], [], []>} : vector<16x96xbf16>, vector<96x4xbf16>, vector<16x4xf32> -> vector<16x4xf32>
    %244 = tpu.concatenate %131, %147, %163, %179, %195, %211, %227, %243 in 1 : vector<16x4xf32>, vector<16x4xf32>, vector<16x4xf32>, vector<16x4xf32>, vector<16x4xf32>, vector<16x4xf32>, vector<16x4xf32>, vector<16x4xf32> -> vector<16x32xf32>
    %245 = arith.truncf %244 : vector<16x32xf32> to vector<16x32xbf16>
    %c3_108 = arith.constant 3 : index
    %c0_109 = arith.constant 0 : index
    %c0_110 = arith.constant 0 : index
    %246 = vector.load %arg5[%c3_108, %c0_109, %c0_110] : memref<5x32x32xbf16, #tpu.memory_space<vmem>>, vector<1x32x32xbf16>
    %247 = vector.shape_cast %246 : vector<1x32x32xbf16> to vector<32x32xbf16>
    %cst_111 = arith.constant dense<0.000000e+00> : vector<16x32xf32>
    %248 = tpu.matmul %245, %247, %cst_111 {dimension_numbers = #tpu.dot_dimension_numbers<[1], [0], [0], [1], [0, 0, 1, 1], [], []>} : vector<16x32xbf16>, vector<32x32xbf16>, vector<16x32xf32> -> vector<16x32xf32>
    %249 = vector.extract_strided_slice %22 {offsets = [7, 0], sizes = [1, 32], strides = [1, 1]} : vector<8x32xf32> to vector<1x32xf32>
    %250 = vector.broadcast %249 : vector<1x32xf32> to vector<16x32xf32>
    %251 = arith.addf %248, %250 : vector<16x32xf32>
    %c0_112 = arith.constant 0 : index
    %c0_113 = arith.constant 0 : index
    %252 = vector.load %arg9[%c0_112, %c0_113] : memref<16x32xf32, #tpu.memory_space<vmem>>, vector<16x32xf32>
    tpu.vector_store %arg9[%c0_112, %c0_113], %251 {strides = array<i32>} : memref<16x32xf32, #tpu.memory_space<vmem>>, vector<16x32xf32>,
    return
  }
  func.func @transform_0(%arg0: i32) -> (i32, i32) {
    %c0_i32 = arith.constant 0 : i32
    %c0_i32_0 = arith.constant 0 : i32
    %c0_i32_1 = arith.constant 0 : i32
    return %c0_i32, %c0_i32_0 : i32, i32
  }
  func.func @transform_1(%arg0: i32) -> (i32, i32) {
    %c0_i32 = arith.constant 0 : i32
    %c0_i32_0 = arith.constant 0 : i32
    %c0_i32_1 = arith.constant 0 : i32
    return %c0_i32, %c0_i32_0 : i32, i32
  }
  func.func @transform_2(%arg0: i32) -> (i32, i32, i32) {
    %c0_i32 = arith.constant 0 : i32
    %c0_i32_0 = arith.constant 0 : i32
    %c0_i32_1 = arith.constant 0 : i32
    %c0_i32_2 = arith.constant 0 : i32
    return %c0_i32, %c0_i32_0, %c0_i32_1 : i32, i32, i32
  }
  func.func @transform_3(%arg0: i32) -> (i32, i32, i32) {
    %c0_i32 = arith.constant 0 : i32
    %c0_i32_0 = arith.constant 0 : i32
    %c0_i32_1 = arith.constant 0 : i32
    %c0_i32_2 = arith.constant 0 : i32
    return %c0_i32, %c0_i32_0, %c0_i32_1 : i32, i32, i32
  }
  func.func @transform_4(%arg0: i32) -> (i32, i32, i32) {
    %c0_i32 = arith.constant 0 : i32
    %c0_i32_0 = arith.constant 0 : i32
    %c0_i32_1 = arith.constant 0 : i32
    %c0_i32_2 = arith.constant 0 : i32
    return %c0_i32, %c0_i32_0, %c0_i32_1 : i32, i32, i32
  }
  func.func @transform_5(%arg0: i32) -> (i32, i32) {
    %c0_i32 = arith.constant 0 : i32
    %c0_i32_0 = arith.constant 0 : i32
    %c0_i32_1 = arith.constant 0 : i32
    return %c0_i32, %c0_i32_0 : i32, i32
  }
  func.func @transform_6(%arg0: i32) -> (i32, i32) {
    %c0_i32 = arith.constant 0 : i32
    %c0_i32_0 = arith.constant 0 : i32
    %c0_i32_1 = arith.constant 0 : i32
    return %c0_i32, %c0_i32_0 : i32, i32
  }
  func.func @transform_7(%arg0: i32) -> (i32, i32) {
    %c0_i32 = arith.constant 0 : i32
    %c0_i32_0 = arith.constant 0 : i32
    %c0_i32_1 = arith.constant 0 : i32
    return %c0_i32, %c0_i32_0 : i32, i32
  }
  func.func @transform_8(%arg0: i32) -> (i32, i32) {
    %c0_i32 = arith.constant 0 : i32
    %c0_i32_0 = arith.constant 0 : i32
    %c0_i32_1 = arith.constant 0 : i32
    return %c0_i32, %c0_i32_0 : i32, i32
  }
  func.func @transform_9(%arg0: i32) -> (i32, i32) {
    %c0_i32 = arith.constant 0 : i32
    %c0_i32_0 = arith.constant 0 : i32
    %c0_i32_1 = arith.constant 0 : i32
    return %c0_i32, %c0_i32_0 : i32, i32
  }
}

</mosaic_0001>

<llo_original>
// kernel: p2m_attention_forward.1
$region0: #{p2m_attention_forward.1}
  #allocation0 [shape = 'u32[]', space=smem, size = 0x4, offset = 0x4, fixed_abs, tag = 'smem constant byte address 0x4 - core index']
  #allocation1 [shape = 'u32[144,128]{1,0:T(1,128)}', space=vmem, size = 0x12000, scoped, tag = 'internal scratch']
  #allocation2 [shape = 'f32[96,32]{1,0:T(8,128)}', space=vmem, size = 0xc000, scoped, tag = 'scratch operand']
  %s0 = inlined_call_operand.vmem [shape: f32[128,32], index: 0, kind: input, shape index: {}]
  %s1 = inlined_call_operand.vmem [shape: f32[16,32], index: 1, kind: input, shape index: {}]
  %s2 = inlined_call_operand.hbm [shape: bf16[5,96,128], index: 2, kind: input, shape index: {}]
  %s3 = inlined_call_operand.vmem [shape: bf16[5,32,32], index: 3, kind: input, shape index: {}]
  %s4 = inlined_call_operand.hbm [shape: bf16[5,32,32], index: 4, kind: input, shape index: {}]
  %s5 = inlined_call_operand.vmem [shape: f32[96,8], index: 5, kind: input, shape index: {}]
  %s6 = inlined_call_operand.hbm [shape: f32[8,32], index: 6, kind: input, shape index: {}]
  %s7 = inlined_call_operand.vmem [shape: f32[16,96], index: 7, kind: input, shape index: {}]
  %s8 = inlined_call_operand.hbm [shape: f32[16,32], index: 8, kind: output, shape index: {0}]
  %s9 = inlined_call_operand.vmem [shape: f32[64,16], index: 9, kind: output, shape index: {1}]
  %10 = xla_tuple %s8, %s9
  %s11 = sld [smem:[#allocation0]]
  $region62: #{p2m_attention_forward.1} parent=0
    _
  %s13 = ssub.s32 1, %s11
  %s14 = scalar_select 0, %s13, %s11
  $region1: #{p2m_attention_forward.1} parent=0
    #allocation3 [shape = 'u8[122880]{0}', space=vmem, size = 0x1e000, scoped, tag = 'input window, operand 2, single buffered']
    #allocation4 [shape = 's32[1]{0}', space=sflag, size = 0x4, scoped, tag = 'scoped memory for p2m_attention_forward.1']
    #allocation5 [shape = 's32[1]{0}', space=sflag, size = 0x4, scoped, tag = 'scoped memory for p2m_attention_forward.1']
    #allocation6 [shape = 'u8[40960]{0}', space=vmem, size = 0xa000, scoped, tag = 'input window, operand 4, single buffered']
    #allocation7 [shape = 's32[1]{0}', space=sflag, size = 0x4, scoped, tag = 'scoped memory for p2m_attention_forward.1']
    #allocation8 [shape = 'u8[4096]{0}', space=vmem, size = 0x1000, scoped, tag = 'input window, operand 6, single buffered']
    #allocation9 [shape = 'u8[8192]{0}', space=vmem, size = 0x2000, scoped, tag = 'output window, operand 0, single buffered']
    %15 = vsyncpa [#allocation4], 0
    %16 = vsyncpa [#allocation7], 0
    %17 = vsyncpa [#allocation5], 0
    // Predicated region
    $region2: #{p2m_attention_forward.1} parent=1 // pred_check
      _
    $region3: #{p2m_attention_forward.1} parent=1 // pred_check_branch
      %19 = sbr.rel (0) target = $region5
    $region4: #{p2m_attention_forward.1} parent=1 // pred_region
      _
    $region5: #{p2m_attention_forward.1} parent=1 // pred_fallthru
      _
    // Predicated region
    $region6: #{p2m_attention_forward.1} parent=1 // pred_check
      _
    $region7: #{p2m_attention_forward.1} parent=1 // pred_check_branch
      %21 = sbr.rel (0) target = $region9
    $region8: #{p2m_attention_forward.1} parent=1 // pred_region
      _
    $region9: #{p2m_attention_forward.1} parent=1 // pred_fallthru
      _
    // Predicated region
    $region10: #{p2m_attention_forward.1} parent=1 // pred_check
      _
    $region11: #{p2m_attention_forward.1} parent=1 // pred_check_branch
      %23 = sbr.rel (0) target = $region13
    $region12: #{p2m_attention_forward.1} parent=1 // pred_region
      %s25 = ssub.s32 3840, 3840
      %26 = vsyncadd [#allocation4], %s25
      %s27 = sshll.u32 [#allocation3], 4
      %s28 = int_to_ptr.vmem [resolvable:$true] %s27
      %33 = dma.hbm_to_vmem [thread:$0]  %s2, 3840, %s28, [#allocation4], 64, 64, 4
    $region13: #{p2m_attention_forward.1} parent=1 // pred_fallthru
      _
    // Predicated region
    $region14: #{p2m_attention_forward.1} parent=1 // pred_check
      _
    $region15: #{p2m_attention_forward.1} parent=1 // pred_check_branch
      %35 = sbr.rel (0) target = $region17
    $region16: #{p2m_attention_forward.1} parent=1 // pred_region
      _
    $region17: #{p2m_attention_forward.1} parent=1 // pred_fallthru
      _
    // Predicated region
    $region18: #{p2m_attention_forward.1} parent=1 // pred_check
      _
    $region19: #{p2m_attention_forward.1} parent=1 // pred_check_branch
      %37 = sbr.rel (0) target = $region21
    $region20: #{p2m_attention_forward.1} parent=1 // pred_region
      %s39 = ssub.s32 1280, 1280
      %40 = vsyncadd [#allocation7], %s39
      %s41 = sshll.u32 [#allocation6], 4
      %s42 = int_to_ptr.vmem [resolvable:$true] %s41
      %47 = dma.hbm_to_vmem [thread:$0]  %s4, 1280, %s42, [#allocation7], 64, 64, 4
    $region21: #{p2m_attention_forward.1} parent=1 // pred_fallthru
      _
    // Predicated region
    $region22: #{p2m_attention_forward.1} parent=1 // pred_check
      _
    $region23: #{p2m_attention_forward.1} parent=1 // pred_check_branch
      %49 = sbr.rel (0) target = $region25
    $region24: #{p2m_attention_forward.1} parent=1 // pred_region
      _
    $region25: #{p2m_attention_forward.1} parent=1 // pred_fallthru
      _
    // Predicated region
    $region26: #{p2m_attention_forward.1} parent=1 // pred_check
      _
    $region27: #{p2m_attention_forward.1} parent=1 // pred_check_branch
      %51 = sbr.rel (0) target = $region29
    $region28: #{p2m_attention_forward.1} parent=1 // pred_region
      %s53 = ssub.s32 128, 128
      %54 = vsyncadd [#allocation7], %s53
      %s56 = sshll.u32 [#allocation8], 4
      %s57 = int_to_ptr.vmem [resolvable:$true] %s56
      %59 = dma.hbm_to_vmem [thread:$0]  %s6, 128, %s57, [#allocation7]
    $region29: #{p2m_attention_forward.1} parent=1 // pred_fallthru
      _
    // Predicated region
    $region30: #{p2m_attention_forward.1} parent=1 // pred_check
      _
    $region31: #{p2m_attention_forward.1} parent=1 // pred_check_branch
      %61 = sbr.rel (0) target = $region33
    $region32: #{p2m_attention_forward.1} parent=1 // pred_region
      _
    $region33: #{p2m_attention_forward.1} parent=1 // pred_fallthru
      _
    // Predicated region
    $region34: #{p2m_attention_forward.1} parent=1 // pred_check
      _
    $region35: #{p2m_attention_forward.1} parent=1 // pred_check_branch
      %63 = sbr.rel (0) target = $region37
    $region36: #{p2m_attention_forward.1} parent=1 // pred_region
      %64 = dma.done [#allocation4], 3840
    $region37: #{p2m_attention_forward.1} parent=1 // pred_fallthru
      _
    // Predicated region
    $region38: #{p2m_attention_forward.1} parent=1 // pred_check
      _
    $region39: #{p2m_attention_forward.1} parent=1 // pred_check_branch
      %66 = sbr.rel (0) target = $region41
    $region40: #{p2m_attention_forward.1} parent=1 // pred_region
      %67 = dma.done [#allocation7], 1280
    $region41: #{p2m_attention_forward.1} parent=1 // pred_fallthru
      _
    // Predicated region
    $region42: #{p2m_attention_forward.1} parent=1 // pred_check
      _
    $region43: #{p2m_attention_forward.1} parent=1 // pred_check_branch
      %69 = sbr.rel (0) target = $region45
    $region44: #{p2m_attention_forward.1} parent=1 // pred_region
      %70 = dma.done [#allocation7], 128
    $region45: #{p2m_attention_forward.1} parent=1 // pred_fallthru
      _
    %v72 = vld [vmem:[%s0] sm:$0xff]
    %v73 = vld [vmem:[%s0 + $0x8] sm:$0xff]
    %v74 = vld [vmem:[%s0 + $0x10] sm:$0xff]
    %v75 = vld [vmem:[%s0 + $0x18] sm:$0xff]
    %v76 = vld [vmem:[%s0 + $0x20] sm:$0xff]
    %v77 = vld [vmem:[%s0 + $0x28] sm:$0xff]
    %v78 = vld [vmem:[%s0 + $0x30] sm:$0xff]
    %v79 = vld [vmem:[%s0 + $0x38] sm:$0xff]
    %v80 = vld [vmem:[%s0 + $0x40] sm:$0xff]
    %v81 = vld [vmem:[%s0 + $0x48] sm:$0xff]
    %v82 = vld [vmem:[%s0 + $0x50] sm:$0xff]
    %v83 = vld [vmem:[%s0 + $0x58] sm:$0xff]
    %v84 = vld [vmem:[%s0 + $0x60] sm:$0xff]
    %v85 = vld [vmem:[%s0 + $0x68] sm:$0xff]
    %v86 = vld [vmem:[%s0 + $0x70] sm:$0xff]
    %v87 = vld [vmem:[%s0 + $0x78] sm:$0xff]
    %v88 = vpack.c.bf16 %v73, %v72
    %v89 = vpack.c.bf16 %v75, %v74
    %v90 = vpack.c.bf16 %v77, %v76
    %v91 = vpack.c.bf16 %v79, %v78
    %v92 = vpack.c.bf16 %v81, %v80
    %v93 = vpack.c.bf16 %v83, %v82
    %v94 = vpack.c.bf16 %v85, %v84
    %v95 = vpack.c.bf16 %v87, %v86
    %v96 = vld [vmem:[#allocation3] sm:$0xf]
    %v97 = vld [vmem:[#allocation3 + $0x4] sm:$0xf]
    %v98 = vld [vmem:[#allocation3 + $0x8] sm:$0xf]
    %v99 = vld [vmem:[#allocation3 + $0xc] sm:$0xf]
    %v100 = vld [vmem:[#allocation3 + $0x10] sm:$0xf]
    %v101 = vld [vmem:[#allocation3 + $0x14] sm:$0xf]
    %v102 = vld [vmem:[#allocation3 + $0x18] sm:$0xf]
    %v103 = vld [vmem:[#allocation3 + $0x1c] sm:$0xf]
    %v104 = vld [vmem:[#allocation3 + $0x20] sm:$0xf]
    %v105 = vld [vmem:[#allocation3 + $0x24] sm:$0xf]
    %v106 = vld [vmem:[#allocation3 + $0x28] sm:$0xf]
    %v107 = vld [vmem:[#allocation3 + $0x2c] sm:$0xf]
    %s108 = scalar_lea.vmem [#allocation3], 48
    %v109 = vld [vmem:[%s108] sm:$0xf]
    %v110 = vld [vmem:[%s108 + $0x4] sm:$0xf]
    %v111 = vld [vmem:[%s108 + $0x8] sm:$0xf]
    %v112 = vld [vmem:[%s108 + $0xc] sm:$0xf]
    %v113 = vld [vmem:[%s108 + $0x10] sm:$0xf]
    %v114 = vld [vmem:[%s108 + $0x14] sm:$0xf]
    %v115 = vld [vmem:[%s108 + $0x18] sm:$0xf]
    %v116 = vld [vmem:[%s108 + $0x1c] sm:$0xf]
    %v117 = vld [vmem:[%s108 + $0x20] sm:$0xf]
    %v118 = vld [vmem:[%s108 + $0x24] sm:$0xf]
    %v119 = vld [vmem:[%s108 + $0x28] sm:$0xf]
    %v120 = vld [vmem:[%s108 + $0x2c] sm:$0xf]
    %v133 = vunpack.c.l.b16 %v109
    %v134 = vunpack.c.l.b16 %v110
    %v135 = vunpack.c.l.b16 %v111
    %v136 = vunpack.c.l.b16 %v112
    %v137 = vunpack.c.l.b16 %v113
    %v138 = vunpack.c.l.b16 %v114
    %v139 = vunpack.c.l.b16 %v115
    %v140 = vunpack.c.l.b16 %v116
    %v141 = vunpack.c.l.b16 %v117
    %v142 = vunpack.c.l.b16 %v118
    %v143 = vunpack.c.l.b16 %v119
    %v144 = vunpack.c.l.b16 %v120
    %v145 = vpack.c.b16 %v134, %v133
    %v146 = vpack.c.b16 %v136, %v135
    %v147 = vpack.c.b16 %v138, %v137
    %v148 = vpack.c.b16 %v140, %v139
    %v149 = vpack.c.b16 %v142, %v141
    %v150 = vpack.c.b16 %v144, %v143
    %157 = vmatprep.subr.bf16.mxu0 0
    %158 = vmatpush1.bf16.msra.mxu0 %v88
    %159 = vmatprep.subr.bf16.mxu0 0
    %160 = vmatpush1.bf16.msra.mxu0 %v89
    %161 = vmatprep.subr.bf16.mxu0 0
    %162 = vmatpush1.bf16.msra.mxu0 %v90
    %163 = vmatprep.subr.bf16.mxu0 0
    %164 = vmatpush1.bf16.msra.mxu0 %v91
    %165 = vmatprep.subr.bf16.mxu0 0
    %166 = vmatpush1.bf16.msra.mxu0 %v92
    %167 = vmatprep.subr.bf16.mxu0 0
    %168 = vmatpush1.bf16.msra.mxu0 %v93
    %169 = vmatprep.subr.bf16.mxu0 0
    %170 = vmatpush1.bf16.msra.mxu0 %v94
    %171 = vmatprep.subr.bf16.mxu0 0
    %172 = vmatpush1.bf16.msra.mxu0 %v95
    %173 = vmatprep.subr.bf16.mxu0 0
    %174 = vmatpush1.bf16.msra.mxu0 0
    %175 = vmatprep.subr.bf16.mxu0 0
    %176 = vmatpush1.bf16.msra.mxu0 0
    %177 = vmatprep.subr.bf16.mxu0 0
    %178 = vmatpush1.bf16.msra.mxu0 0
    %179 = vmatprep.subr.bf16.mxu0 0
    %180 = vmatpush1.bf16.msra.mxu0 0
    %181 = vmatprep.subr.bf16.mxu0 0
    %182 = vmatpush1.bf16.msra.mxu0 0
    %183 = vmatprep.subr.bf16.mxu0 0
    %184 = vmatpush1.bf16.msra.mxu0 0
    %185 = vmatprep.subr.bf16.mxu0 0
    %186 = vmatpush1.bf16.msra.mxu0 0
    %187 = vmatprep.subr.bf16.mxu0 0
    %188 = vmatpush1.bf16.msra.mxu0 0
    %189 = vmatprep.mubr.bf16.mxu0 0
    %190 = vmatmul.mubr.bf16.gmra.mrb[0].mxu0 %v145
    %v191 = vpop.f32.mrb[0].mxu0
    %v192 = vadd.f32 0.0, %v191
    %v193 = vpop.f32.mrb[0].mxu0
    %v194 = vpop.f32.mrb[0].mxu0
    %v195 = vadd.f32 0.0, %v194
    %v196 = vpop.f32.mrb[0].mxu0
    %197 = vmatprep.mubr.bf16.mxu0 0
    %198 = vmatmul.mubr.bf16.gmra.mrb[0].mxu0 %v146
    %v199 = vpop.f32.mrb[0].mxu0
    %v200 = vadd.f32 0.0, %v199
    %v201 = vpop.f32.mrb[0].mxu0
    %v202 = vpop.f32.mrb[0].mxu0
    %v203 = vadd.f32 0.0, %v202
    %v204 = vpop.f32.mrb[0].mxu0
    %205 = vmatprep.mubr.bf16.mxu0 0
    %206 = vmatmul.mubr.bf16.gmra.mrb[0].mxu0 %v147
    %v207 = vpop.f32.mrb[0].mxu0
    %v208 = vadd.f32 0.0, %v207
    %v209 = vpop.f32.mrb[0].mxu0
    %v210 = vpop.f32.mrb[0].mxu0
    %v211 = vadd.f32 0.0, %v210
    %v212 = vpop.f32.mrb[0].mxu0
    %213 = vmatprep.mubr.bf16.mxu0 0
    %214 = vmatmul.mubr.bf16.gmra.mrb[0].mxu0 %v148
    %v215 = vpop.f32.mrb[0].mxu0
    %v216 = vadd.f32 0.0, %v215
    %v217 = vpop.f32.mrb[0].mxu0
    %v218 = vpop.f32.mrb[0].mxu0
    %v219 = vadd.f32 0.0, %v218
    %v220 = vpop.f32.mrb[0].mxu0
    %221 = vmatprep.mubr.bf16.mxu0 0
    %222 = vmatmul.mubr.bf16.gmra.mrb[0].mxu0 %v149
    %v223 = vpop.f32.mrb[0].mxu0
    %v224 = vadd.f32 0.0, %v223
    %v225 = vpop.f32.mrb[0].mxu0
    %v226 = vpop.f32.mrb[0].mxu0
    %v227 = vadd.f32 0.0, %v226
    %v228 = vpop.f32.mrb[0].mxu0
    %229 = vmatprep.mubr.bf16.mxu0 0
    %230 = vmatmul.mubr.bf16.gmra.mrb[0].mxu0 %v150
    %v231 = vpop.f32.mrb[0].mxu0
    %v232 = vadd.f32 0.0, %v231
    %v233 = vpop.f32.mrb[0].mxu0
    %v234 = vpop.f32.mrb[0].mxu0
    %v235 = vadd.f32 0.0, %v234
    %v236 = vpop.f32.mrb[0].mxu0
    %237 = vdwg.mxu0
    %s238 = scalar_lea.vmem [#allocation3], 96
    %v239 = vld [vmem:[%s238] sm:$0xf]
    %v240 = vld [vmem:[%s238 + $0x4] sm:$0xf]
    %v241 = vld [vmem:[%s238 + $0x8] sm:$0xf]
    %v242 = vld [vmem:[%s238 + $0xc] sm:$0xf]
    %v243 = vld [vmem:[%s238 + $0x10] sm:$0xf]
    %v244 = vld [vmem:[%s238 + $0x14] sm:$0xf]
    %v245 = vld [vmem:[%s238 + $0x18] sm:$0xf]
    %v246 = vld [vmem:[%s238 + $0x1c] sm:$0xf]
    %v247 = vld [vmem:[%s238 + $0x20] sm:$0xf]
    %v248 = vld [vmem:[%s238 + $0x24] sm:$0xf]
    %v249 = vld [vmem:[%s238 + $0x28] sm:$0xf]
    %v250 = vld [vmem:[%s238 + $0x2c] sm:$0xf]
    %v263 = vunpack.c.l.b16 %v239
    %v264 = vunpack.c.l.b16 %v240
    %v265 = vunpack.c.l.b16 %v241
    %v266 = vunpack.c.l.b16 %v242
    %v267 = vunpack.c.l.b16 %v243
    %v268 = vunpack.c.l.b16 %v244
    %v269 = vunpack.c.l.b16 %v245
    %v270 = vunpack.c.l.b16 %v246
    %v271 = vunpack.c.l.b16 %v247
    %v272 = vunpack.c.l.b16 %v248
    %v273 = vunpack.c.l.b16 %v249
    %v274 = vunpack.c.l.b16 %v250
    %v275 = vpack.c.b16 %v264, %v263
    %v276 = vpack.c.b16 %v266, %v265
    %v277 = vpack.c.b16 %v268, %v267
    %v278 = vpack.c.b16 %v270, %v269
    %v279 = vpack.c.b16 %v272, %v271
    %v280 = vpack.c.b16 %v274, %v273
    %287 = vmatprep.subr.bf16.mxu0 0
    %288 = vmatpush1.bf16.msra.mxu0 %v88
    %289 = vmatprep.subr.bf16.mxu0 0
    %290 = vmatpush1.bf16.msra.mxu0 %v89
    %291 = vmatprep.subr.bf16.mxu0 0
    %292 = vmatpush1.bf16.msra.mxu0 %v90
    %293 = vmatprep.subr.bf16.mxu0 0
    %294 = vmatpush1.bf16.msra.mxu0 %v91
    %295 = vmatprep.subr.bf16.mxu0 0
    %296 = vmatpush1.bf16.msra.mxu0 %v92
    %297 = vmatprep.subr.bf16.mxu0 0
    %298 = vmatpush1.bf16.msra.mxu0 %v93
    %299 = vmatprep.subr.bf16.mxu0 0
    %300 = vmatpush1.bf16.msra.mxu0 %v94
    %301 = vmatprep.subr.bf16.mxu0 0
    %302 = vmatpush1.bf16.msra.mxu0 %v95
    %303 = vmatprep.subr.bf16.mxu0 0
    %304 = vmatpush1.bf16.msra.mxu0 0
    %305 = vmatprep.subr.bf16.mxu0 0
    %306 = vmatpush1.bf16.msra.mxu0 0
    %307 = vmatprep.subr.bf16.mxu0 0
    %308 = vmatpush1.bf16.msra.mxu0 0
    %309 = vmatprep.subr.bf16.mxu0 0
    %310 = vmatpush1.bf16.msra.mxu0 0
    %311 = vmatprep.subr.bf16.mxu0 0
    %312 = vmatpush1.bf16.msra.mxu0 0
    %313 = vmatprep.subr.bf16.mxu0 0
    %314 = vmatpush1.bf16.msra.mxu0 0
    %315 = vmatprep.subr.bf16.mxu0 0
    %316 = vmatpush1.bf16.msra.mxu0 0
    %317 = vmatprep.subr.bf16.mxu0 0
    %318 = vmatpush1.bf16.msra.mxu0 0
    %319 = vmatprep.mubr.bf16.mxu0 0
    %320 = vmatmul.mubr.bf16.gmra.mrb[0].mxu0 %v275
    %v321 = vpop.f32.mrb[0].mxu0
    %v322 = vadd.f32 0.0, %v321
    %v323 = vpop.f32.mrb[0].mxu0
    %v324 = vpop.f32.mrb[0].mxu0
    %v325 = vadd.f32 0.0, %v324
    %v326 = vpop.f32.mrb[0].mxu0
    %327 = vmatprep.mubr.bf16.mxu0 0
    %328 = vmatmul.mubr.bf16.gmra.mrb[0].mxu0 %v276
    %v329 = vpop.f32.mrb[0].mxu0
    %v330 = vadd.f32 0.0, %v329
    %v331 = vpop.f32.mrb[0].mxu0
    %v332 = vpop.f32.mrb[0].mxu0
    %v333 = vadd.f32 0.0, %v332
    %v334 = vpop.f32.mrb[0].mxu0
    %335 = vmatprep.mubr.bf16.mxu0 0
    %336 = vmatmul.mubr.bf16.gmra.mrb[0].mxu0 %v277
    %v337 = vpop.f32.mrb[0].mxu0
    %v338 = vadd.f32 0.0, %v337
    %v339 = vpop.f32.mrb[0].mxu0
    %v340 = vpop.f32.mrb[0].mxu0
    %v341 = vadd.f32 0.0, %v340
    %v342 = vpop.f32.mrb[0].mxu0
    %343 = vmatprep.mubr.bf16.mxu0 0
    %344 = vmatmul.mubr.bf16.gmra.mrb[0].mxu0 %v278
    %v345 = vpop.f32.mrb[0].mxu0
    %v346 = vadd.f32 0.0, %v345
    %v347 = vpop.f32.mrb[0].mxu0
    %v348 = vpop.f32.mrb[0].mxu0
    %v349 = vadd.f32 0.0, %v348
    %v350 = vpop.f32.mrb[0].mxu0
    %351 = vmatprep.mubr.bf16.mxu0 0
    %352 = vmatmul.mubr.bf16.gmra.mrb[0].mxu0 %v279
    %v353 = vpop.f32.mrb[0].mxu0
    %v354 = vadd.f32 0.0, %v353
    %v355 = vpop.f32.mrb[0].mxu0
    %v356 = vpop.f32.mrb[0].mxu0
    %v357 = vadd.f32 0.0, %v356
    %v358 = vpop.f32.mrb[0].mxu0
    %359 = vmatprep.mubr.bf16.mxu0 0
    %360 = vmatmul.mubr.bf16.gmra.mrb[0].mxu0 %v280
    %v361 = vpop.f32.mrb[0].mxu0
    %v362 = vadd.f32 0.0, %v361
    %v363 = vpop.f32.mrb[0].mxu0
    %v364 = vpop.f32.mrb[0].mxu0
    %v365 = vadd.f32 0.0, %v364
    %v366 = vpop.f32.mrb[0].mxu0
    %367 = vdwg.mxu0
    %v368 = vmax.f32 %v192, %v322
    %v369 = vmax.f32 %v195, %v325
    %v370 = vmax.f32 %v200, %v330
    %v371 = vmax.f32 %v203, %v333
    %v372 = vmax.f32 %v208, %v338
    %v373 = vmax.f32 %v211, %v341
    %v374 = vmax.f32 %v216, %v346
    %v375 = vmax.f32 %v219, %v349
    %v376 = vmax.f32 %v224, %v354
    %v377 = vmax.f32 %v227, %v357
    %v378 = vmax.f32 %v232, %v362
    %v379 = vmax.f32 %v235, %v365
    %s380 = scalar_lea.vmem [#allocation3], 144
    %v381 = vld [vmem:[%s380] sm:$0xf]
    %v382 = vld [vmem:[%s380 + $0x4] sm:$0xf]
    %v383 = vld [vmem:[%s380 + $0x8] sm:$0xf]
    %v384 = vld [vmem:[%s380 + $0xc] sm:$0xf]
    %v385 = vld [vmem:[%s380 + $0x10] sm:$0xf]
    %v386 = vld [vmem:[%s380 + $0x14] sm:$0xf]
    %v387 = vld [vmem:[%s380 + $0x18] sm:$0xf]
    %v388 = vld [vmem:[%s380 + $0x1c] sm:$0xf]
    %v389 = vld [vmem:[%s380 + $0x20] sm:$0xf]
    %v390 = vld [vmem:[%s380 + $0x24] sm:$0xf]
    %v391 = vld [vmem:[%s380 + $0x28] sm:$0xf]
    %v392 = vld [vmem:[%s380 + $0x2c] sm:$0xf]
    %v405 = vunpack.c.l.b16 %v381
    %v406 = vunpack.c.l.b16 %v382
    %v407 = vunpack.c.l.b16 %v383
    %v408 = vunpack.c.l.b16 %v384
    %v409 = vunpack.c.l.b16 %v385
    %v410 = vunpack.c.l.b16 %v386
    %v411 = vunpack.c.l.b16 %v387
    %v412 = vunpack.c.l.b16 %v388
    %v413 = vunpack.c.l.b16 %v389
    %v414 = vunpack.c.l.b16 %v390
    %v415 = vunpack.c.l.b16 %v391
    %v416 = vunpack.c.l.b16 %v392
    %v417 = vpack.c.b16 %v406, %v405
    %v418 = vpack.c.b16 %v408, %v407
    %v419 = vpack.c.b16 %v410, %v409
    %v420 = vpack.c.b16 %v412, %v411
    %v421 = vpack.c.b16 %v414, %v413
    %v422 = vpack.c.b16 %v416, %v415
    %429 = vmatprep.subr.bf16.mxu0 0
    %430 = vmatpush1.bf16.msra.mxu0 %v88
    %431 = vmatprep.subr.bf16.mxu0 0
    %432 = vmatpush1.bf16.msra.mxu0 %v89
    %433 = vmatprep.subr.bf16.mxu0 0
    %434 = vmatpush1.bf16.msra.mxu0 %v90
    %435 = vmatprep.subr.bf16.mxu0 0
    %436 = vmatpush1.bf16.msra.mxu0 %v91
    %437 = vmatprep.subr.bf16.mxu0 0
    %438 = vmatpush1.bf16.msra.mxu0 %v92
    %439 = vmatprep.subr.bf16.mxu0 0
    %440 = vmatpush1.bf16.msra.mxu0 %v93
    %441 = vmatprep.subr.bf16.mxu0 0
    %442 = vmatpush1.bf16.msra.mxu0 %v94
    %443 = vmatprep.subr.bf16.mxu0 0
    %444 = vmatpush1.bf16.msra.mxu0 %v95
    %445 = vmatprep.subr.bf16.mxu0 0
    %446 = vmatpush1.bf16.msra.mxu0 0
    %447 = vmatprep.subr.bf16.mxu0 0
    %448 = vmatpush1.bf16.msra.mxu0 0
    %449 = vmatprep.subr.bf16.mxu0 0
    %450 = vmatpush1.bf16.msra.mxu0 0
    %451 = vmatprep.subr.bf16.mxu0 0
    %452 = vmatpush1.bf16.msra.mxu0 0
    %453 = vmatprep.subr.bf16.mxu0 0
    %454 = vmatpush1.bf16.msra.mxu0 0
    %455 = vmatprep.subr.bf16.mxu0 0
    %456 = vmatpush1.bf16.msra.mxu0 0
    %457 = vmatprep.subr.bf16.mxu0 0
    %458 = vmatpush1.bf16.msra.mxu0 0
    %459 = vmatprep.subr.bf16.mxu0 0
    %460 = vmatpush1.bf16.msra.mxu0 0
    %461 = vmatprep.mubr.bf16.mxu0 0
    %462 = vmatmul.mubr.bf16.gmra.mrb[0].mxu0 %v417
    %v463 = vpop.f32.mrb[0].mxu0
    %v464 = vadd.f32 0.0, %v463
    %v465 = vpop.f32.mrb[0].mxu0
    %v466 = vpop.f32.mrb[0].mxu0
    %v467 = vadd.f32 0.0, %v466
    %v468 = vpop.f32.mrb[0].mxu0
    %469 = vmatprep.mubr.bf16.mxu0 0
    %470 = vmatmul.mubr.bf16.gmra.mrb[0].mxu0 %v418
    %v471 = vpop.f32.mrb[0].mxu0
    %v472 = vadd.f32 0.0, %v471
    %v473 = vpop.f32.mrb[0].mxu0
    %v474 = vpop.f32.mrb[0].mxu0
    %v475 = vadd.f32 0.0, %v474
    %v476 = vpop.f32.mrb[0].mxu0
    %477 = vmatprep.mubr.bf16.mxu0 0
    %478 = vmatmul.mubr.bf16.gmra.mrb[0].mxu0 %v419
    %v479 = vpop.f32.mrb[0].mxu0
    %v480 = vadd.f32 0.0, %v479
    %v481 = vpop.f32.mrb[0].mxu0
    %v482 = vpop.f32.mrb[0].mxu0
    %v483 = vadd.f32 0.0, %v482
    %v484 = vpop.f32.mrb[0].mxu0
    %485 = vmatprep.mubr.bf16.mxu0 0
    %486 = vmatmul.mubr.bf16.gmra.mrb[0].mxu0 %v420
    %v487 = vpop.f32.mrb[0].mxu0
    %v488 = vadd.f32 0.0, %v487
    %v489 = vpop.f32.mrb[0].mxu0
    %v490 = vpop.f32.mrb[0].mxu0
    %v491 = vadd.f32 0.0, %v490
    %v492 = vpop.f32.mrb[0].mxu0
    %493 = vmatprep.mubr.bf16.mxu0 0
    %494 = vmatmul.mubr.bf16.gmra.mrb[0].mxu0 %v421
    %v495 = vpop.f32.mrb[0].mxu0
    %v496 = vadd.f32 0.0, %v495
    %v497 = vpop.f32.mrb[0].mxu0
    %v498 = vpop.f32.mrb[0].mxu0
    %v499 = vadd.f32 0.0, %v498
    %v500 = vpop.f32.mrb[0].mxu0
    %501 = vmatprep.mubr.bf16.mxu0 0
    %502 = vmatmul.mubr.bf16.gmra.mrb[0].mxu0 %v422
    %v503 = vpop.f32.mrb[0].mxu0
    %v504 = vadd.f32 0.0, %v503
    %v505 = vpop.f32.mrb[0].mxu0
    %v506 = vpop.f32.mrb[0].mxu0
    %v507 = vadd.f32 0.0, %v506
    %v508 = vpop.f32.mrb[0].mxu0
    %509 = vdwg.mxu0
    %v510 = vmax.f32 %v368, %v464
    %v511 = vmax.f32 %v369, %v467
    %v512 = vmax.f32 %v370, %v472
    %v513 = vmax.f32 %v371, %v475
    %v514 = vmax.f32 %v372, %v480
    %v515 = vmax.f32 %v373, %v483
    %v516 = vmax.f32 %v374, %v488
    %v517 = vmax.f32 %v375, %v491
    %v518 = vmax.f32 %v376, %v496
    %v519 = vmax.f32 %v377, %v499
    %v520 = vmax.f32 %v378, %v504
    %v521 = vmax.f32 %v379, %v507
    %s522 = scalar_lea.vmem [#allocation3], 192
    %v523 = vld [vmem:[%s522] sm:$0xf]
    %v524 = vld [vmem:[%s522 + $0x4] sm:$0xf]
    %v525 = vld [vmem:[%s522 + $0x8] sm:$0xf]
    %v526 = vld [vmem:[%s522 + $0xc] sm:$0xf]
    %v527 = vld [vmem:[%s522 + $0x10] sm:$0xf]
    %v528 = vld [vmem:[%s522 + $0x14] sm:$0xf]
    %v529 = vld [vmem:[%s522 + $0x18] sm:$0xf]
    %v530 = vld [vmem:[%s522 + $0x1c] sm:$0xf]
    %v531 = vld [vmem:[%s522 + $0x20] sm:$0xf]
    %v532 = vld [vmem:[%s522 + $0x24] sm:$0xf]
    %v533 = vld [vmem:[%s522 + $0x28] sm:$0xf]
    %v534 = vld [vmem:[%s522 + $0x2c] sm:$0xf]
    %v547 = vunpack.c.l.b16 %v523
    %v548 = vunpack.c.l.b16 %v524
    %v549 = vunpack.c.l.b16 %v525
    %v550 = vunpack.c.l.b16 %v526
    %v551 = vunpack.c.l.b16 %v527
    %v552 = vunpack.c.l.b16 %v528
    %v553 = vunpack.c.l.b16 %v529
    %v554 = vunpack.c.l.b16 %v530
    %v555 = vunpack.c.l.b16 %v531
    %v556 = vunpack.c.l.b16 %v532
    %v557 = vunpack.c.l.b16 %v533
    %v558 = vunpack.c.l.b16 %v534
    %v559 = vpack.c.b16 %v548, %v547
    %v560 = vpack.c.b16 %v550, %v549
    %v561 = vpack.c.b16 %v552, %v551
    %v562 = vpack.c.b16 %v554, %v553
    %v563 = vpack.c.b16 %v556, %v555
    %v564 = vpack.c.b16 %v558, %v557
    %571 = vmatprep.subr.bf16.mxu0 0
    %572 = vmatpush1.bf16.msra.mxu0 %v88
    %573 = vmatprep.subr.bf16.mxu0 0
    %574 = vmatpush1.bf16.msra.mxu0 %v89
    %575 = vmatprep.subr.bf16.mxu0 0
    %576 = vmatpush1.bf16.msra.mxu0 %v90
    %577 = vmatprep.subr.bf16.mxu0 0
    %578 = vmatpush1.bf16.msra.mxu0 %v91
    %579 = vmatprep.subr.bf16.mxu0 0
    %580 = vmatpush1.bf16.msra.mxu0 %v92
    %581 = vmatprep.subr.bf16.mxu0 0
    %582 = vmatpush1.bf16.msra.mxu0 %v93
    %583 = vmatprep.subr.bf16.mxu0 0
    %584 = vmatpush1.bf16.msra.mxu0 %v94
    %585 = vmatprep.subr.bf16.mxu0 0
    %586 = vmatpush1.bf16.msra.mxu0 %v95
    %587 = vmatprep.subr.bf16.mxu0 0
    %588 = vmatpush1.bf16.msra.mxu0 0
    %589 = vmatprep.subr.bf16.mxu0 0
    %590 = vmatpush1.bf16.msra.mxu0 0
    %591 = vmatprep.subr.bf16.mxu0 0
    %592 = vmatpush1.bf16.msra.mxu0 0
    %593 = vmatprep.subr.bf16.mxu0 0
    %594 = vmatpush1.bf16.msra.mxu0 0
    %595 = vmatprep.subr.bf16.mxu0 0
    %596 = vmatpush1.bf16.msra.mxu0 0
    %597 = vmatprep.subr.bf16.mxu0 0
    %598 = vmatpush1.bf16.msra.mxu0 0
    %599 = vmatprep.subr.bf16.mxu0 0
    %600 = vmatpush1.bf16.msra.mxu0 0
    %601 = vmatprep.subr.bf16.mxu0 0
    %602 = vmatpush1.bf16.msra.mxu0 0
    %603 = vmatprep.mubr.bf16.mxu0 0
    %604 = vmatmul.mubr.bf16.gmra.mrb[0].mxu0 %v559
    %v605 = vpop.f32.mrb[0].mxu0
    %v606 = vadd.f32 0.0, %v605
    %v607 = vpop.f32.mrb[0].mxu0
    %v608 = vpop.f32.mrb[0].mxu0
    %v609 = vadd.f32 0.0, %v608
    %v610 = vpop.f32.mrb[0].mxu0
    %611 = vmatprep.mubr.bf16.mxu0 0
    %612 = vmatmul.mubr.bf16.gmra.mrb[0].mxu0 %v560
    %v613 = vpop.f32.mrb[0].mxu0
    %v614 = vadd.f32 0.0, %v613
    %v615 = vpop.f32.mrb[0].mxu0
    %v616 = vpop.f32.mrb[0].mxu0
    %v617 = vadd.f32 0.0, %v616
    %v618 = vpop.f32.mrb[0].mxu0
    %619 = vmatprep.mubr.bf16.mxu0 0
    %620 = vmatmul.mubr.bf16.gmra.mrb[0].mxu0 %v561
    %v621 = vpop.f32.mrb[0].mxu0
    %v622 = vadd.f32 0.0, %v621
    %v623 = vpop.f32.mrb[0].mxu0
    %v624 = vpop.f32.mrb[0].mxu0
    %v625 = vadd.f32 0.0, %v624
    %v626 = vpop.f32.mrb[0].mxu0
    %627 = vmatprep.mubr.bf16.mxu0 0
    %628 = vmatmul.mubr.bf16.gmra.mrb[0].mxu0 %v562
    %v629 = vpop.f32.mrb[0].mxu0
    %v630 = vadd.f32 0.0, %v629
    %v631 = vpop.f32.mrb[0].mxu0
    %v632 = vpop.f32.mrb[0].mxu0
    %v633 = vadd.f32 0.0, %v632
    %v634 = vpop.f32.mrb[0].mxu0
    %635 = vmatprep.mubr.bf16.mxu0 0
    %636 = vmatmul.mubr.bf16.gmra.mrb[0].mxu0 %v563
    %v637 = vpop.f32.mrb[0].mxu0
    %v638 = vadd.f32 0.0, %v637
    %v639 = vpop.f32.mrb[0].mxu0
    %v640 = vpop.f32.mrb[0].mxu0
    %v641 = vadd.f32 0.0, %v640
    %v642 = vpop.f32.mrb[0].mxu0
    %643 = vmatprep.mubr.bf16.mxu0 0
    %644 = vmatmul.mubr.bf16.gmra.mrb[0].mxu0 %v564
    %v645 = vpop.f32.mrb[0].mxu0
    %v646 = vadd.f32 0.0, %v645
    %v647 = vpop.f32.mrb[0].mxu0
    %v648 = vpop.f32.mrb[0].mxu0
    %v649 = vadd.f32 0.0, %v648
    %v650 = vpop.f32.mrb[0].mxu0
    %651 = vdwg.mxu0
    %v652 = vmax.f32 %v510, %v606
    %v653 = vmax.f32 %v511, %v609
    %v654 = vmax.f32 %v512, %v614
    %v655 = vmax.f32 %v513, %v617
    %v656 = vmax.f32 %v514, %v622
    %v657 = vmax.f32 %v515, %v625
    %v658 = vmax.f32 %v516, %v630
    %v659 = vmax.f32 %v517, %v633
    %v660 = vmax.f32 %v518, %v638
    %v661 = vmax.f32 %v519, %v641
    %v662 = vmax.f32 %v520, %v646
    %v663 = vmax.f32 %v521, %v649
    %v676 = vunpack.c.l.b16 %v96
    %v677 = vunpack.c.l.b16 %v97
    %v678 = vunpack.c.l.b16 %v98
    %v679 = vunpack.c.l.b16 %v99
    %v680 = vunpack.c.l.b16 %v100
    %v681 = vunpack.c.l.b16 %v101
    %v682 = vunpack.c.l.b16 %v102
    %v683 = vunpack.c.l.b16 %v103
    %v684 = vunpack.c.l.b16 %v104
    %v685 = vunpack.c.l.b16 %v105
    %v686 = vunpack.c.l.b16 %v106
    %v687 = vunpack.c.l.b16 %v107
    %v688 = vpack.c.b16 %v677, %v676
    %v689 = vpack.c.b16 %v679, %v678
    %v690 = vpack.c.b16 %v681, %v680
    %v691 = vpack.c.b16 %v683, %v682
    %v692 = vpack.c.b16 %v685, %v684
    %v693 = vpack.c.b16 %v687, %v686
    %700 = vmatprep.subr.bf16.mxu0 0
    %701 = vmatpush1.bf16.msra.mxu0 %v88
    %702 = vmatprep.subr.bf16.mxu0 0
    %703 = vmatpush1.bf16.msra.mxu0 %v89
    %704 = vmatprep.subr.bf16.mxu0 0
    %705 = vmatpush1.bf16.msra.mxu0 %v90
    %706 = vmatprep.subr.bf16.mxu0 0
    %707 = vmatpush1.bf16.msra.mxu0 %v91
    %708 = vmatprep.subr.bf16.mxu0 0
    %709 = vmatpush1.bf16.msra.mxu0 %v92
    %710 = vmatprep.subr.bf16.mxu0 0
    %711 = vmatpush1.bf16.msra.mxu0 %v93
    %712 = vmatprep.subr.bf16.mxu0 0
    %713 = vmatpush1.bf16.msra.mxu0 %v94
    %714 = vmatprep.subr.bf16.mxu0 0
    %715 = vmatpush1.bf16.msra.mxu0 %v95
    %716 = vmatprep.subr.bf16.mxu0 0
    %717 = vmatpush1.bf16.msra.mxu0 0
    %718 = vmatprep.subr.bf16.mxu0 0
    %719 = vmatpush1.bf16.msra.mxu0 0
    %720 = vmatprep.subr.bf16.mxu0 0
    %721 = vmatpush1.bf16.msra.mxu0 0
    %722 = vmatprep.subr.bf16.mxu0 0
    %723 = vmatpush1.bf16.msra.mxu0 0
    %724 = vmatprep.subr.bf16.mxu0 0
    %725 = vmatpush1.bf16.msra.mxu0 0
    %726 = vmatprep.subr.bf16.mxu0 0
    %727 = vmatpush1.bf16.msra.mxu0 0
    %728 = vmatprep.subr.bf16.mxu0 0
    %729 = vmatpush1.bf16.msra.mxu0 0
    %730 = vmatprep.subr.bf16.mxu0 0
    %731 = vmatpush1.bf16.msra.mxu0 0
    %732 = vmatprep.mubr.bf16.mxu0 0
    %733 = vmatmul.mubr.bf16.gmra.mrb[0].mxu0 %v688
    %v734 = vpop.f32.mrb[0].mxu0
    %v735 = vadd.f32 %v652, %v734
    %v736 = vpop.f32.mrb[0].mxu0
    %v737 = vpop.f32.mrb[0].mxu0
    %v738 = vadd.f32 %v653, %v737
    %v739 = vpop.f32.mrb[0].mxu0
    %740 = vmatprep.mubr.bf16.mxu0 0
    %741 = vmatmul.mubr.bf16.gmra.mrb[0].mxu0 %v689
    %v742 = vpop.f32.mrb[0].mxu0
    %v743 = vadd.f32 %v654, %v742
    %v744 = vpop.f32.mrb[0].mxu0
    %v745 = vpop.f32.mrb[0].mxu0
    %v746 = vadd.f32 %v655, %v745
    %v747 = vpop.f32.mrb[0].mxu0
    %748 = vmatprep.mubr.bf16.mxu0 0
    %749 = vmatmul.mubr.bf16.gmra.mrb[0].mxu0 %v690
    %v750 = vpop.f32.mrb[0].mxu0
    %v751 = vadd.f32 %v656, %v750
    %v752 = vpop.f32.mrb[0].mxu0
    %v753 = vpop.f32.mrb[0].mxu0
    %v754 = vadd.f32 %v657, %v753
    %v755 = vpop.f32.mrb[0].mxu0
    %756 = vmatprep.mubr.bf16.mxu0 0
    %757 = vmatmul.mubr.bf16.gmra.mrb[0].mxu0 %v691
    %v758 = vpop.f32.mrb[0].mxu0
    %v759 = vadd.f32 %v658, %v758
    %v760 = vpop.f32.mrb[0].mxu0
    %v761 = vpop.f32.mrb[0].mxu0
    %v762 = vadd.f32 %v659, %v761
    %v763 = vpop.f32.mrb[0].mxu0
    %764 = vmatprep.mubr.bf16.mxu0 0
    %765 = vmatmul.mubr.bf16.gmra.mrb[0].mxu0 %v692
    %v766 = vpop.f32.mrb[0].mxu0
    %v767 = vadd.f32 %v660, %v766
    %v768 = vpop.f32.mrb[0].mxu0
    %v769 = vpop.f32.mrb[0].mxu0
    %v770 = vadd.f32 %v661, %v769
    %v771 = vpop.f32.mrb[0].mxu0
    %772 = vmatprep.mubr.bf16.mxu0 0
    %773 = vmatmul.mubr.bf16.gmra.mrb[0].mxu0 %v693
    %v774 = vpop.f32.mrb[0].mxu0
    %v775 = vadd.f32 %v662, %v774
    %v776 = vpop.f32.mrb[0].mxu0
    %v777 = vpop.f32.mrb[0].mxu0
    %v778 = vadd.f32 %v663, %v777
    %v779 = vpop.f32.mrb[0].mxu0
    %780 = vdwg.mxu0
    %v781 = vld [vmem:[%s5] sm:$0xff]
    %v782 = vld [vmem:[%s5 + $0x8] sm:$0xff]
    %v783 = vld [vmem:[%s5 + $0x10] sm:$0xff]
    %v784 = vld [vmem:[%s5 + $0x18] sm:$0xff]
    %v785 = vld [vmem:[%s5 + $0x20] sm:$0xff]
    %v786 = vld [vmem:[%s5 + $0x28] sm:$0xff]
    %v787 = vld [vmem:[%s5 + $0x30] sm:$0xff]
    %v788 = vld [vmem:[%s5 + $0x38] sm:$0xff]
    %v789 = vld [vmem:[%s5 + $0x40] sm:$0xff]
    %v790 = vld [vmem:[%s5 + $0x48] sm:$0xff]
    %v791 = vld [vmem:[%s5 + $0x50] sm:$0xff]
    %v792 = vld [vmem:[%s5 + $0x58] sm:$0xff]
    %v793 = vld [vmem:[#allocation8] sm:$0xff]
    %v794 = vpack.c.bf16 %v738, %v735
    %v795 = vpack.c.bf16 %v746, %v743
    %v796 = vpack.c.bf16 %v754, %v751
    %v797 = vpack.c.bf16 %v762, %v759
    %v798 = vpack.c.bf16 %v770, %v767
    %v799 = vpack.c.bf16 %v778, %v775
    %v800 = vpack.c.bf16 %v782, %v781
    %v801 = vpack.c.bf16 %v784, %v783
    %v802 = vpack.c.bf16 %v786, %v785
    %v803 = vpack.c.bf16 %v788, %v787
    %v804 = vpack.c.bf16 %v790, %v789
    %v805 = vpack.c.bf16 %v792, %v791
    %807 = vset.pattern.permute.xlu0 0
    %808 = vperm.xlu0 %807, %v800
    %v809 = vpop.permute.xlu0 %808
    %812 = vset.pattern.permute.xlu0 0
    %813 = vperm.xlu0 %812, %v801
    %v814 = vpop.permute.xlu0 %813
    %817 = vset.pattern.permute.xlu0 0
    %818 = vperm.xlu0 %817, %v802
    %v819 = vpop.permute.xlu0 %818
    %822 = vset.pattern.permute.xlu0 0
    %823 = vperm.xlu0 %822, %v803
    %v824 = vpop.permute.xlu0 %823
    %827 = vset.pattern.permute.xlu0 0
    %828 = vperm.xlu0 %827, %v804
    %v829 = vpop.permute.xlu0 %828
    %832 = vset.pattern.permute.xlu0 0
    %833 = vperm.xlu0 %832, %v805
    %v834 = vpop.permute.xlu0 %833
    %v836 = vmul.bf16 %v809, %v794
    %v837 = vmul.bf16 %v814, %v795
    %v838 = vmul.bf16 %v819, %v796
    %v839 = vmul.bf16 %v824, %v797
    %v840 = vmul.bf16 %v829, %v798
    %v841 = vmul.bf16 %v834, %v799
    %v842 = vld [vmem:[%s3] sm:$0xf]
    %v843 = vld [vmem:[%s3 + $0x4] sm:$0xf]
    %v844 = vld [vmem:[%s3 + $0x8] sm:$0xf]
    %v845 = vld [vmem:[%s3 + $0xc] sm:$0xf]
    %v850 = vunpack.c.l.b16 %v842
    %v851 = vunpack.c.l.b16 %v843
    %v852 = vunpack.c.l.b16 %v844
    %v853 = vunpack.c.l.b16 %v845
    %v854 = vpack.c.b16 %v851, %v850
    %v855 = vpack.c.b16 %v853, %v852
    %vm858 = vcmask 261120
    %v860 = vsel %vm858, %v836, 0
    %v863 = vsel %vm858, %v837, 0
    %v866 = vsel %vm858, %v838, 0
    %v869 = vsel %vm858, %v839, 0
    %v872 = vsel %vm858, %v840, 0
    %v875 = vsel %vm858, %v841, 0
    %877 = vmatprep.subr.bf16.mxu0 0
    %878 = vmatpush1.bf16.msra.mxu0 %v854
    %879 = vmatprep.subr.bf16.mxu0 0
    %880 = vmatpush1.bf16.msra.mxu0 %v855
    %881 = vmatprep.subr.bf16.mxu0 0
    %882 = vmatpush1.bf16.msra.mxu0 0
    %883 = vmatprep.subr.bf16.mxu0 0
    %884 = vmatpush1.bf16.msra.mxu0 0
    %885 = vmatprep.subr.bf16.mxu0 0
    %886 = vmatpush1.bf16.msra.mxu0 0
    %887 = vmatprep.subr.bf16.mxu0 0
    %888 = vmatpush1.bf16.msra.mxu0 0
    %889 = vmatprep.subr.bf16.mxu0 0
    %890 = vmatpush1.bf16.msra.mxu0 0
    %891 = vmatprep.subr.bf16.mxu0 0
    %892 = vmatpush1.bf16.msra.mxu0 0
    %893 = vmatprep.subr.bf16.mxu0 0
    %894 = vmatpush1.bf16.msra.mxu0 0
    %895 = vmatprep.subr.bf16.mxu0 0
    %896 = vmatpush1.bf16.msra.mxu0 0
    %897 = vmatprep.subr.bf16.mxu0 0
    %898 = vmatpush1.bf16.msra.mxu0 0
    %899 = vmatprep.subr.bf16.mxu0 0
    %900 = vmatpush1.bf16.msra.mxu0 0
    %901 = vmatprep.subr.bf16.mxu0 0
    %902 = vmatpush1.bf16.msra.mxu0 0
    %903 = vmatprep.subr.bf16.mxu0 0
    %904 = vmatpush1.bf16.msra.mxu0 0
    %905 = vmatprep.subr.bf16.mxu0 0
    %906 = vmatpush1.bf16.msra.mxu0 0
    %907 = vmatprep.subr.bf16.mxu0 0
    %908 = vmatpush1.bf16.msra.mxu0 0
    %909 = vmatprep.mubr.bf16.mxu0 0
    %910 = vmatmul.mubr.bf16.gmra.mrb[0].mxu0 %v860
    %v911 = vpop.f32.mrb[0].mxu0
    %v912 = vadd.f32 0.0, %v911
    %v913 = vpop.f32.mrb[0].mxu0
    %v914 = vpop.f32.mrb[0].mxu0
    %v915 = vadd.f32 0.0, %v914
    %v916 = vpop.f32.mrb[0].mxu0
    %917 = vmatprep.mubr.bf16.mxu0 0
    %918 = vmatmul.mubr.bf16.gmra.mrb[0].mxu0 %v863
    %v919 = vpop.f32.mrb[0].mxu0
    %v920 = vadd.f32 0.0, %v919
    %v921 = vpop.f32.mrb[0].mxu0
    %v922 = vpop.f32.mrb[0].mxu0
    %v923 = vadd.f32 0.0, %v922
    %v924 = vpop.f32.mrb[0].mxu0
    %925 = vmatprep.mubr.bf16.mxu0 0
    %926 = vmatmul.mubr.bf16.gmra.mrb[0].mxu0 %v866
    %v927 = vpop.f32.mrb[0].mxu0
    %v928 = vadd.f32 0.0, %v927
    %v929 = vpop.f32.mrb[0].mxu0
    %v930 = vpop.f32.mrb[0].mxu0
    %v931 = vadd.f32 0.0, %v930
    %v932 = vpop.f32.mrb[0].mxu0
    %933 = vmatprep.mubr.bf16.mxu0 0
    %934 = vmatmul.mubr.bf16.gmra.mrb[0].mxu0 %v869
    %v935 = vpop.f32.mrb[0].mxu0
    %v936 = vadd.f32 0.0, %v935
    %v937 = vpop.f32.mrb[0].mxu0
    %v938 = vpop.f32.mrb[0].mxu0
    %v939 = vadd.f32 0.0, %v938
    %v940 = vpop.f32.mrb[0].mxu0
    %941 = vmatprep.mubr.bf16.mxu0 0
    %942 = vmatmul.mubr.bf16.gmra.mrb[0].mxu0 %v872
    %v943 = vpop.f32.mrb[0].mxu0
    %v944 = vadd.f32 0.0, %v943
    %v945 = vpop.f32.mrb[0].mxu0
    %v946 = vpop.f32.mrb[0].mxu0
    %v947 = vadd.f32 0.0, %v946
    %v948 = vpop.f32.mrb[0].mxu0
    %949 = vmatprep.mubr.bf16.mxu0 0
    %950 = vmatmul.mubr.bf16.gmra.mrb[0].mxu0 %v875
    %v951 = vpop.f32.mrb[0].mxu0
    %v952 = vadd.f32 0.0, %v951
    %v953 = vpop.f32.mrb[0].mxu0
    %v954 = vpop.f32.mrb[0].mxu0
    %v955 = vadd.f32 0.0, %v954
    %v956 = vpop.f32.mrb[0].mxu0
    %957 = vdwg.mxu0
    %vm958 = vcmask 64512
    %v960 = vsel %vm958, %v781, 0
    %v963 = vsel %vm958, %v782, 0
    %v966 = vsel %vm958, %v783, 0
    %v969 = vsel %vm958, %v784, 0
    %v972 = vsel %vm958, %v785, 0
    %v975 = vsel %vm958, %v786, 0
    %v978 = vsel %vm958, %v787, 0
    %v981 = vsel %vm958, %v788, 0
    %v984 = vsel %vm958, %v789, 0
    %v987 = vsel %vm958, %v790, 0
    %v990 = vsel %vm958, %v791, 0
    %v993 = vsel %vm958, %v792, 0
    %995 = vmatprep.subr.mxu0 0.0
    %996 = vmatpush1.msra.mxu0 %v793
    %997 = vmatprep.subr.mxu0 0.0
    %998 = vmatpush1.msra.mxu0 0.0
    %999 = vmatprep.subr.mxu0 0.0
    %1000 = vmatpush1.msra.mxu0 0.0
    %1001 = vmatprep.subr.mxu0 0.0
    %1002 = vmatpush1.msra.mxu0 0.0
    %1003 = vmatprep.subr.mxu0 0.0
    %1004 = vmatpush1.msra.mxu0 0.0
    %1005 = vmatprep.subr.mxu0 0.0
    %1006 = vmatpush1.msra.mxu0 0.0
    %1007 = vmatprep.subr.mxu0 0.0
    %1008 = vmatpush1.msra.mxu0 0.0
    %1009 = vmatprep.subr.mxu0 0.0
    %1010 = vmatpush1.msra.mxu0 0.0
    %1011 = vmatprep.subr.mxu0 0.0
    %1012 = vmatpush1.msra.mxu0 0.0
    %1013 = vmatprep.subr.mxu0 0.0
    %1014 = vmatpush1.msra.mxu0 0.0
    %1015 = vmatprep.subr.mxu0 0.0
    %1016 = vmatpush1.msra.mxu0 0.0
    %1017 = vmatprep.subr.mxu0 0.0
    %1018 = vmatpush1.msra.mxu0 0.0
    %1019 = vmatprep.subr.mxu0 0.0
    %1020 = vmatpush1.msra.mxu0 0.0
    %1021 = vmatprep.subr.mxu0 0.0
    %1022 = vmatpush1.msra.mxu0 0.0
    %1023 = vmatprep.subr.mxu0 0.0
    %1024 = vmatpush1.msra.mxu0 0.0
    %1025 = vmatprep.subr.mxu0 0.0
    %1026 = vmatpush1.msra.mxu0 0.0
    %1027 = vmatprep.subr.mxu0 0.0
    %1028 = vmatpush1.msra.mxu0 0.0
    %1029 = vmatprep.subr.mxu0 0.0
    %1030 = vmatpush1.msra.mxu0 0.0
    %1031 = vmatprep.subr.mxu0 0.0
    %1032 = vmatpush1.msra.mxu0 0.0
    %1033 = vmatprep.subr.mxu0 0.0
    %1034 = vmatpush1.msra.mxu0 0.0
    %1035 = vmatprep.subr.mxu0 0.0
    %1036 = vmatpush1.msra.mxu0 0.0
    %1037 = vmatprep.subr.mxu0 0.0
    %1038 = vmatpush1.msra.mxu0 0.0
    %1039 = vmatprep.subr.mxu0 0.0
    %1040 = vmatpush1.msra.mxu0 0.0
    %1041 = vmatprep.subr.mxu0 0.0
    %1042 = vmatpush1.msra.mxu0 0.0
    %1043 = vmatprep.subr.mxu0 0.0
    %1044 = vmatpush1.msra.mxu0 0.0
    %1045 = vmatprep.subr.mxu0 0.0
    %1046 = vmatpush1.msra.mxu0 0.0
    %1047 = vmatprep.subr.mxu0 0.0
    %1048 = vmatpush1.msra.mxu0 0.0
    %1049 = vmatprep.subr.mxu0 0.0
    %1050 = vmatpush1.msra.mxu0 0.0
    %1051 = vmatprep.subr.mxu0 0.0
    %1052 = vmatpush1.msra.mxu0 0.0
    %1053 = vmatprep.subr.mxu0 0.0
    %1054 = vmatpush1.msra.mxu0 0.0
    %1055 = vmatprep.subr.mxu0 0.0
    %1056 = vmatpush1.msra.mxu0 0.0
    %1057 = vmatprep.subr.mxu0 0.0
    %1058 = vmatpush1.msra.mxu0 0.0
    %1059 = vmatprep.mubr.f32.mxu0 0.0
    %1060 = vmatmul.mubr.f32.gmra.mrb[0].mxu0 %v960
    %v1061 = vpop.f32.mrb[0].mxu0
    %v1062 = vadd.f32 %v912, %v1061
    %v1063 = vpop.f32.mrb[0].mxu0
    %1064 = vmatprep.mubr.f32.mxu0 0.0
    %1065 = vmatmul.mubr.f32.gmra.mrb[0].mxu0 %v963
    %v1066 = vpop.f32.mrb[0].mxu0
    %v1067 = vadd.f32 %v915, %v1066
    %v1068 = vpop.f32.mrb[0].mxu0
    %1069 = vmatprep.mubr.f32.mxu0 0.0
    %1070 = vmatmul.mubr.f32.gmra.mrb[0].mxu0 %v966
    %v1071 = vpop.f32.mrb[0].mxu0
    %v1072 = vadd.f32 %v920, %v1071
    %v1073 = vpop.f32.mrb[0].mxu0
    %1074 = vmatprep.mubr.f32.mxu0 0.0
    %1075 = vmatmul.mubr.f32.gmra.mrb[0].mxu0 %v969
    %v1076 = vpop.f32.mrb[0].mxu0
    %v1077 = vadd.f32 %v923, %v1076
    %v1078 = vpop.f32.mrb[0].mxu0
    %1079 = vmatprep.mubr.f32.mxu0 0.0
    %1080 = vmatmul.mubr.f32.gmra.mrb[0].mxu0 %v972
    %v1081 = vpop.f32.mrb[0].mxu0
    %v1082 = vadd.f32 %v928, %v1081
    %v1083 = vpop.f32.mrb[0].mxu0
    %1084 = vmatprep.mubr.f32.mxu0 0.0
    %1085 = vmatmul.mubr.f32.gmra.mrb[0].mxu0 %v975
    %v1086 = vpop.f32.mrb[0].mxu0
    %v1087 = vadd.f32 %v931, %v1086
    %v1088 = vpop.f32.mrb[0].mxu0
    %1089 = vmatprep.mubr.f32.mxu0 0.0
    %1090 = vmatmul.mubr.f32.gmra.mrb[0].mxu0 %v978
    %v1091 = vpop.f32.mrb[0].mxu0
    %v1092 = vadd.f32 %v936, %v1091
    %v1093 = vpop.f32.mrb[0].mxu0
    %1094 = vmatprep.mubr.f32.mxu0 0.0
    %1095 = vmatmul.mubr.f32.gmra.mrb[0].mxu0 %v981
    %v1096 = vpop.f32.mrb[0].mxu0
    %v1097 = vadd.f32 %v939, %v1096
    %v1098 = vpop.f32.mrb[0].mxu0
    %1099 = vmatprep.mubr.f32.mxu0 0.0
    %1100 = vmatmul.mubr.f32.gmra.mrb[0].mxu0 %v984
    %v1101 = vpop.f32.mrb[0].mxu0
    %v1102 = vadd.f32 %v944, %v1101
    %v1103 = vpop.f32.mrb[0].mxu0
    %1104 = vmatprep.mubr.f32.mxu0 0.0
    %1105 = vmatmul.mubr.f32.gmra.mrb[0].mxu0 %v987
    %v1106 = vpop.f32.mrb[0].mxu0
    %v1107 = vadd.f32 %v947, %v1106
    %v1108 = vpop.f32.mrb[0].mxu0
    %1109 = vmatprep.mubr.f32.mxu0 0.0
    %1110 = vmatmul.mubr.f32.gmra.mrb[0].mxu0 %v990
    %v1111 = vpop.f32.mrb[0].mxu0
    %v1112 = vadd.f32 %v952, %v1111
    %v1113 = vpop.f32.mrb[0].mxu0
    %1114 = vmatprep.mubr.f32.mxu0 0.0
    %1115 = vmatmul.mubr.f32.gmra.mrb[0].mxu0 %v993
    %v1116 = vpop.f32.mrb[0].mxu0
    %v1117 = vadd.f32 %v955, %v1116
    %v1118 = vpop.f32.mrb[0].mxu0
    %1119 = vdwg.mxu0
    %1120 = vset.pattern.permute.xlu0 1
    %1121 = vperm.xlu0 %1120, %v800
    %v1122 = vpop.permute.xlu0 %1121
    %1124 = vset.pattern.permute.xlu0 1
    %1125 = vperm.xlu0 %1124, %v801
    %v1126 = vpop.permute.xlu0 %1125
    %1128 = vset.pattern.permute.xlu0 1
    %1129 = vperm.xlu0 %1128, %v802
    %v1130 = vpop.permute.xlu0 %1129
    %1132 = vset.pattern.permute.xlu0 1
    %1133 = vperm.xlu0 %1132, %v803
    %v1134 = vpop.permute.xlu0 %1133
    %1136 = vset.pattern.permute.xlu0 1
    %1137 = vperm.xlu0 %1136, %v804
    %v1138 = vpop.permute.xlu0 %1137
    %1140 = vset.pattern.permute.xlu0 1
    %1141 = vperm.xlu0 %1140, %v805
    %v1142 = vpop.permute.xlu0 %1141
    %v1144 = vmul.bf16 %v1122, %v794
    %v1145 = vmul.bf16 %v1126, %v795
    %v1146 = vmul.bf16 %v1130, %v796
    %v1147 = vmul.bf16 %v1134, %v797
    %v1148 = vmul.bf16 %v1138, %v798
    %v1149 = vmul.bf16 %v1142, %v799
    %s1150 = scalar_lea.vmem %s3, 16
    %v1151 = vld [vmem:[%s1150] sm:$0xf]
    %v1152 = vld [vmem:[%s1150 + $0x4] sm:$0xf]
    %v1153 = vld [vmem:[%s1150 + $0x8] sm:$0xf]
    %v1154 = vld [vmem:[%s1150 + $0xc] sm:$0xf]
    %v1159 = vunpack.c.l.b16 %v1151
    %v1160 = vunpack.c.l.b16 %v1152
    %v1161 = vunpack.c.l.b16 %v1153
    %v1162 = vunpack.c.l.b16 %v1154
    %v1163 = vpack.c.b16 %v1160, %v1159
    %v1164 = vpack.c.b16 %v1162, %v1161
    %v1168 = vsel %vm858, %v1144, 0
    %v1171 = vsel %vm858, %v1145, 0
    %v1174 = vsel %vm858, %v1146, 0
    %v1177 = vsel %vm858, %v1147, 0
    %v1180 = vsel %vm858, %v1148, 0
    %v1183 = vsel %vm858, %v1149, 0
    %1185 = vmatprep.subr.bf16.mxu0 0
    %1186 = vmatpush1.bf16.msra.mxu0 %v1163
    %1187 = vmatprep.subr.bf16.mxu0 0
    %1188 = vmatpush1.bf16.msra.mxu0 %v1164
    %1189 = vmatprep.subr.bf16.mxu0 0
    %1190 = vmatpush1.bf16.msra.mxu0 0
    %1191 = vmatprep.subr.bf16.mxu0 0
    %1192 = vmatpush1.bf16.msra.mxu0 0
    %1193 = vmatprep.subr.bf16.mxu0 0
    %1194 = vmatpush1.bf16.msra.mxu0 0
    %1195 = vmatprep.subr.bf16.mxu0 0
    %1196 = vmatpush1.bf16.msra.mxu0 0
    %1197 = vmatprep.subr.bf16.mxu0 0
    %1198 = vmatpush1.bf16.msra.mxu0 0
    %1199 = vmatprep.subr.bf16.mxu0 0
    %1200 = vmatpush1.bf16.msra.mxu0 0
    %1201 = vmatprep.subr.bf16.mxu0 0
    %1202 = vmatpush1.bf16.msra.mxu0 0
    %1203 = vmatprep.subr.bf16.mxu0 0
    %1204 = vmatpush1.bf16.msra.mxu0 0
    %1205 = vmatprep.subr.bf16.mxu0 0
    %1206 = vmatpush1.bf16.msra.mxu0 0
    %1207 = vmatprep.subr.bf16.mxu0 0
    %1208 = vmatpush1.bf16.msra.mxu0 0
    %1209 = vmatprep.subr.bf16.mxu0 0
    %1210 = vmatpush1.bf16.msra.mxu0 0
    %1211 = vmatprep.subr.bf16.mxu0 0
    %1212 = vmatpush1.bf16.msra.mxu0 0
    %1213 = vmatprep.subr.bf16.mxu0 0
    %1214 = vmatpush1.bf16.msra.mxu0 0
    %1215 = vmatprep.subr.bf16.mxu0 0
    %1216 = vmatpush1.bf16.msra.mxu0 0
    %1217 = vmatprep.mubr.bf16.mxu0 0
    %1218 = vmatmul.mubr.bf16.gmra.mrb[0].mxu0 %v1168
    %v1219 = vpop.f32.mrb[0].mxu0
    %v1220 = vadd.f32 0.0, %v1219
    %v1221 = vpop.f32.mrb[0].mxu0
    %v1222 = vpop.f32.mrb[0].mxu0
    %v1223 = vadd.f32 0.0, %v1222
    %v1224 = vpop.f32.mrb[0].mxu0
    %1225 = vmatprep.mubr.bf16.mxu0 0
    %1226 = vmatmul.mubr.bf16.gmra.mrb[0].mxu0 %v1171
    %v1227 = vpop.f32.mrb[0].mxu0
    %v1228 = vadd.f32 0.0, %v1227
    %v1229 = vpop.f32.mrb[0].mxu0
    %v1230 = vpop.f32.mrb[0].mxu0
    %v1231 = vadd.f32 0.0, %v1230
    %v1232 = vpop.f32.mrb[0].mxu0
    %1233 = vmatprep.mubr.bf16.mxu0 0
    %1234 = vmatmul.mubr.bf16.gmra.mrb[0].mxu0 %v1174
    %v1235 = vpop.f32.mrb[0].mxu0
    %v1236 = vadd.f32 0.0, %v1235
    %v1237 = vpop.f32.mrb[0].mxu0
    %v1238 = vpop.f32.mrb[0].mxu0
    %v1239 = vadd.f32 0.0, %v1238
    %v1240 = vpop.f32.mrb[0].mxu0
    %1241 = vmatprep.mubr.bf16.mxu0 0
    %1242 = vmatmul.mubr.bf16.gmra.mrb[0].mxu0 %v1177
    %v1243 = vpop.f32.mrb[0].mxu0
    %v1244 = vadd.f32 0.0, %v1243
    %v1245 = vpop.f32.mrb[0].mxu0
    %v1246 = vpop.f32.mrb[0].mxu0
    %v1247 = vadd.f32 0.0, %v1246
    %v1248 = vpop.f32.mrb[0].mxu0
    %1249 = vmatprep.mubr.bf16.mxu0 0
    %1250 = vmatmul.mubr.bf16.gmra.mrb[0].mxu0 %v1180
    %v1251 = vpop.f32.mrb[0].mxu0
    %v1252 = vadd.f32 0.0, %v1251
    %v1253 = vpop.f32.mrb[0].mxu0
    %v1254 = vpop.f32.mrb[0].mxu0
    %v1255 = vadd.f32 0.0, %v1254
    %v1256 = vpop.f32.mrb[0].mxu0
    %1257 = vmatprep.mubr.bf16.mxu0 0
    %1258 = vmatmul.mubr.bf16.gmra.mrb[0].mxu0 %v1183
    %v1259 = vpop.f32.mrb[0].mxu0
    %v1260 = vadd.f32 0.0, %v1259
    %v1261 = vpop.f32.mrb[0].mxu0
    %v1262 = vpop.f32.mrb[0].mxu0
    %v1263 = vadd.f32 0.0, %v1262
    %v1264 = vpop.f32.mrb[0].mxu0
    %1265 = vdwg.mxu0
    %v1266 = vadd.f32 %v1062, %v1220
    %v1267 = vadd.f32 %v1067, %v1223
    %v1268 = vadd.f32 %v1072, %v1228
    %v1269 = vadd.f32 %v1077, %v1231
    %v1270 = vadd.f32 %v1082, %v1236
    %v1271 = vadd.f32 %v1087, %v1239
    %v1272 = vadd.f32 %v1092, %v1244
    %v1273 = vadd.f32 %v1097, %v1247
    %v1274 = vadd.f32 %v1102, %v1252
    %v1275 = vadd.f32 %v1107, %v1255
    %v1276 = vadd.f32 %v1112, %v1260
    %v1277 = vadd.f32 %v1117, %v1263
    %1278 = vset.pattern.permute.xlu0 2
    %1279 = vperm.xlu0 %1278, %v800
    %v1280 = vpop.permute.xlu0 %1279
    %1282 = vset.pattern.permute.xlu0 2
    %1283 = vperm.xlu0 %1282, %v801
    %v1284 = vpop.permute.xlu0 %1283
    %1286 = vset.pattern.permute.xlu0 2
    %1287 = vperm.xlu0 %1286, %v802
    %v1288 = vpop.permute.xlu0 %1287
    %1290 = vset.pattern.permute.xlu0 2
    %1291 = vperm.xlu0 %1290, %v803
    %v1292 = vpop.permute.xlu0 %1291
    %1294 = vset.pattern.permute.xlu0 2
    %1295 = vperm.xlu0 %1294, %v804
    %v1296 = vpop.permute.xlu0 %1295
    %1298 = vset.pattern.permute.xlu0 2
    %1299 = vperm.xlu0 %1298, %v805
    %v1300 = vpop.permute.xlu0 %1299
    %v1302 = vmul.bf16 %v1280, %v794
    %v1303 = vmul.bf16 %v1284, %v795
    %v1304 = vmul.bf16 %v1288, %v796
    %v1305 = vmul.bf16 %v1292, %v797
    %v1306 = vmul.bf16 %v1296, %v798
    %v1307 = vmul.bf16 %v1300, %v799
    %s1308 = scalar_lea.vmem %s3, 32
    %v1309 = vld [vmem:[%s1308] sm:$0xf]
    %v1310 = vld [vmem:[%s1308 + $0x4] sm:$0xf]
    %v1311 = vld [vmem:[%s1308 + $0x8] sm:$0xf]
    %v1312 = vld [vmem:[%s1308 + $0xc] sm:$0xf]
    %v1317 = vunpack.c.l.b16 %v1309
    %v1318 = vunpack.c.l.b16 %v1310
    %v1319 = vunpack.c.l.b16 %v1311
    %v1320 = vunpack.c.l.b16 %v1312
    %v1321 = vpack.c.b16 %v1318, %v1317
    %v1322 = vpack.c.b16 %v1320, %v1319
    %v1326 = vsel %vm858, %v1302, 0
    %v1329 = vsel %vm858, %v1303, 0
    %v1332 = vsel %vm858, %v1304, 0
    %v1335 = vsel %vm858, %v1305, 0
    %v1338 = vsel %vm858, %v1306, 0
    %v1341 = vsel %vm858, %v1307, 0
    %1343 = vmatprep.subr.bf16.mxu0 0
    %1344 = vmatpush1.bf16.msra.mxu0 %v1321
    %1345 = vmatprep.subr.bf16.mxu0 0
    %1346 = vmatpush1.bf16.msra.mxu0 %v1322
    %1347 = vmatprep.subr.bf16.mxu0 0
    %1348 = vmatpush1.bf16.msra.mxu0 0
    %1349 = vmatprep.subr.bf16.mxu0 0
    %1350 = vmatpush1.bf16.msra.mxu0 0
    %1351 = vmatprep.subr.bf16.mxu0 0
    %1352 = vmatpush1.bf16.msra.mxu0 0
    %1353 = vmatprep.subr.bf16.mxu0 0
    %1354 = vmatpush1.bf16.msra.mxu0 0
    %1355 = vmatprep.subr.bf16.mxu0 0
    %1356 = vmatpush1.bf16.msra.mxu0 0
    %1357 = vmatprep.subr.bf16.mxu0 0
    %1358 = vmatpush1.bf16.msra.mxu0 0
    %1359 = vmatprep.subr.bf16.mxu0 0
    %1360 = vmatpush1.bf16.msra.mxu0 0
    %1361 = vmatprep.subr.bf16.mxu0 0
    %1362 = vmatpush1.bf16.msra.mxu0 0
    %1363 = vmatprep.subr.bf16.mxu0 0
    %1364 = vmatpush1.bf16.msra.mxu0 0
    %1365 = vmatprep.subr.bf16.mxu0 0
    %1366 = vmatpush1.bf16.msra.mxu0 0
    %1367 = vmatprep.subr.bf16.mxu0 0
    %1368 = vmatpush1.bf16.msra.mxu0 0
    %1369 = vmatprep.subr.bf16.mxu0 0
    %1370 = vmatpush1.bf16.msra.mxu0 0
    %1371 = vmatprep.subr.bf16.mxu0 0
    %1372 = vmatpush1.bf16.msra.mxu0 0
    %1373 = vmatprep.subr.bf16.mxu0 0
    %1374 = vmatpush1.bf16.msra.mxu0 0
    %1375 = vmatprep.mubr.bf16.mxu0 0
    %1376 = vmatmul.mubr.bf16.gmra.mrb[0].mxu0 %v1326
    %v1377 = vpop.f32.mrb[0].mxu0
    %v1378 = vadd.f32 0.0, %v1377
    %v1379 = vpop.f32.mrb[0].mxu0
    %v1380 = vpop.f32.mrb[0].mxu0
    %v1381 = vadd.f32 0.0, %v1380
    %v1382 = vpop.f32.mrb[0].mxu0
    %1383 = vmatprep.mubr.bf16.mxu0 0
    %1384 = vmatmul.mubr.bf16.gmra.mrb[0].mxu0 %v1329
    %v1385 = vpop.f32.mrb[0].mxu0
    %v1386 = vadd.f32 0.0, %v1385
    %v1387 = vpop.f32.mrb[0].mxu0
    %v1388 = vpop.f32.mrb[0].mxu0
    %v1389 = vadd.f32 0.0, %v1388
    %v1390 = vpop.f32.mrb[0].mxu0
    %1391 = vmatprep.mubr.bf16.mxu0 0
    %1392 = vmatmul.mubr.bf16.gmra.mrb[0].mxu0 %v1332
    %v1393 = vpop.f32.mrb[0].mxu0
    %v1394 = vadd.f32 0.0, %v1393
    %v1395 = vpop.f32.mrb[0].mxu0
    %v1396 = vpop.f32.mrb[0].mxu0
    %v1397 = vadd.f32 0.0, %v1396
    %v1398 = vpop.f32.mrb[0].mxu0
    %1399 = vmatprep.mubr.bf16.mxu0 0
    %1400 = vmatmul.mubr.bf16.gmra.mrb[0].mxu0 %v1335
    %v1401 = vpop.f32.mrb[0].mxu0
    %v1402 = vadd.f32 0.0, %v1401
    %v1403 = vpop.f32.mrb[0].mxu0
    %v1404 = vpop.f32.mrb[0].mxu0
    %v1405 = vadd.f32 0.0, %v1404
    %v1406 = vpop.f32.mrb[0].mxu0
    %1407 = vmatprep.mubr.bf16.mxu0 0
    %1408 = vmatmul.mubr.bf16.gmra.mrb[0].mxu0 %v1338
    %v1409 = vpop.f32.mrb[0].mxu0
    %v1410 = vadd.f32 0.0, %v1409
    %v1411 = vpop.f32.mrb[0].mxu0
    %v1412 = vpop.f32.mrb[0].mxu0
    %v1413 = vadd.f32 0.0, %v1412
    %v1414 = vpop.f32.mrb[0].mxu0
    %1415 = vmatprep.mubr.bf16.mxu0 0
    %1416 = vmatmul.mubr.bf16.gmra.mrb[0].mxu0 %v1341
    %v1417 = vpop.f32.mrb[0].mxu0
    %v1418 = vadd.f32 0.0, %v1417
    %v1419 = vpop.f32.mrb[0].mxu0
    %v1420 = vpop.f32.mrb[0].mxu0
    %v1421 = vadd.f32 0.0, %v1420
    %v1422 = vpop.f32.mrb[0].mxu0
    %1423 = vdwg.mxu0
    %v1424 = vadd.f32 %v1266, %v1378
    %v1425 = vadd.f32 %v1267, %v1381
    %v1426 = vadd.f32 %v1268, %v1386
    %v1427 = vadd.f32 %v1269, %v1389
    %v1428 = vadd.f32 %v1270, %v1394
    %v1429 = vadd.f32 %v1271, %v1397
    %v1430 = vadd.f32 %v1272, %v1402
    %v1431 = vadd.f32 %v1273, %v1405
    %v1432 = vadd.f32 %v1274, %v1410
    %v1433 = vadd.f32 %v1275, %v1413
    %v1434 = vadd.f32 %v1276, %v1418
    %v1435 = vadd.f32 %v1277, %v1421
    %1436 = vset.pattern.permute.xlu0 3
    %1437 = vperm.xlu0 %1436, %v800
    %v1438 = vpop.permute.xlu0 %1437
    %1440 = vset.pattern.permute.xlu0 3
    %1441 = vperm.xlu0 %1440, %v801
    %v1442 = vpop.permute.xlu0 %1441
    %1444 = vset.pattern.permute.xlu0 3
    %1445 = vperm.xlu0 %1444, %v802
    %v1446 = vpop.permute.xlu0 %1445
    %1448 = vset.pattern.permute.xlu0 3
    %1449 = vperm.xlu0 %1448, %v803
    %v1450 = vpop.permute.xlu0 %1449
    %1452 = vset.pattern.permute.xlu0 3
    %1453 = vperm.xlu0 %1452, %v804
    %v1454 = vpop.permute.xlu0 %1453
    %1456 = vset.pattern.permute.xlu0 3
    %1457 = vperm.xlu0 %1456, %v805
    %v1458 = vpop.permute.xlu0 %1457
    %v1460 = vmul.bf16 %v1438, %v794
    %v1461 = vmul.bf16 %v1442, %v795
    %v1462 = vmul.bf16 %v1446, %v796
    %v1463 = vmul.bf16 %v1450, %v797
    %v1464 = vmul.bf16 %v1454, %v798
    %v1465 = vmul.bf16 %v1458, %v799
    %s1466 = scalar_lea.vmem %s3, 48
    %v1467 = vld [vmem:[%s1466] sm:$0xf]
    %v1468 = vld [vmem:[%s1466 + $0x4] sm:$0xf]
    %v1469 = vld [vmem:[%s1466 + $0x8] sm:$0xf]
    %v1470 = vld [vmem:[%s1466 + $0xc] sm:$0xf]
    %v1475 = vunpack.c.l.b16 %v1467
    %v1476 = vunpack.c.l.b16 %v1468
    %v1477 = vunpack.c.l.b16 %v1469
    %v1478 = vunpack.c.l.b16 %v1470
    %v1479 = vpack.c.b16 %v1476, %v1475
    %v1480 = vpack.c.b16 %v1478, %v1477
    %v1484 = vsel %vm858, %v1460, 0
    %v1487 = vsel %vm858, %v1461, 0
    %v1490 = vsel %vm858, %v1462, 0
    %v1493 = vsel %vm858, %v1463, 0
    %v1496 = vsel %vm858, %v1464, 0
    %v1499 = vsel %vm858, %v1465, 0
    %1501 = vmatprep.subr.bf16.mxu0 0
    %1502 = vmatpush1.bf16.msra.mxu0 %v1479
    %1503 = vmatprep.subr.bf16.mxu0 0
    %1504 = vmatpush1.bf16.msra.mxu0 %v1480
    %1505 = vmatprep.subr.bf16.mxu0 0
    %1506 = vmatpush1.bf16.msra.mxu0 0
    %1507 = vmatprep.subr.bf16.mxu0 0
    %1508 = vmatpush1.bf16.msra.mxu0 0
    %1509 = vmatprep.subr.bf16.mxu0 0
    %1510 = vmatpush1.bf16.msra.mxu0 0
    %1511 = vmatprep.subr.bf16.mxu0 0
    %1512 = vmatpush1.bf16.msra.mxu0 0
    %1513 = vmatprep.subr.bf16.mxu0 0
    %1514 = vmatpush1.bf16.msra.mxu0 0
    %1515 = vmatprep.subr.bf16.mxu0 0
    %1516 = vmatpush1.bf16.msra.mxu0 0
    %1517 = vmatprep.subr.bf16.mxu0 0
    %1518 = vmatpush1.bf16.msra.mxu0 0
    %1519 = vmatprep.subr.bf16.mxu0 0
    %1520 = vmatpush1.bf16.msra.mxu0 0
    %1521 = vmatprep.subr.bf16.mxu0 0
    %1522 = vmatpush1.bf16.msra.mxu0 0
    %1523 = vmatprep.subr.bf16.mxu0 0
    %1524 = vmatpush1.bf16.msra.mxu0 0
    %1525 = vmatprep.subr.bf16.mxu0 0
    %1526 = vmatpush1.bf16.msra.mxu0 0
    %1527 = vmatprep.subr.bf16.mxu0 0
    %1528 = vmatpush1.bf16.msra.mxu0 0
    %1529 = vmatprep.subr.bf16.mxu0 0
    %1530 = vmatpush1.bf16.msra.mxu0 0
    %1531 = vmatprep.subr.bf16.mxu0 0
    %1532 = vmatpush1.bf16.msra.mxu0 0
    %1533 = vmatprep.mubr.bf16.mxu0 0
    %1534 = vmatmul.mubr.bf16.gmra.mrb[0].mxu0 %v1484
    %v1535 = vpop.f32.mrb[0].mxu0
    %v1536 = vadd.f32 0.0, %v1535
    %v1537 = vpop.f32.mrb[0].mxu0
    %v1538 = vpop.f32.mrb[0].mxu0
    %v1539 = vadd.f32 0.0, %v1538
    %v1540 = vpop.f32.mrb[0].mxu0
    %1541 = vmatprep.mubr.bf16.mxu0 0
    %1542 = vmatmul.mubr.bf16.gmra.mrb[0].mxu0 %v1487
    %v1543 = vpop.f32.mrb[0].mxu0
    %v1544 = vadd.f32 0.0, %v1543
    %v1545 = vpop.f32.mrb[0].mxu0
    %v1546 = vpop.f32.mrb[0].mxu0
    %v1547 = vadd.f32 0.0, %v1546
    %v1548 = vpop.f32.mrb[0].mxu0
    %1549 = vmatprep.mubr.bf16.mxu0 0
    %1550 = vmatmul.mubr.bf16.gmra.mrb[0].mxu0 %v1490
    %v1551 = vpop.f32.mrb[0].mxu0
    %v1552 = vadd.f32 0.0, %v1551
    %v1553 = vpop.f32.mrb[0].mxu0
    %v1554 = vpop.f32.mrb[0].mxu0
    %v1555 = vadd.f32 0.0, %v1554
    %v1556 = vpop.f32.mrb[0].mxu0
    %1557 = vmatprep.mubr.bf16.mxu0 0
    %1558 = vmatmul.mubr.bf16.gmra.mrb[0].mxu0 %v1493
    %v1559 = vpop.f32.mrb[0].mxu0
    %v1560 = vadd.f32 0.0, %v1559
    %v1561 = vpop.f32.mrb[0].mxu0
    %v1562 = vpop.f32.mrb[0].mxu0
    %v1563 = vadd.f32 0.0, %v1562
    %v1564 = vpop.f32.mrb[0].mxu0
    %1565 = vmatprep.mubr.bf16.mxu0 0
    %1566 = vmatmul.mubr.bf16.gmra.mrb[0].mxu0 %v1496
    %v1567 = vpop.f32.mrb[0].mxu0
    %v1568 = vadd.f32 0.0, %v1567
    %v1569 = vpop.f32.mrb[0].mxu0
    %v1570 = vpop.f32.mrb[0].mxu0
    %v1571 = vadd.f32 0.0, %v1570
    %v1572 = vpop.f32.mrb[0].mxu0
    %1573 = vmatprep.mubr.bf16.mxu0 0
    %1574 = vmatmul.mubr.bf16.gmra.mrb[0].mxu0 %v1499
    %v1575 = vpop.f32.mrb[0].mxu0
    %v1576 = vadd.f32 0.0, %v1575
    %v1577 = vpop.f32.mrb[0].mxu0
    %v1578 = vpop.f32.mrb[0].mxu0
    %v1579 = vadd.f32 0.0, %v1578
    %v1580 = vpop.f32.mrb[0].mxu0
    %1581 = vdwg.mxu0
    %v1582 = vadd.f32 %v1424, %v1536
    %v1583 = vadd.f32 %v1425, %v1539
    %v1584 = vadd.f32 %v1426, %v1544
    %v1585 = vadd.f32 %v1427, %v1547
    %v1586 = vadd.f32 %v1428, %v1552
    %v1587 = vadd.f32 %v1429, %v1555
    %v1588 = vadd.f32 %v1430, %v1560
    %v1589 = vadd.f32 %v1431, %v1563
    %v1590 = vadd.f32 %v1432, %v1568
    %v1591 = vadd.f32 %v1433, %v1571
    %v1592 = vadd.f32 %v1434, %v1576
    %v1593 = vadd.f32 %v1435, %v1579
    %1594 = vset.pattern.permute.xlu0 4
    %1595 = vperm.xlu0 %1594, %v800
    %v1596 = vpop.permute.xlu0 %1595
    %1598 = vset.pattern.permute.xlu0 4
    %1599 = vperm.xlu0 %1598, %v801
    %v1600 = vpop.permute.xlu0 %1599
    %1602 = vset.pattern.permute.xlu0 4
    %1603 = vperm.xlu0 %1602, %v802
    %v1604 = vpop.permute.xlu0 %1603
    %1606 = vset.pattern.permute.xlu0 4
    %1607 = vperm.xlu0 %1606, %v803
    %v1608 = vpop.permute.xlu0 %1607
    %1610 = vset.pattern.permute.xlu0 4
    %1611 = vperm.xlu0 %1610, %v804
    %v1612 = vpop.permute.xlu0 %1611
    %1614 = vset.pattern.permute.xlu0 4
    %1615 = vperm.xlu0 %1614, %v805
    %v1616 = vpop.permute.xlu0 %1615
    %v1618 = vmul.bf16 %v1596, %v794
    %v1619 = vmul.bf16 %v1600, %v795
    %v1620 = vmul.bf16 %v1604, %v796
    %v1621 = vmul.bf16 %v1608, %v797
    %v1622 = vmul.bf16 %v1612, %v798
    %v1623 = vmul.bf16 %v1616, %v799
    %s1624 = scalar_lea.vmem %s3, 64
    %v1625 = vld [vmem:[%s1624] sm:$0xf]
    %v1626 = vld [vmem:[%s1624 + $0x4] sm:$0xf]
    %v1627 = vld [vmem:[%s1624 + $0x8] sm:$0xf]
    %v1628 = vld [vmem:[%s1624 + $0xc] sm:$0xf]
    %v1633 = vunpack.c.l.b16 %v1625
    %v1634 = vunpack.c.l.b16 %v1626
    %v1635 = vunpack.c.l.b16 %v1627
    %v1636 = vunpack.c.l.b16 %v1628
    %v1637 = vpack.c.b16 %v1634, %v1633
    %v1638 = vpack.c.b16 %v1636, %v1635
    %v1642 = vsel %vm858, %v1618, 0
    %v1645 = vsel %vm858, %v1619, 0
    %v1648 = vsel %vm858, %v1620, 0
    %v1651 = vsel %vm858, %v1621, 0
    %v1654 = vsel %vm858, %v1622, 0
    %v1657 = vsel %vm858, %v1623, 0
    %1659 = vmatprep.subr.bf16.mxu0 0
    %1660 = vmatpush1.bf16.msra.mxu0 %v1637
    %1661 = vmatprep.subr.bf16.mxu0 0
    %1662 = vmatpush1.bf16.msra.mxu0 %v1638
    %1663 = vmatprep.subr.bf16.mxu0 0
    %1664 = vmatpush1.bf16.msra.mxu0 0
    %1665 = vmatprep.subr.bf16.mxu0 0
    %1666 = vmatpush1.bf16.msra.mxu0 0
    %1667 = vmatprep.subr.bf16.mxu0 0
    %1668 = vmatpush1.bf16.msra.mxu0 0
    %1669 = vmatprep.subr.bf16.mxu0 0
    %1670 = vmatpush1.bf16.msra.mxu0 0
    %1671 = vmatprep.subr.bf16.mxu0 0
    %1672 = vmatpush1.bf16.msra.mxu0 0
    %1673 = vmatprep.subr.bf16.mxu0 0
    %1674 = vmatpush1.bf16.msra.mxu0 0
    %1675 = vmatprep.subr.bf16.mxu0 0
    %1676 = vmatpush1.bf16.msra.mxu0 0
    %1677 = vmatprep.subr.bf16.mxu0 0
    %1678 = vmatpush1.bf16.msra.mxu0 0
    %1679 = vmatprep.subr.bf16.mxu0 0
    %1680 = vmatpush1.bf16.msra.mxu0 0
    %1681 = vmatprep.subr.bf16.mxu0 0
    %1682 = vmatpush1.bf16.msra.mxu0 0
    %1683 = vmatprep.subr.bf16.mxu0 0
    %1684 = vmatpush1.bf16.msra.mxu0 0
    %1685 = vmatprep.subr.bf16.mxu0 0
    %1686 = vmatpush1.bf16.msra.mxu0 0
    %1687 = vmatprep.subr.bf16.mxu0 0
    %1688 = vmatpush1.bf16.msra.mxu0 0
    %1689 = vmatprep.subr.bf16.mxu0 0
    %1690 = vmatpush1.bf16.msra.mxu0 0
    %1691 = vmatprep.mubr.bf16.mxu0 0
    %1692 = vmatmul.mubr.bf16.gmra.mrb[0].mxu0 %v1642
    %v1693 = vpop.f32.mrb[0].mxu0
    %v1694 = vadd.f32 0.0, %v1693
    %v1695 = vpop.f32.mrb[0].mxu0
    %v1696 = vpop.f32.mrb[0].mxu0
    %v1697 = vadd.f32 0.0, %v1696
    %v1698 = vpop.f32.mrb[0].mxu0
    %1699 = vmatprep.mubr.bf16.mxu0 0
    %1700 = vmatmul.mubr.bf16.gmra.mrb[0].mxu0 %v1645
    %v1701 = vpop.f32.mrb[0].mxu0
    %v1702 = vadd.f32 0.0, %v1701
    %v1703 = vpop.f32.mrb[0].mxu0
    %v1704 = vpop.f32.mrb[0].mxu0
    %v1705 = vadd.f32 0.0, %v1704
    %v1706 = vpop.f32.mrb[0].mxu0
    %1707 = vmatprep.mubr.bf16.mxu0 0
    %1708 = vmatmul.mubr.bf16.gmra.mrb[0].mxu0 %v1648
    %v1709 = vpop.f32.mrb[0].mxu0
    %v1710 = vadd.f32 0.0, %v1709
    %v1711 = vpop.f32.mrb[0].mxu0
    %v1712 = vpop.f32.mrb[0].mxu0
    %v1713 = vadd.f32 0.0, %v1712
    %v1714 = vpop.f32.mrb[0].mxu0
    %1715 = vmatprep.mubr.bf16.mxu0 0
    %1716 = vmatmul.mubr.bf16.gmra.mrb[0].mxu0 %v1651
    %v1717 = vpop.f32.mrb[0].mxu0
    %v1718 = vadd.f32 0.0, %v1717
    %v1719 = vpop.f32.mrb[0].mxu0
    %v1720 = vpop.f32.mrb[0].mxu0
    %v1721 = vadd.f32 0.0, %v1720
    %v1722 = vpop.f32.mrb[0].mxu0
    %1723 = vmatprep.mubr.bf16.mxu0 0
    %1724 = vmatmul.mubr.bf16.gmra.mrb[0].mxu0 %v1654
    %v1725 = vpop.f32.mrb[0].mxu0
    %v1726 = vadd.f32 0.0, %v1725
    %v1727 = vpop.f32.mrb[0].mxu0
    %v1728 = vpop.f32.mrb[0].mxu0
    %v1729 = vadd.f32 0.0, %v1728
    %v1730 = vpop.f32.mrb[0].mxu0
    %1731 = vmatprep.mubr.bf16.mxu0 0
    %1732 = vmatmul.mubr.bf16.gmra.mrb[0].mxu0 %v1657
    %v1733 = vpop.f32.mrb[0].mxu0
    %v1734 = vadd.f32 0.0, %v1733
    %v1735 = vpop.f32.mrb[0].mxu0
    %v1736 = vpop.f32.mrb[0].mxu0
    %v1737 = vadd.f32 0.0, %v1736
    %v1738 = vpop.f32.mrb[0].mxu0
    %1739 = vdwg.mxu0
    %v1740 = vadd.f32 %v1582, %v1694
    %v1741 = vadd.f32 %v1583, %v1697
    %v1742 = vadd.f32 %v1584, %v1702
    %v1743 = vadd.f32 %v1585, %v1705
    %v1744 = vadd.f32 %v1586, %v1710
    %v1745 = vadd.f32 %v1587, %v1713
    %v1746 = vadd.f32 %v1588, %v1718
    %v1747 = vadd.f32 %v1589, %v1721
    %v1748 = vadd.f32 %v1590, %v1726
    %v1749 = vadd.f32 %v1591, %v1729
    %v1750 = vadd.f32 %v1592, %v1734
    %v1751 = vadd.f32 %v1593, %v1737
    %s1752 = scalar_lea.vmem [#allocation6], 64
    %v1753 = vld [vmem:[%s1752] sm:$0xf]
    %v1754 = vld [vmem:[%s1752 + $0x4] sm:$0xf]
    %v1755 = vld [vmem:[%s1752 + $0x8] sm:$0xf]
    %v1756 = vld [vmem:[%s1752 + $0xc] sm:$0xf]
    %v1757 = vunpack.c.l.bf16 %v1753
    %v1758 = vunpack.c.l.bf16 %v1754
    %v1759 = vunpack.c.l.bf16 %v1755
    %v1760 = vunpack.c.l.bf16 %v1756
    %v1762 = vsel %vm858, %v1757, 0
    %v1765 = vsel %vm858, %v1758, 0
    %v1768 = vsel %vm858, %v1759, 0
    %v1771 = vsel %vm858, %v1760, 0
    %v1774 = vsel %vm858, %v1743, 0
    %v1777 = vsel %vm858, %v1744, 0
    %1779 = vmatprep.subr.mxu0 0.0
    %1780 = vmatpush1.xpose.msra.mxu0 %v1774
    %1781 = vmatprep.subr.mxu0 0.0
    %1782 = vmatpush1.xpose.msra.mxu0 %v1777
    %1783 = vmatprep.subr.mxu0 0.0
    %1784 = vmatpush1.xpose.msra.mxu0 0.0
    %1785 = vmatprep.subr.mxu0 0.0
    %1786 = vmatpush1.xpose.msra.mxu0 0.0
    %1787 = vmatprep.subr.mxu0 0.0
    %1788 = vmatpush1.xpose.msra.mxu0 0.0
    %1789 = vmatprep.subr.mxu0 0.0
    %1790 = vmatpush1.xpose.msra.mxu0 0.0
    %1791 = vmatprep.subr.mxu0 0.0
    %1792 = vmatpush1.xpose.msra.mxu0 0.0
    %1793 = vmatprep.subr.mxu0 0.0
    %1794 = vmatpush1.xpose.msra.mxu0 0.0
    %1795 = vmatprep.subr.mxu0 0.0
    %1796 = vmatpush1.xpose.msra.mxu0 0.0
    %1797 = vmatprep.subr.mxu0 0.0
    %1798 = vmatpush1.xpose.msra.mxu0 0.0
    %1799 = vmatprep.subr.mxu0 0.0
    %1800 = vmatpush1.xpose.msra.mxu0 0.0
    %1801 = vmatprep.subr.mxu0 0.0
    %1802 = vmatpush1.xpose.msra.mxu0 0.0
    %1803 = vmatprep.subr.mxu0 0.0
    %1804 = vmatpush1.xpose.msra.mxu0 0.0
    %1805 = vmatprep.subr.mxu0 0.0
    %1806 = vmatpush1.xpose.msra.mxu0 0.0
    %1807 = vmatprep.subr.mxu0 0.0
    %1808 = vmatpush1.xpose.msra.mxu0 0.0
    %1809 = vmatprep.subr.mxu0 0.0
    %1810 = vmatpush1.xpose.msra.mxu0 0.0
    %1811 = vmatprep.subr.mxu0 0.0
    %1812 = vmatpush1.xpose.msra.mxu0 0.0
    %1813 = vmatprep.subr.mxu0 0.0
    %1814 = vmatpush1.xpose.msra.mxu0 0.0
    %1815 = vmatprep.subr.mxu0 0.0
    %1816 = vmatpush1.xpose.msra.mxu0 0.0
    %1817 = vmatprep.subr.mxu0 0.0
    %1818 = vmatpush1.xpose.msra.mxu0 0.0
    %1819 = vmatprep.subr.mxu0 0.0
    %1820 = vmatpush1.xpose.msra.mxu0 0.0
    %1821 = vmatprep.subr.mxu0 0.0
    %1822 = vmatpush1.xpose.msra.mxu0 0.0
    %1823 = vmatprep.subr.mxu0 0.0
    %1824 = vmatpush1.xpose.msra.mxu0 0.0
    %1825 = vmatprep.subr.mxu0 0.0
    %1826 = vmatpush1.xpose.msra.mxu0 0.0
    %1827 = vmatprep.subr.mxu0 0.0
    %1828 = vmatpush1.xpose.msra.mxu0 0.0
    %1829 = vmatprep.subr.mxu0 0.0
    %1830 = vmatpush1.xpose.msra.mxu0 0.0
    %1831 = vmatprep.subr.mxu0 0.0
    %1832 = vmatpush1.xpose.msra.mxu0 0.0
    %1833 = vmatprep.subr.mxu0 0.0
    %1834 = vmatpush1.xpose.msra.mxu0 0.0
    %1835 = vmatprep.subr.mxu0 0.0
    %1836 = vmatpush1.xpose.msra.mxu0 0.0
    %1837 = vmatprep.subr.mxu0 0.0
    %1838 = vmatpush1.xpose.msra.mxu0 0.0
    %1839 = vmatprep.subr.mxu0 0.0
    %1840 = vmatpush1.xpose.msra.mxu0 0.0
    %1841 = vmatprep.subr.mxu0 0.0
    %1842 = vmatpush1.xpose.msra.mxu0 0.0
    %1843 = vmatprep.mubr.f32.mxu0 0.0
    %1844 = vmatmul.mubr.f32.gmra.mrb[0].mxu0 %v1762
    %v1845 = vpop.f32.mrb[0].mxu0
    %v1846 = vadd.f32 0.0, %v1845
    %v1847 = vpop.f32.mrb[0].mxu0
    %1848 = vmatprep.mubr.f32.mxu0 0.0
    %1849 = vmatmul.mubr.f32.gmra.mrb[0].mxu0 %v1765
    %v1850 = vpop.f32.mrb[0].mxu0
    %v1851 = vadd.f32 0.0, %v1850
    %v1852 = vpop.f32.mrb[0].mxu0
    %1853 = vmatprep.mubr.f32.mxu0 0.0
    %1854 = vmatmul.mubr.f32.gmra.mrb[0].mxu0 %v1768
    %v1855 = vpop.f32.mrb[0].mxu0
    %v1856 = vadd.f32 0.0, %v1855
    %v1857 = vpop.f32.mrb[0].mxu0
    %1858 = vmatprep.mubr.f32.mxu0 0.0
    %1859 = vmatmul.mubr.f32.gmra.mrb[0].mxu0 %v1771
    %v1860 = vpop.f32.mrb[0].mxu0
    %v1861 = vadd.f32 0.0, %v1860
    %v1862 = vpop.f32.mrb[0].mxu0
    %1863 = vdwg.mxu0
    %vm1864 = vcmask 130048
    %1865 = vst.msk [vmem:[%s9] sm:$0xff] %vm1864, %v1846
    %1866 = vst.msk [vmem:[%s9 + $0x8] sm:$0xff] %vm1864, %v1851
    %1867 = vst.msk [vmem:[%s9 + $0x10] sm:$0xff] %vm1864, %v1856
    %1868 = vst.msk [vmem:[%s9 + $0x18] sm:$0xff] %vm1864, %v1861
    %v1870 = vsel %vm858, %v1749, 0
    %v1873 = vsel %vm858, %v1750, 0
    %1875 = vmatprep.subr.mxu0 0.0
    %1876 = vmatpush1.xpose.msra.mxu0 %v1870
    %1877 = vmatprep.subr.mxu0 0.0
    %1878 = vmatpush1.xpose.msra.mxu0 %v1873
    %1879 = vmatprep.subr.mxu0 0.0
    %1880 = vmatpush1.xpose.msra.mxu0 0.0
    %1881 = vmatprep.subr.mxu0 0.0
    %1882 = vmatpush1.xpose.msra.mxu0 0.0
    %1883 = vmatprep.subr.mxu0 0.0
    %1884 = vmatpush1.xpose.msra.mxu0 0.0
    %1885 = vmatprep.subr.mxu0 0.0
    %1886 = vmatpush1.xpose.msra.mxu0 0.0
    %1887 = vmatprep.subr.mxu0 0.0
    %1888 = vmatpush1.xpose.msra.mxu0 0.0
    %1889 = vmatprep.subr.mxu0 0.0
    %1890 = vmatpush1.xpose.msra.mxu0 0.0
    %1891 = vmatprep.subr.mxu0 0.0
    %1892 = vmatpush1.xpose.msra.mxu0 0.0
    %1893 = vmatprep.subr.mxu0 0.0
    %1894 = vmatpush1.xpose.msra.mxu0 0.0
    %1895 = vmatprep.subr.mxu0 0.0
    %1896 = vmatpush1.xpose.msra.mxu0 0.0
    %1897 = vmatprep.subr.mxu0 0.0
    %1898 = vmatpush1.xpose.msra.mxu0 0.0
    %1899 = vmatprep.subr.mxu0 0.0
    %1900 = vmatpush1.xpose.msra.mxu0 0.0
    %1901 = vmatprep.subr.mxu0 0.0
    %1902 = vmatpush1.xpose.msra.mxu0 0.0
    %1903 = vmatprep.subr.mxu0 0.0
    %1904 = vmatpush1.xpose.msra.mxu0 0.0
    %1905 = vmatprep.subr.mxu0 0.0
    %1906 = vmatpush1.xpose.msra.mxu0 0.0
    %1907 = vmatprep.subr.mxu0 0.0
    %1908 = vmatpush1.xpose.msra.mxu0 0.0
    %1909 = vmatprep.subr.mxu0 0.0
    %1910 = vmatpush1.xpose.msra.mxu0 0.0
    %1911 = vmatprep.subr.mxu0 0.0
    %1912 = vmatpush1.xpose.msra.mxu0 0.0
    %1913 = vmatprep.subr.mxu0 0.0
    %1914 = vmatpush1.xpose.msra.mxu0 0.0
    %1915 = vmatprep.subr.mxu0 0.0
    %1916 = vmatpush1.xpose.msra.mxu0 0.0
    %1917 = vmatprep.subr.mxu0 0.0
    %1918 = vmatpush1.xpose.msra.mxu0 0.0
    %1919 = vmatprep.subr.mxu0 0.0
    %1920 = vmatpush1.xpose.msra.mxu0 0.0
    %1921 = vmatprep.subr.mxu0 0.0
    %1922 = vmatpush1.xpose.msra.mxu0 0.0
    %1923 = vmatprep.subr.mxu0 0.0
    %1924 = vmatpush1.xpose.msra.mxu0 0.0
    %1925 = vmatprep.subr.mxu0 0.0
    %1926 = vmatpush1.xpose.msra.mxu0 0.0
    %1927 = vmatprep.subr.mxu0 0.0
    %1928 = vmatpush1.xpose.msra.mxu0 0.0
    %1929 = vmatprep.subr.mxu0 0.0
    %1930 = vmatpush1.xpose.msra.mxu0 0.0
    %1931 = vmatprep.subr.mxu0 0.0
    %1932 = vmatpush1.xpose.msra.mxu0 0.0
    %1933 = vmatprep.subr.mxu0 0.0
    %1934 = vmatpush1.xpose.msra.mxu0 0.0
    %1935 = vmatprep.subr.mxu0 0.0
    %1936 = vmatpush1.xpose.msra.mxu0 0.0
    %1937 = vmatprep.subr.mxu0 0.0
    %1938 = vmatpush1.xpose.msra.mxu0 0.0
    %1939 = vmatprep.mubr.f32.mxu0 0.0
    %1940 = vmatmul.mubr.f32.gmra.mrb[0].mxu0 %v1762
    %v1941 = vpop.f32.mrb[0].mxu0
    %v1942 = vadd.f32 0.0, %v1941
    %v1943 = vpop.f32.mrb[0].mxu0
    %1944 = vmatprep.mubr.f32.mxu0 0.0
    %1945 = vmatmul.mubr.f32.gmra.mrb[0].mxu0 %v1765
    %v1946 = vpop.f32.mrb[0].mxu0
    %v1947 = vadd.f32 0.0, %v1946
    %v1948 = vpop.f32.mrb[0].mxu0
    %1949 = vmatprep.mubr.f32.mxu0 0.0
    %1950 = vmatmul.mubr.f32.gmra.mrb[0].mxu0 %v1768
    %v1951 = vpop.f32.mrb[0].mxu0
    %v1952 = vadd.f32 0.0, %v1951
    %v1953 = vpop.f32.mrb[0].mxu0
    %1954 = vmatprep.mubr.f32.mxu0 0.0
    %1955 = vmatmul.mubr.f32.gmra.mrb[0].mxu0 %v1771
    %v1956 = vpop.f32.mrb[0].mxu0
    %v1957 = vadd.f32 0.0, %v1956
    %v1958 = vpop.f32.mrb[0].mxu0
    %1959 = vdwg.mxu0
    %1960 = vst.msk [vmem:[%s9 + $0x20] sm:$0xff] %vm1864, %v1942
    %1961 = vst.msk [vmem:[%s9 + $0x28] sm:$0xff] %vm1864, %v1947
    %1962 = vst.msk [vmem:[%s9 + $0x30] sm:$0xff] %vm1864, %v1952
    %1963 = vst.msk [vmem:[%s9 + $0x38] sm:$0xff] %vm1864, %v1957
    %v1964 = vsel %vm858, %v1740, 0.0
    %1965 = vadd.xlane.f32.xlu0 %v1964
    %v1966 = vpop.xlane.xlu0 %1965
    %v1967 = vsel %vm858, %v1741, 0.0
    %1968 = vadd.xlane.f32.xlu0 %v1967
    %v1969 = vpop.xlane.xlu0 %1968
    %v1970 = vsel %vm858, %v1742, 0.0
    %1971 = vadd.xlane.f32.xlu0 %v1970
    %v1972 = vpop.xlane.xlu0 %1971
    %v1973 = vsel %vm858, %v1743, 0.0
    %1974 = vadd.xlane.f32.xlu0 %v1973
    %v1975 = vpop.xlane.xlu0 %1974
    %v1976 = vsel %vm858, %v1744, 0.0
    %1977 = vadd.xlane.f32.xlu0 %v1976
    %v1978 = vpop.xlane.xlu0 %1977
    %v1979 = vsel %vm858, %v1745, 0.0
    %1980 = vadd.xlane.f32.xlu0 %v1979
    %v1981 = vpop.xlane.xlu0 %1980
    %v1982 = vsel %vm858, %v1746, 0.0
    %1983 = vadd.xlane.f32.xlu0 %v1982
    %v1984 = vpop.xlane.xlu0 %1983
    %v1985 = vsel %vm858, %v1747, 0.0
    %1986 = vadd.xlane.f32.xlu0 %v1985
    %v1987 = vpop.xlane.xlu0 %1986
    %v1988 = vsel %vm858, %v1748, 0.0
    %1989 = vadd.xlane.f32.xlu0 %v1988
    %v1990 = vpop.xlane.xlu0 %1989
    %v1991 = vsel %vm858, %v1749, 0.0
    %1992 = vadd.xlane.f32.xlu0 %v1991
    %v1993 = vpop.xlane.xlu0 %1992
    %v1994 = vsel %vm858, %v1750, 0.0
    %1995 = vadd.xlane.f32.xlu0 %v1994
    %v1996 = vpop.xlane.xlu0 %1995
    %v1997 = vsel %vm858, %v1751, 0.0
    %1998 = vadd.xlane.f32.xlu0 %v1997
    %v1999 = vpop.xlane.xlu0 %1998
    %v2000 = vrcp.pop 32.0
    %v2001 = vmul.f32 %v1966, %v2000
    %v2002 = vmul.f32 %v1969, %v2000
    %v2003 = vmul.f32 %v1972, %v2000
    %v2004 = vmul.f32 %v1975, %v2000
    %v2005 = vmul.f32 %v1978, %v2000
    %v2006 = vmul.f32 %v1981, %v2000
    %v2007 = vmul.f32 %v1984, %v2000
    %v2008 = vmul.f32 %v1987, %v2000
    %v2009 = vmul.f32 %v1990, %v2000
    %v2010 = vmul.f32 %v1993, %v2000
    %v2011 = vmul.f32 %v1996, %v2000
    %v2012 = vmul.f32 %v1999, %v2000
    %v2013 = vsub.f32 %v1740, %v2001
    %v2014 = vsub.f32 %v1741, %v2002
    %v2015 = vsub.f32 %v1742, %v2003
    %v2016 = vsub.f32 %v1743, %v2004
    %v2017 = vsub.f32 %v1744, %v2005
    %v2018 = vsub.f32 %v1745, %v2006
    %v2019 = vsub.f32 %v1746, %v2007
    %v2020 = vsub.f32 %v1747, %v2008
    %v2021 = vsub.f32 %v1748, %v2009
    %v2022 = vsub.f32 %v1749, %v2010
    %v2023 = vsub.f32 %v1750, %v2011
    %v2024 = vsub.f32 %v1751, %v2012
    %v2025 = vmul.f32 %v2013, %v2013
    %v2026 = vmul.f32 %v2014, %v2014
    %v2027 = vmul.f32 %v2015, %v2015
    %v2028 = vmul.f32 %v2016, %v2016
    %v2029 = vmul.f32 %v2017, %v2017
    %v2030 = vmul.f32 %v2018, %v2018
    %v2031 = vmul.f32 %v2019, %v2019
    %v2032 = vmul.f32 %v2020, %v2020
    %v2033 = vmul.f32 %v2021, %v2021
    %v2034 = vmul.f32 %v2022, %v2022
    %v2035 = vmul.f32 %v2023, %v2023
    %v2036 = vmul.f32 %v2024, %v2024
    %v2037 = vsel %vm858, %v2025, 0.0
    %2038 = vadd.xlane.f32.xlu0 %v2037
    %v2039 = vpop.xlane.xlu0 %2038
    %v2040 = vsel %vm858, %v2026, 0.0
    %2041 = vadd.xlane.f32.xlu0 %v2040
    %v2042 = vpop.xlane.xlu0 %2041
    %v2043 = vsel %vm858, %v2027, 0.0
    %2044 = vadd.xlane.f32.xlu0 %v2043
    %v2045 = vpop.xlane.xlu0 %2044
    %v2046 = vsel %vm858, %v2028, 0.0
    %2047 = vadd.xlane.f32.xlu0 %v2046
    %v2048 = vpop.xlane.xlu0 %2047
    %v2049 = vsel %vm858, %v2029, 0.0
    %2050 = vadd.xlane.f32.xlu0 %v2049
    %v2051 = vpop.xlane.xlu0 %2050
    %v2052 = vsel %vm858, %v2030, 0.0
    %2053 = vadd.xlane.f32.xlu0 %v2052
    %v2054 = vpop.xlane.xlu0 %2053
    %v2055 = vsel %vm858, %v2031, 0.0
    %2056 = vadd.xlane.f32.xlu0 %v2055
    %v2057 = vpop.xlane.xlu0 %2056
    %v2058 = vsel %vm858, %v2032, 0.0
    %2059 = vadd.xlane.f32.xlu0 %v2058
    %v2060 = vpop.xlane.xlu0 %2059
    %v2061 = vsel %vm858, %v2033, 0.0
    %2062 = vadd.xlane.f32.xlu0 %v2061
    %v2063 = vpop.xlane.xlu0 %2062
    %v2064 = vsel %vm858, %v2034, 0.0
    %2065 = vadd.xlane.f32.xlu0 %v2064
    %v2066 = vpop.xlane.xlu0 %2065
    %v2067 = vsel %vm858, %v2035, 0.0
    %2068 = vadd.xlane.f32.xlu0 %v2067
    %v2069 = vpop.xlane.xlu0 %2068
    %v2070 = vsel %vm858, %v2036, 0.0
    %2071 = vadd.xlane.f32.xlu0 %v2070
    %v2072 = vpop.xlane.xlu0 %2071
    %v2073 = vmul.f32 %v2039, %v2000
    %v2074 = vmul.f32 %v2042, %v2000
    %v2075 = vmul.f32 %v2045, %v2000
    %v2076 = vmul.f32 %v2048, %v2000
    %v2077 = vmul.f32 %v2051, %v2000
    %v2078 = vmul.f32 %v2054, %v2000
    %v2079 = vmul.f32 %v2057, %v2000
    %v2080 = vmul.f32 %v2060, %v2000
    %v2081 = vmul.f32 %v2063, %v2000
    %v2082 = vmul.f32 %v2066, %v2000
    %v2083 = vmul.f32 %v2069, %v2000
    %v2084 = vmul.f32 %v2072, %v2000
    %v2085 = vadd.f32 %v2073, 1e-05
    %v2086 = vadd.f32 %v2074, 1e-05
    %v2087 = vadd.f32 %v2075, 1e-05
    %v2088 = vadd.f32 %v2076, 1e-05
    %v2089 = vadd.f32 %v2077, 1e-05
    %v2090 = vadd.f32 %v2078, 1e-05
    %v2091 = vadd.f32 %v2079, 1e-05
    %v2092 = vadd.f32 %v2080, 1e-05
    %v2093 = vadd.f32 %v2081, 1e-05
    %v2094 = vadd.f32 %v2082, 1e-05
    %v2095 = vadd.f32 %v2083, 1e-05
    %v2096 = vadd.f32 %v2084, 1e-05
    %v2097 = vrsqrt.pop %v2085
    %v2098 = vrsqrt.pop %v2086
    %v2099 = vrsqrt.pop %v2087
    %v2100 = vrsqrt.pop %v2088
    %v2101 = vrsqrt.pop %v2089
    %v2102 = vrsqrt.pop %v2090
    %v2103 = vrsqrt.pop %v2091
    %v2104 = vrsqrt.pop %v2092
    %v2105 = vrsqrt.pop %v2093
    %v2106 = vrsqrt.pop %v2094
    %v2107 = vrsqrt.pop %v2095
    %v2108 = vrsqrt.pop %v2096
    %v2109 = vmul.f32 %v2013, %v2097
    %v2110 = vmul.f32 %v2014, %v2098
    %v2111 = vmul.f32 %v2015, %v2099
    %v2112 = vmul.f32 %v2016, %v2100
    %v2113 = vmul.f32 %v2017, %v2101
    %v2114 = vmul.f32 %v2018, %v2102
    %v2115 = vmul.f32 %v2019, %v2103
    %v2116 = vmul.f32 %v2020, %v2104
    %v2117 = vmul.f32 %v2021, %v2105
    %v2118 = vmul.f32 %v2022, %v2106
    %v2119 = vmul.f32 %v2023, %v2107
    %v2120 = vmul.f32 %v2024, %v2108
    %v2121 = vlaneseq
    %v2122 = vshrl.u32 %v2121, 7
    %v2123 = vsub.s32 5, %v2122
    %v2124 = vrot.slane %v793, %v2123
    %v2125 = vmul.f32 %v2109, %v2124
    %v2126 = vmul.f32 %v2110, %v2124
    %v2127 = vmul.f32 %v2111, %v2124
    %v2128 = vmul.f32 %v2112, %v2124
    %v2129 = vmul.f32 %v2113, %v2124
    %v2130 = vmul.f32 %v2114, %v2124
    %v2131 = vmul.f32 %v2115, %v2124
    %v2132 = vmul.f32 %v2116, %v2124
    %v2133 = vmul.f32 %v2117, %v2124
    %v2134 = vmul.f32 %v2118, %v2124
    %v2135 = vmul.f32 %v2119, %v2124
    %v2136 = vmul.f32 %v2120, %v2124
    %v2137 = vlaneseq
    %v2138 = vshrl.u32 %v2137, 7
    %v2139 = vsub.s32 6, %v2138
    %v2140 = vrot.slane %v793, %v2139
    %v2141 = vadd.f32 %v2125, %v2140
    %v2142 = vadd.f32 %v2126, %v2140
    %v2143 = vadd.f32 %v2127, %v2140
    %v2144 = vadd.f32 %v2128, %v2140
    %v2145 = vadd.f32 %v2129, %v2140
    %v2146 = vadd.f32 %v2130, %v2140
    %v2147 = vadd.f32 %v2131, %v2140
    %v2148 = vadd.f32 %v2132, %v2140
    %v2149 = vadd.f32 %v2133, %v2140
    %v2150 = vadd.f32 %v2134, %v2140
    %v2151 = vadd.f32 %v2135, %v2140
    %v2152 = vadd.f32 %v2136, %v2140
    %2153 = vst.msk [vmem:[#allocation2] sm:$0xff] %vm858, %v2141
    %2154 = vst.msk [vmem:[#allocation2 + $0x8] sm:$0xff] %vm858, %v2142
    %2155 = vst.msk [vmem:[#allocation2 + $0x10] sm:$0xff] %vm858, %v2143
    %2156 = vst.msk [vmem:[#allocation2 + $0x18] sm:$0xff] %vm858, %v2144
    %2157 = vst.msk [vmem:[#allocation2 + $0x20] sm:$0xff] %vm858, %v2145
    %2158 = vst.msk [vmem:[#allocation2 + $0x28] sm:$0xff] %vm858, %v2146
    %2159 = vst.msk [vmem:[#allocation2 + $0x30] sm:$0xff] %vm858, %v2147
    %2160 = vst.msk [vmem:[#allocation2 + $0x38] sm:$0xff] %vm858, %v2148
    %2161 = vst.msk [vmem:[#allocation2 + $0x40] sm:$0xff] %vm858, %v2149
    %2162 = vst.msk [vmem:[#allocation2 + $0x48] sm:$0xff] %vm858, %v2150
    %2163 = vst.msk [vmem:[#allocation2 + $0x50] sm:$0xff] %vm858, %v2151
    %2164 = vst.msk [vmem:[#allocation2 + $0x58] sm:$0xff] %vm858, %v2152
    %v2165 = vld [vmem:[%s1] sm:$0xff]
    %v2166 = vld [vmem:[%s1 + $0x8] sm:$0xff]
    %2167 = vst.msk [vmem:[#allocation2 + $0x28] sm:$0xff] %vm858, %v2165
    %2168 = vst.msk [vmem:[#allocation2 + $0x58] sm:$0xff] %vm858, %v2166
    %v2169 = vld [vmem:[#allocation2] sm:$0xff]
    %v2170 = vld [vmem:[#allocation2 + $0x8] sm:$0xff]
    %v2171 = vld [vmem:[#allocation2 + $0x10] sm:$0xff]
    %v2172 = vld [vmem:[#allocation2 + $0x18] sm:$0xff]
    %v2173 = vld [vmem:[#allocation2 + $0x20] sm:$0xff]
    %v2174 = vld [vmem:[#allocation2 + $0x28] sm:$0xff]
    %v2175 = vld [vmem:[#allocation2 + $0x30] sm:$0xff]
    %v2176 = vld [vmem:[#allocation2 + $0x38] sm:$0xff]
    %v2177 = vld [vmem:[#allocation2 + $0x40] sm:$0xff]
    %v2178 = vld [vmem:[#allocation2 + $0x48] sm:$0xff]
    %v2179 = vld [vmem:[#allocation2 + $0x50] sm:$0xff]
    %v2180 = vld [vmem:[#allocation2 + $0x58] sm:$0xff]
    %v2181 = vpack.c.bf16 %v2170, %v2169
    %v2182 = vpack.c.bf16 %v2172, %v2171
    %v2183 = vpack.c.bf16 %v2174, %v2173
    %v2184 = vpack.c.bf16 %v2176, %v2175
    %v2185 = vpack.c.bf16 %v2178, %v2177
    %v2186 = vpack.c.bf16 %v2180, %v2179
    %v2187 = vpack.c.bf16 %v2166, %v2165
    %v2188 = vld [vmem:[#allocation6] sm:$0xf]
    %v2189 = vld [vmem:[#allocation6 + $0x4] sm:$0xf]
    %v2190 = vld [vmem:[#allocation6 + $0x8] sm:$0xf]
    %v2191 = vld [vmem:[#allocation6 + $0xc] sm:$0xf]
    %v2196 = vunpack.c.l.b16 %v2188
    %v2197 = vunpack.c.l.b16 %v2189
    %v2198 = vunpack.c.l.b16 %v2190
    %v2199 = vunpack.c.l.b16 %v2191
    %v2200 = vpack.c.b16 %v2197, %v2196
    %v2201 = vpack.c.b16 %v2199, %v2198
    %v2205 = vsel %vm858, %v2187, 0
    %2207 = vmatprep.subr.bf16.mxu0 0
    %2208 = vmatpush1.bf16.msra.mxu0 %v2200
    %2209 = vmatprep.subr.bf16.mxu0 0
    %2210 = vmatpush1.bf16.msra.mxu0 %v2201
    %2211 = vmatprep.subr.bf16.mxu0 0
    %2212 = vmatpush1.bf16.msra.mxu0 0
    %2213 = vmatprep.subr.bf16.mxu0 0
    %2214 = vmatpush1.bf16.msra.mxu0 0
    %2215 = vmatprep.subr.bf16.mxu0 0
    %2216 = vmatpush1.bf16.msra.mxu0 0
    %2217 = vmatprep.subr.bf16.mxu0 0
    %2218 = vmatpush1.bf16.msra.mxu0 0
    %2219 = vmatprep.subr.bf16.mxu0 0
    %2220 = vmatpush1.bf16.msra.mxu0 0
    %2221 = vmatprep.subr.bf16.mxu0 0
    %2222 = vmatpush1.bf16.msra.mxu0 0
    %2223 = vmatprep.subr.bf16.mxu0 0
    %2224 = vmatpush1.bf16.msra.mxu0 0
    %2225 = vmatprep.subr.bf16.mxu0 0
    %2226 = vmatpush1.bf16.msra.mxu0 0
    %2227 = vmatprep.subr.bf16.mxu0 0
    %2228 = vmatpush1.bf16.msra.mxu0 0
    %2229 = vmatprep.subr.bf16.mxu0 0
    %2230 = vmatpush1.bf16.msra.mxu0 0
    %2231 = vmatprep.subr.bf16.mxu0 0
    %2232 = vmatpush1.bf16.msra.mxu0 0
    %2233 = vmatprep.subr.bf16.mxu0 0
    %2234 = vmatpush1.bf16.msra.mxu0 0
    %2235 = vmatprep.subr.bf16.mxu0 0
    %2236 = vmatpush1.bf16.msra.mxu0 0
    %2237 = vmatprep.subr.bf16.mxu0 0
    %2238 = vmatpush1.bf16.msra.mxu0 0
    %2239 = vmatprep.mubr.bf16.mxu0 0
    %2240 = vmatmul.mubr.bf16.gmra.mrb[0].mxu0 %v2205
    %v2241 = vpop.f32.mrb[0].mxu0
    %v2242 = vadd.f32 0.0, %v2241
    %v2243 = vpop.f32.mrb[0].mxu0
    %v2244 = vpop.f32.mrb[0].mxu0
    %v2245 = vadd.f32 0.0, %v2244
    %v2246 = vpop.f32.mrb[0].mxu0
    %2247 = vdwg.mxu0
    %v2248 = vpack.c.bf16 %v2245, %v2242
    %s2249 = scalar_lea.vmem [#allocation6], 16
    %v2250 = vld [vmem:[%s2249] sm:$0xf]
    %v2251 = vld [vmem:[%s2249 + $0x4] sm:$0xf]
    %v2252 = vld [vmem:[%s2249 + $0x8] sm:$0xf]
    %v2253 = vld [vmem:[%s2249 + $0xc] sm:$0xf]
    %v2258 = vunpack.c.l.b16 %v2250
    %v2259 = vunpack.c.l.b16 %v2251
    %v2260 = vunpack.c.l.b16 %v2252
    %v2261 = vunpack.c.l.b16 %v2253
    %v2262 = vpack.c.b16 %v2259, %v2258
    %v2263 = vpack.c.b16 %v2261, %v2260
    %v2267 = vsel %vm858, %v2181, 0
    %v2270 = vsel %vm858, %v2182, 0
    %v2273 = vsel %vm858, %v2183, 0
    %v2276 = vsel %vm858, %v2184, 0
    %v2279 = vsel %vm858, %v2185, 0
    %v2282 = vsel %vm858, %v2186, 0
    %2284 = vmatprep.subr.bf16.mxu0 0
    %2285 = vmatpush1.bf16.msra.mxu0 %v2262
    %2286 = vmatprep.subr.bf16.mxu0 0
    %2287 = vmatpush1.bf16.msra.mxu0 %v2263
    %2288 = vmatprep.subr.bf16.mxu0 0
    %2289 = vmatpush1.bf16.msra.mxu0 0
    %2290 = vmatprep.subr.bf16.mxu0 0
    %2291 = vmatpush1.bf16.msra.mxu0 0
    %2292 = vmatprep.subr.bf16.mxu0 0
    %2293 = vmatpush1.bf16.msra.mxu0 0
    %2294 = vmatprep.subr.bf16.mxu0 0
    %2295 = vmatpush1.bf16.msra.mxu0 0
    %2296 = vmatprep.subr.bf16.mxu0 0
    %2297 = vmatpush1.bf16.msra.mxu0 0
    %2298 = vmatprep.subr.bf16.mxu0 0
    %2299 = vmatpush1.bf16.msra.mxu0 0
    %2300 = vmatprep.subr.bf16.mxu0 0
    %2301 = vmatpush1.bf16.msra.mxu0 0
    %2302 = vmatprep.subr.bf16.mxu0 0
    %2303 = vmatpush1.bf16.msra.mxu0 0
    %2304 = vmatprep.subr.bf16.mxu0 0
    %2305 = vmatpush1.bf16.msra.mxu0 0
    %2306 = vmatprep.subr.bf16.mxu0 0
    %2307 = vmatpush1.bf16.msra.mxu0 0
    %2308 = vmatprep.subr.bf16.mxu0 0
    %2309 = vmatpush1.bf16.msra.mxu0 0
    %2310 = vmatprep.subr.bf16.mxu0 0
    %2311 = vmatpush1.bf16.msra.mxu0 0
    %2312 = vmatprep.subr.bf16.mxu0 0
    %2313 = vmatpush1.bf16.msra.mxu0 0
    %2314 = vmatprep.subr.bf16.mxu0 0
    %2315 = vmatpush1.bf16.msra.mxu0 0
    %2316 = vmatprep.mubr.bf16.mxu0 0
    %2317 = vmatmul.mubr.bf16.gmra.mrb[0].mxu0 %v2267
    %v2318 = vpop.f32.mrb[0].mxu0
    %v2319 = vadd.f32 0.0, %v2318
    %v2320 = vpop.f32.mrb[0].mxu0
    %v2321 = vpop.f32.mrb[0].mxu0
    %v2322 = vadd.f32 0.0, %v2321
    %v2323 = vpop.f32.mrb[0].mxu0
    %2324 = vmatprep.mubr.bf16.mxu0 0
    %2325 = vmatmul.mubr.bf16.gmra.mrb[0].mxu0 %v2270
    %v2326 = vpop.f32.mrb[0].mxu0
    %v2327 = vadd.f32 0.0, %v2326
    %v2328 = vpop.f32.mrb[0].mxu0
    %v2329 = vpop.f32.mrb[0].mxu0
    %v2330 = vadd.f32 0.0, %v2329
    %v2331 = vpop.f32.mrb[0].mxu0
    %2332 = vmatprep.mubr.bf16.mxu0 0
    %2333 = vmatmul.mubr.bf16.gmra.mrb[0].mxu0 %v2273
    %v2334 = vpop.f32.mrb[0].mxu0
    %v2335 = vadd.f32 0.0, %v2334
    %v2336 = vpop.f32.mrb[0].mxu0
    %v2337 = vpop.f32.mrb[0].mxu0
    %v2338 = vadd.f32 0.0, %v2337
    %v2339 = vpop.f32.mrb[0].mxu0
    %2340 = vmatprep.mubr.bf16.mxu0 0
    %2341 = vmatmul.mubr.bf16.gmra.mrb[0].mxu0 %v2276
    %v2342 = vpop.f32.mrb[0].mxu0
    %v2343 = vadd.f32 0.0, %v2342
    %v2344 = vpop.f32.mrb[0].mxu0
    %v2345 = vpop.f32.mrb[0].mxu0
    %v2346 = vadd.f32 0.0, %v2345
    %v2347 = vpop.f32.mrb[0].mxu0
    %2348 = vmatprep.mubr.bf16.mxu0 0
    %2349 = vmatmul.mubr.bf16.gmra.mrb[0].mxu0 %v2279
    %v2350 = vpop.f32.mrb[0].mxu0
    %v2351 = vadd.f32 0.0, %v2350
    %v2352 = vpop.f32.mrb[0].mxu0
    %v2353 = vpop.f32.mrb[0].mxu0
    %v2354 = vadd.f32 0.0, %v2353
    %v2355 = vpop.f32.mrb[0].mxu0
    %2356 = vmatprep.mubr.bf16.mxu0 0
    %2357 = vmatmul.mubr.bf16.gmra.mrb[0].mxu0 %v2282
    %v2358 = vpop.f32.mrb[0].mxu0
    %v2359 = vadd.f32 0.0, %v2358
    %v2360 = vpop.f32.mrb[0].mxu0
    %v2361 = vpop.f32.mrb[0].mxu0
    %v2362 = vadd.f32 0.0, %v2361
    %v2363 = vpop.f32.mrb[0].mxu0
    %2364 = vdwg.mxu0
    %v2365 = vpack.c.bf16 %v2322, %v2319
    %v2366 = vpack.c.bf16 %v2330, %v2327
    %v2367 = vpack.c.bf16 %v2338, %v2335
    %v2368 = vpack.c.bf16 %v2346, %v2343
    %v2369 = vpack.c.bf16 %v2354, %v2351
    %v2370 = vpack.c.bf16 %v2362, %v2359
    %s2371 = scalar_lea.vmem [#allocation6], 32
    %v2372 = vld [vmem:[%s2371] sm:$0xf]
    %v2373 = vld [vmem:[%s2371 + $0x4] sm:$0xf]
    %v2374 = vld [vmem:[%s2371 + $0x8] sm:$0xf]
    %v2375 = vld [vmem:[%s2371 + $0xc] sm:$0xf]
    %v2380 = vunpack.c.l.b16 %v2372
    %v2381 = vunpack.c.l.b16 %v2373
    %v2382 = vunpack.c.l.b16 %v2374
    %v2383 = vunpack.c.l.b16 %v2375
    %v2384 = vpack.c.b16 %v2381, %v2380
    %v2385 = vpack.c.b16 %v2383, %v2382
    %2388 = vmatprep.subr.bf16.mxu0 0
    %2389 = vmatpush1.bf16.msra.mxu0 %v2384
    %2390 = vmatprep.subr.bf16.mxu0 0
    %2391 = vmatpush1.bf16.msra.mxu0 %v2385
    %2392 = vmatprep.subr.bf16.mxu0 0
    %2393 = vmatpush1.bf16.msra.mxu0 0
    %2394 = vmatprep.subr.bf16.mxu0 0
    %2395 = vmatpush1.bf16.msra.mxu0 0
    %2396 = vmatprep.subr.bf16.mxu0 0
    %2397 = vmatpush1.bf16.msra.mxu0 0
    %2398 = vmatprep.subr.bf16.mxu0 0
    %2399 = vmatpush1.bf16.msra.mxu0 0
    %2400 = vmatprep.subr.bf16.mxu0 0
    %2401 = vmatpush1.bf16.msra.mxu0 0
    %2402 = vmatprep.subr.bf16.mxu0 0
    %2403 = vmatpush1.bf16.msra.mxu0 0
    %2404 = vmatprep.subr.bf16.mxu0 0
    %2405 = vmatpush1.bf16.msra.mxu0 0
    %2406 = vmatprep.subr.bf16.mxu0 0
    %2407 = vmatpush1.bf16.msra.mxu0 0
    %2408 = vmatprep.subr.bf16.mxu0 0
    %2409 = vmatpush1.bf16.msra.mxu0 0
    %2410 = vmatprep.subr.bf16.mxu0 0
    %2411 = vmatpush1.bf16.msra.mxu0 0
    %2412 = vmatprep.subr.bf16.mxu0 0
    %2413 = vmatpush1.bf16.msra.mxu0 0
    %2414 = vmatprep.subr.bf16.mxu0 0
    %2415 = vmatpush1.bf16.msra.mxu0 0
    %2416 = vmatprep.subr.bf16.mxu0 0
    %2417 = vmatpush1.bf16.msra.mxu0 0
    %2418 = vmatprep.subr.bf16.mxu0 0
    %2419 = vmatpush1.bf16.msra.mxu0 0
    %2420 = vmatprep.mubr.bf16.mxu0 0
    %2421 = vmatmul.mubr.bf16.gmra.mrb[0].mxu0 %v2267
    %v2422 = vpop.f32.mrb[0].mxu0
    %v2423 = vadd.f32 0.0, %v2422
    %v2424 = vpop.f32.mrb[0].mxu0
    %v2425 = vpop.f32.mrb[0].mxu0
    %v2426 = vadd.f32 0.0, %v2425
    %v2427 = vpop.f32.mrb[0].mxu0
    %2428 = vmatprep.mubr.bf16.mxu0 0
    %2429 = vmatmul.mubr.bf16.gmra.mrb[0].mxu0 %v2270
    %v2430 = vpop.f32.mrb[0].mxu0
    %v2431 = vadd.f32 0.0, %v2430
    %v2432 = vpop.f32.mrb[0].mxu0
    %v2433 = vpop.f32.mrb[0].mxu0
    %v2434 = vadd.f32 0.0, %v2433
    %v2435 = vpop.f32.mrb[0].mxu0
    %2436 = vmatprep.mubr.bf16.mxu0 0
    %2437 = vmatmul.mubr.bf16.gmra.mrb[0].mxu0 %v2273
    %v2438 = vpop.f32.mrb[0].mxu0
    %v2439 = vadd.f32 0.0, %v2438
    %v2440 = vpop.f32.mrb[0].mxu0
    %v2441 = vpop.f32.mrb[0].mxu0
    %v2442 = vadd.f32 0.0, %v2441
    %v2443 = vpop.f32.mrb[0].mxu0
    %2444 = vmatprep.mubr.bf16.mxu0 0
    %2445 = vmatmul.mubr.bf16.gmra.mrb[0].mxu0 %v2276
    %v2446 = vpop.f32.mrb[0].mxu0
    %v2447 = vadd.f32 0.0, %v2446
    %v2448 = vpop.f32.mrb[0].mxu0
    %v2449 = vpop.f32.mrb[0].mxu0
    %v2450 = vadd.f32 0.0, %v2449
    %v2451 = vpop.f32.mrb[0].mxu0
    %2452 = vmatprep.mubr.bf16.mxu0 0
    %2453 = vmatmul.mubr.bf16.gmra.mrb[0].mxu0 %v2279
    %v2454 = vpop.f32.mrb[0].mxu0
    %v2455 = vadd.f32 0.0, %v2454
    %v2456 = vpop.f32.mrb[0].mxu0
    %v2457 = vpop.f32.mrb[0].mxu0
    %v2458 = vadd.f32 0.0, %v2457
    %v2459 = vpop.f32.mrb[0].mxu0
    %2460 = vmatprep.mubr.bf16.mxu0 0
    %2461 = vmatmul.mubr.bf16.gmra.mrb[0].mxu0 %v2282
    %v2462 = vpop.f32.mrb[0].mxu0
    %v2463 = vadd.f32 0.0, %v2462
    %v2464 = vpop.f32.mrb[0].mxu0
    %v2465 = vpop.f32.mrb[0].mxu0
    %v2466 = vadd.f32 0.0, %v2465
    %v2467 = vpop.f32.mrb[0].mxu0
    %2468 = vdwg.mxu0
    %v2469 = vpack.c.bf16 %v2426, %v2423
    %v2470 = vpack.c.bf16 %v2434, %v2431
    %v2471 = vpack.c.bf16 %v2442, %v2439
    %v2472 = vpack.c.bf16 %v2450, %v2447
    %v2473 = vpack.c.bf16 %v2458, %v2455
    %v2474 = vpack.c.bf16 %v2466, %v2463
    %v2475 = vld [vmem:[%s7] sm:$0xff]
    %v2476 = vld [vmem:[%s7 + $0x8] sm:$0xff]
    %vm2477 = vcmask 31744
    %v2479 = vsel %vm2477, %v2248, 0
    %v2482 = vsel %vm2477, %v2365, 0
    %v2485 = vsel %vm2477, %v2366, 0
    %v2488 = vsel %vm2477, %v2367, 0
    %v2491 = vsel %vm2477, %v2368, 0
    %v2494 = vsel %vm2477, %v2369, 0
    %v2497 = vsel %vm2477, %v2370, 0
    %2499 = vmatprep.subr.bf16.mxu0 0
    %2500 = vmatpush1.bf16.xpose.msra.mxu0 %v2482
    %2501 = vmatprep.subr.bf16.mxu0 0
    %2502 = vmatpush1.bf16.xpose.msra.mxu0 %v2485
    %2503 = vmatprep.subr.bf16.mxu0 0
    %2504 = vmatpush1.bf16.xpose.msra.mxu0 %v2488
    %2505 = vmatprep.subr.bf16.mxu0 0
    %2506 = vmatpush1.bf16.xpose.msra.mxu0 %v2491
    %2507 = vmatprep.subr.bf16.mxu0 0
    %2508 = vmatpush1.bf16.xpose.msra.mxu0 %v2494
    %2509 = vmatprep.subr.bf16.mxu0 0
    %2510 = vmatpush1.bf16.xpose.msra.mxu0 %v2497
    %2511 = vmatprep.subr.bf16.mxu0 0
    %2512 = vmatpush1.bf16.xpose.msra.mxu0 0
    %2513 = vmatprep.subr.bf16.mxu0 0
    %2514 = vmatpush1.bf16.xpose.msra.mxu0 0
    %2515 = vmatprep.subr.bf16.mxu0 0
    %2516 = vmatpush1.bf16.xpose.msra.mxu0 0
    %2517 = vmatprep.subr.bf16.mxu0 0
    %2518 = vmatpush1.bf16.xpose.msra.mxu0 0
    %2519 = vmatprep.subr.bf16.mxu0 0
    %2520 = vmatpush1.bf16.xpose.msra.mxu0 0
    %2521 = vmatprep.subr.bf16.mxu0 0
    %2522 = vmatpush1.bf16.xpose.msra.mxu0 0
    %2523 = vmatprep.subr.bf16.mxu0 0
    %2524 = vmatpush1.bf16.xpose.msra.mxu0 0
    %2525 = vmatprep.subr.bf16.mxu0 0
    %2526 = vmatpush1.bf16.xpose.msra.mxu0 0
    %2527 = vmatprep.subr.bf16.mxu0 0
    %2528 = vmatpush1.bf16.xpose.msra.mxu0 0
    %2529 = vmatprep.subr.bf16.mxu0 0
    %2530 = vmatpush1.bf16.xpose.msra.mxu0 0
    %2531 = vmatprep.mubr.bf16.mxu0 0
    %2532 = vmatmul.mubr.bf16.gmra.mrb[0].mxu0 %v2479
    %v2533 = vpop.f32.mrb[0].mxu0
    %v2534 = vadd.f32 %v2475, %v2533
    %v2535 = vpop.f32.mrb[0].mxu0
    %v2536 = vpop.f32.mrb[0].mxu0
    %v2537 = vadd.f32 %v2476, %v2536
    %v2538 = vpop.f32.mrb[0].mxu0
    %2539 = vdwg.mxu0
    %vm2540 = vcmask 785408
    %v2541 = vsel %vm2540, %v2534, -inf
    %2542 = vmax.xlane.f32.xlu0 %v2541
    %v2543 = vpop.xlane.xlu0 %2542
    %v2544 = vsel %vm2540, %v2537, -inf
    %2545 = vmax.xlane.f32.xlu0 %v2544
    %v2546 = vpop.xlane.xlu0 %2545
    %v2547 = vsub.f32 %v2534, %v2543
    %v2548 = vsub.f32 %v2537, %v2546
    %v2549 = vmul.f32 %v2547, 1.442695
    %v2550 = vpow.pop %v2549
    %v2551 = vmul.f32 %v2548, 1.442695
    %v2552 = vpow.pop %v2551
    %v2553 = vsel %vm2540, %v2550, 0.0
    %2554 = vadd.xlane.f32.xlu0 %v2553
    %v2555 = vpop.xlane.xlu0 %2554
    %v2556 = vsel %vm2540, %v2552, 0.0
    %2557 = vadd.xlane.f32.xlu0 %v2556
    %v2558 = vpop.xlane.xlu0 %2557
    %v2559 = vrcp.pop %v2555
    %v2560 = vmul.f32 %v2550, %v2559
    %v2561 = vrcp.pop %v2558
    %v2562 = vmul.f32 %v2552, %v2561
    %v2563 = vpack.c.bf16 %v2562, %v2560
    %v2565 = vsel %vm2540, %v2563, 0
    %2567 = vmatprep.subr.bf16.mxu0 0
    %2568 = vmatpush1.bf16.msra.mxu0 %v2469
    %2569 = vmatprep.subr.bf16.mxu0 0
    %2570 = vmatpush1.bf16.msra.mxu0 %v2470
    %2571 = vmatprep.subr.bf16.mxu0 0
    %2572 = vmatpush1.bf16.msra.mxu0 %v2471
    %2573 = vmatprep.subr.bf16.mxu0 0
    %2574 = vmatpush1.bf16.msra.mxu0 %v2472
    %2575 = vmatprep.subr.bf16.mxu0 0
    %2576 = vmatpush1.bf16.msra.mxu0 %v2473
    %2577 = vmatprep.subr.bf16.mxu0 0
    %2578 = vmatpush1.bf16.msra.mxu0 %v2474
    %2579 = vmatprep.subr.bf16.mxu0 0
    %2580 = vmatpush1.bf16.msra.mxu0 0
    %2581 = vmatprep.subr.bf16.mxu0 0
    %2582 = vmatpush1.bf16.msra.mxu0 0
    %2583 = vmatprep.subr.bf16.mxu0 0
    %2584 = vmatpush1.bf16.msra.mxu0 0
    %2585 = vmatprep.subr.bf16.mxu0 0
    %2586 = vmatpush1.bf16.msra.mxu0 0
    %2587 = vmatprep.subr.bf16.mxu0 0
    %2588 = vmatpush1.bf16.msra.mxu0 0
    %2589 = vmatprep.subr.bf16.mxu0 0
    %2590 = vmatpush1.bf16.msra.mxu0 0
    %2591 = vmatprep.subr.bf16.mxu0 0
    %2592 = vmatpush1.bf16.msra.mxu0 0
    %2593 = vmatprep.subr.bf16.mxu0 0
    %2594 = vmatpush1.bf16.msra.mxu0 0
    %2595 = vmatprep.subr.bf16.mxu0 0
    %2596 = vmatpush1.bf16.msra.mxu0 0
    %2597 = vmatprep.subr.bf16.mxu0 0
    %2598 = vmatpush1.bf16.msra.mxu0 0
    %2599 = vmatprep.mubr.bf16.mxu0 0
    %2600 = vmatmul.mubr.bf16.gmra.mrb[0].mxu0 %v2565
    %v2601 = vpop.f32.mrb[0].mxu0
    %v2602 = vadd.f32 0.0, %v2601
    %v2603 = vpop.f32.mrb[0].mxu0
    %v2604 = vpop.f32.mrb[0].mxu0
    %v2605 = vadd.f32 0.0, %v2604
    %v2606 = vpop.f32.mrb[0].mxu0
    %2607 = vdwg.mxu0
    %2609 = vrot.lane.b32.xlu0 %v2248, 124
    %v2610 = vpop.permute.xlu0 %2609
    %2617 = vrot.lane.b32.xlu0 %v2365, 124
    %v2618 = vpop.permute.xlu0 %2617
    %2619 = vrot.lane.b32.xlu0 %v2366, 124
    %v2620 = vpop.permute.xlu0 %2619
    %2621 = vrot.lane.b32.xlu0 %v2367, 124
    %v2622 = vpop.permute.xlu0 %2621
    %2623 = vrot.lane.b32.xlu0 %v2368, 124
    %v2624 = vpop.permute.xlu0 %2623
    %2625 = vrot.lane.b32.xlu0 %v2369, 124
    %v2626 = vpop.permute.xlu0 %2625
    %2627 = vrot.lane.b32.xlu0 %v2370, 124
    %v2628 = vpop.permute.xlu0 %2627
    %v2630 = vsel %vm2477, %v2610, 0
    %v2633 = vsel %vm2477, %v2618, 0
    %v2636 = vsel %vm2477, %v2620, 0
    %v2639 = vsel %vm2477, %v2622, 0
    %v2642 = vsel %vm2477, %v2624, 0
    %v2645 = vsel %vm2477, %v2626, 0
    %v2648 = vsel %vm2477, %v2628, 0
    %2650 = vmatprep.subr.bf16.mxu0 0
    %2651 = vmatpush1.bf16.xpose.msra.mxu0 %v2633
    %2652 = vmatprep.subr.bf16.mxu0 0
    %2653 = vmatpush1.bf16.xpose.msra.mxu0 %v2636
    %2654 = vmatprep.subr.bf16.mxu0 0
    %2655 = vmatpush1.bf16.xpose.msra.mxu0 %v2639
    %2656 = vmatprep.subr.bf16.mxu0 0
    %2657 = vmatpush1.bf16.xpose.msra.mxu0 %v2642
    %2658 = vmatprep.subr.bf16.mxu0 0
    %2659 = vmatpush1.bf16.xpose.msra.mxu0 %v2645
    %2660 = vmatprep.subr.bf16.mxu0 0
    %2661 = vmatpush1.bf16.xpose.msra.mxu0 %v2648
    %2662 = vmatprep.subr.bf16.mxu0 0
    %2663 = vmatpush1.bf16.xpose.msra.mxu0 0
    %2664 = vmatprep.subr.bf16.mxu0 0
    %2665 = vmatpush1.bf16.xpose.msra.mxu0 0
    %2666 = vmatprep.subr.bf16.mxu0 0
    %2667 = vmatpush1.bf16.xpose.msra.mxu0 0
    %2668 = vmatprep.subr.bf16.mxu0 0
    %2669 = vmatpush1.bf16.xpose.msra.mxu0 0
    %2670 = vmatprep.subr.bf16.mxu0 0
    %2671 = vmatpush1.bf16.xpose.msra.mxu0 0
    %2672 = vmatprep.subr.bf16.mxu0 0
    %2673 = vmatpush1.bf16.xpose.msra.mxu0 0
    %2674 = vmatprep.subr.bf16.mxu0 0
    %2675 = vmatpush1.bf16.xpose.msra.mxu0 0
    %2676 = vmatprep.subr.bf16.mxu0 0
    %2677 = vmatpush1.bf16.xpose.msra.mxu0 0
    %2678 = vmatprep.subr.bf16.mxu0 0
    %2679 = vmatpush1.bf16.xpose.msra.mxu0 0
    %2680 = vmatprep.subr.bf16.mxu0 0
    %2681 = vmatpush1.bf16.xpose.msra.mxu0 0
    %2682 = vmatprep.mubr.bf16.mxu0 0
    %2683 = vmatmul.mubr.bf16.gmra.mrb[0].mxu0 %v2630
    %v2684 = vpop.f32.mrb[0].mxu0
    %v2685 = vadd.f32 %v2475, %v2684
    %v2686 = vpop.f32.mrb[0].mxu0
    %v2687 = vpop.f32.mrb[0].mxu0
    %v2688 = vadd.f32 %v2476, %v2687
    %v2689 = vpop.f32.mrb[0].mxu0
    %2690 = vdwg.mxu0
    %v2691 = vsel %vm2540, %v2685, -inf
    %2692 = vmax.xlane.f32.xlu0 %v2691
    %v2693 = vpop.xlane.xlu0 %2692
    %v2694 = vsel %vm2540, %v2688, -inf
    %2695 = vmax.xlane.f32.xlu0 %v2694
    %v2696 = vpop.xlane.xlu0 %2695
    %v2697 = vsub.f32 %v2685, %v2693
    %v2698 = vsub.f32 %v2688, %v2696
    %v2699 = vmul.f32 %v2697, 1.442695
    %v2700 = vpow.pop %v2699
    %v2701 = vmul.f32 %v2698, 1.442695
    %v2702 = vpow.pop %v2701
    %v2703 = vsel %vm2540, %v2700, 0.0
    %2704 = vadd.xlane.f32.xlu0 %v2703
    %v2705 = vpop.xlane.xlu0 %2704
    %v2706 = vsel %vm2540, %v2702, 0.0
    %2707 = vadd.xlane.f32.xlu0 %v2706
    %v2708 = vpop.xlane.xlu0 %2707
    %v2709 = vrcp.pop %v2705
    %v2710 = vmul.f32 %v2700, %v2709
    %v2711 = vrcp.pop %v2708
    %v2712 = vmul.f32 %v2702, %v2711
    %v2713 = vpack.c.bf16 %v2712, %v2710
    %2720 = vrot.lane.b32.xlu0 %v2469, 124
    %v2721 = vpop.permute.xlu0 %2720
    %2722 = vrot.lane.b32.xlu0 %v2470, 124
    %v2723 = vpop.permute.xlu0 %2722
    %2724 = vrot.lane.b32.xlu0 %v2471, 124
    %v2725 = vpop.permute.xlu0 %2724
    %2726 = vrot.lane.b32.xlu0 %v2472, 124
    %v2727 = vpop.permute.xlu0 %2726
    %2728 = vrot.lane.b32.xlu0 %v2473, 124
    %v2729 = vpop.permute.xlu0 %2728
    %2730 = vrot.lane.b32.xlu0 %v2474, 124
    %v2731 = vpop.permute.xlu0 %2730
    %v2739 = vsel %vm2540, %v2713, 0
    %2741 = vmatprep.subr.bf16.mxu0 0
    %2742 = vmatpush1.bf16.msra.mxu0 %v2721
    %2743 = vmatprep.subr.bf16.mxu0 0
    %2744 = vmatpush1.bf16.msra.mxu0 %v2723
    %2745 = vmatprep.subr.bf16.mxu0 0
    %2746 = vmatpush1.bf16.msra.mxu0 %v2725
    %2747 = vmatprep.subr.bf16.mxu0 0
    %2748 = vmatpush1.bf16.msra.mxu0 %v2727
    %2749 = vmatprep.subr.bf16.mxu0 0
    %2750 = vmatpush1.bf16.msra.mxu0 %v2729
    %2751 = vmatprep.subr.bf16.mxu0 0
    %2752 = vmatpush1.bf16.msra.mxu0 %v2731
    %2753 = vmatprep.subr.bf16.mxu0 0
    %2754 = vmatpush1.bf16.msra.mxu0 0
    %2755 = vmatprep.subr.bf16.mxu0 0
    %2756 = vmatpush1.bf16.msra.mxu0 0
    %2757 = vmatprep.subr.bf16.mxu0 0
    %2758 = vmatpush1.bf16.msra.mxu0 0
    %2759 = vmatprep.subr.bf16.mxu0 0
    %2760 = vmatpush1.bf16.msra.mxu0 0
    %2761 = vmatprep.subr.bf16.mxu0 0
    %2762 = vmatpush1.bf16.msra.mxu0 0
    %2763 = vmatprep.subr.bf16.mxu0 0
    %2764 = vmatpush1.bf16.msra.mxu0 0
    %2765 = vmatprep.subr.bf16.mxu0 0
    %2766 = vmatpush1.bf16.msra.mxu0 0
    %2767 = vmatprep.subr.bf16.mxu0 0
    %2768 = vmatpush1.bf16.msra.mxu0 0
    %2769 = vmatprep.subr.bf16.mxu0 0
    %2770 = vmatpush1.bf16.msra.mxu0 0
    %2771 = vmatprep.subr.bf16.mxu0 0
    %2772 = vmatpush1.bf16.msra.mxu0 0
    %2773 = vmatprep.mubr.bf16.mxu0 0
    %2774 = vmatmul.mubr.bf16.gmra.mrb[0].mxu0 %v2739
    %v2775 = vpop.f32.mrb[0].mxu0
    %v2776 = vadd.f32 0.0, %v2775
    %v2777 = vpop.f32.mrb[0].mxu0
    %v2778 = vpop.f32.mrb[0].mxu0
    %v2779 = vadd.f32 0.0, %v2778
    %v2780 = vpop.f32.mrb[0].mxu0
    %2781 = vdwg.mxu0
    %2782 = vrot.lane.b32.xlu0 %v2248, 120
    %v2783 = vpop.permute.xlu0 %2782
    %2784 = vrot.lane.b32.xlu0 %v2365, 120
    %v2785 = vpop.permute.xlu0 %2784
    %2786 = vrot.lane.b32.xlu0 %v2366, 120
    %v2787 = vpop.permute.xlu0 %2786
    %2788 = vrot.lane.b32.xlu0 %v2367, 120
    %v2789 = vpop.permute.xlu0 %2788
    %2790 = vrot.lane.b32.xlu0 %v2368, 120
    %v2791 = vpop.permute.xlu0 %2790
    %2792 = vrot.lane.b32.xlu0 %v2369, 120
    %v2793 = vpop.permute.xlu0 %2792
    %2794 = vrot.lane.b32.xlu0 %v2370, 120
    %v2795 = vpop.permute.xlu0 %2794
    %v2797 = vsel %vm2477, %v2783, 0
    %v2800 = vsel %vm2477, %v2785, 0
    %v2803 = vsel %vm2477, %v2787, 0
    %v2806 = vsel %vm2477, %v2789, 0
    %v2809 = vsel %vm2477, %v2791, 0
    %v2812 = vsel %vm2477, %v2793, 0
    %v2815 = vsel %vm2477, %v2795, 0
    %2817 = vmatprep.subr.bf16.mxu0 0
    %2818 = vmatpush1.bf16.xpose.msra.mxu0 %v2800
    %2819 = vmatprep.subr.bf16.mxu0 0
    %2820 = vmatpush1.bf16.xpose.msra.mxu0 %v2803
    %2821 = vmatprep.subr.bf16.mxu0 0
    %2822 = vmatpush1.bf16.xpose.msra.mxu0 %v2806
    %2823 = vmatprep.subr.bf16.mxu0 0
    %2824 = vmatpush1.bf16.xpose.msra.mxu0 %v2809
    %2825 = vmatprep.subr.bf16.mxu0 0
    %2826 = vmatpush1.bf16.xpose.msra.mxu0 %v2812
    %2827 = vmatprep.subr.bf16.mxu0 0
    %2828 = vmatpush1.bf16.xpose.msra.mxu0 %v2815
    %2829 = vmatprep.subr.bf16.mxu0 0
    %2830 = vmatpush1.bf16.xpose.msra.mxu0 0
    %2831 = vmatprep.subr.bf16.mxu0 0
    %2832 = vmatpush1.bf16.xpose.msra.mxu0 0
    %2833 = vmatprep.subr.bf16.mxu0 0
    %2834 = vmatpush1.bf16.xpose.msra.mxu0 0
    %2835 = vmatprep.subr.bf16.mxu0 0
    %2836 = vmatpush1.bf16.xpose.msra.mxu0 0
    %2837 = vmatprep.subr.bf16.mxu0 0
    %2838 = vmatpush1.bf16.xpose.msra.mxu0 0
    %2839 = vmatprep.subr.bf16.mxu0 0
    %2840 = vmatpush1.bf16.xpose.msra.mxu0 0
    %2841 = vmatprep.subr.bf16.mxu0 0
    %2842 = vmatpush1.bf16.xpose.msra.mxu0 0
    %2843 = vmatprep.subr.bf16.mxu0 0
    %2844 = vmatpush1.bf16.xpose.msra.mxu0 0
    %2845 = vmatprep.subr.bf16.mxu0 0
    %2846 = vmatpush1.bf16.xpose.msra.mxu0 0
    %2847 = vmatprep.subr.bf16.mxu0 0
    %2848 = vmatpush1.bf16.xpose.msra.mxu0 0
    %2849 = vmatprep.mubr.bf16.mxu0 0
    %2850 = vmatmul.mubr.bf16.gmra.mrb[0].mxu0 %v2797
    %v2851 = vpop.f32.mrb[0].mxu0
    %v2852 = vadd.f32 %v2475, %v2851
    %v2853 = vpop.f32.mrb[0].mxu0
    %v2854 = vpop.f32.mrb[0].mxu0
    %v2855 = vadd.f32 %v2476, %v2854
    %v2856 = vpop.f32.mrb[0].mxu0
    %2857 = vdwg.mxu0
    %v2858 = vsel %vm2540, %v2852, -inf
    %2859 = vmax.xlane.f32.xlu0 %v2858
    %v2860 = vpop.xlane.xlu0 %2859
    %v2861 = vsel %vm2540, %v2855, -inf
    %2862 = vmax.xlane.f32.xlu0 %v2861
    %v2863 = vpop.xlane.xlu0 %2862
    %v2864 = vsub.f32 %v2852, %v2860
    %v2865 = vsub.f32 %v2855, %v2863
    %v2866 = vmul.f32 %v2864, 1.442695
    %v2867 = vpow.pop %v2866
    %v2868 = vmul.f32 %v2865, 1.442695
    %v2869 = vpow.pop %v2868
    %v2870 = vsel %vm2540, %v2867, 0.0
    %2871 = vadd.xlane.f32.xlu0 %v2870
    %v2872 = vpop.xlane.xlu0 %2871
    %v2873 = vsel %vm2540, %v2869, 0.0
    %2874 = vadd.xlane.f32.xlu0 %v2873
    %v2875 = vpop.xlane.xlu0 %2874
    %v2876 = vrcp.pop %v2872
    %v2877 = vmul.f32 %v2867, %v2876
    %v2878 = vrcp.pop %v2875
    %v2879 = vmul.f32 %v2869, %v2878
    %v2880 = vpack.c.bf16 %v2879, %v2877
    %2881 = vrot.lane.b32.xlu0 %v2469, 120
    %v2882 = vpop.permute.xlu0 %2881
    %2883 = vrot.lane.b32.xlu0 %v2470, 120
    %v2884 = vpop.permute.xlu0 %2883
    %2885 = vrot.lane.b32.xlu0 %v2471, 120
    %v2886 = vpop.permute.xlu0 %2885
    %2887 = vrot.lane.b32.xlu0 %v2472, 120
    %v2888 = vpop.permute.xlu0 %2887
    %2889 = vrot.lane.b32.xlu0 %v2473, 120
    %v2890 = vpop.permute.xlu0 %2889
    %2891 = vrot.lane.b32.xlu0 %v2474, 120
    %v2892 = vpop.permute.xlu0 %2891
    %v2900 = vsel %vm2540, %v2880, 0
    %2902 = vmatprep.subr.bf16.mxu0 0
    %2903 = vmatpush1.bf16.msra.mxu0 %v2882
    %2904 = vmatprep.subr.bf16.mxu0 0
    %2905 = vmatpush1.bf16.msra.mxu0 %v2884
    %2906 = vmatprep.subr.bf16.mxu0 0
    %2907 = vmatpush1.bf16.msra.mxu0 %v2886
    %2908 = vmatprep.subr.bf16.mxu0 0
    %2909 = vmatpush1.bf16.msra.mxu0 %v2888
    %2910 = vmatprep.subr.bf16.mxu0 0
    %2911 = vmatpush1.bf16.msra.mxu0 %v2890
    %2912 = vmatprep.subr.bf16.mxu0 0
    %2913 = vmatpush1.bf16.msra.mxu0 %v2892
    %2914 = vmatprep.subr.bf16.mxu0 0
    %2915 = vmatpush1.bf16.msra.mxu0 0
    %2916 = vmatprep.subr.bf16.mxu0 0
    %2917 = vmatpush1.bf16.msra.mxu0 0
    %2918 = vmatprep.subr.bf16.mxu0 0
    %2919 = vmatpush1.bf16.msra.mxu0 0
    %2920 = vmatprep.subr.bf16.mxu0 0
    %2921 = vmatpush1.bf16.msra.mxu0 0
    %2922 = vmatprep.subr.bf16.mxu0 0
    %2923 = vmatpush1.bf16.msra.mxu0 0
    %2924 = vmatprep.subr.bf16.mxu0 0
    %2925 = vmatpush1.bf16.msra.mxu0 0
    %2926 = vmatprep.subr.bf16.mxu0 0
    %2927 = vmatpush1.bf16.msra.mxu0 0
    %2928 = vmatprep.subr.bf16.mxu0 0
    %2929 = vmatpush1.bf16.msra.mxu0 0
    %2930 = vmatprep.subr.bf16.mxu0 0
    %2931 = vmatpush1.bf16.msra.mxu0 0
    %2932 = vmatprep.subr.bf16.mxu0 0
    %2933 = vmatpush1.bf16.msra.mxu0 0
    %2934 = vmatprep.mubr.bf16.mxu0 0
    %2935 = vmatmul.mubr.bf16.gmra.mrb[0].mxu0 %v2900
    %v2936 = vpop.f32.mrb[0].mxu0
    %v2937 = vadd.f32 0.0, %v2936
    %v2938 = vpop.f32.mrb[0].mxu0
    %v2939 = vpop.f32.mrb[0].mxu0
    %v2940 = vadd.f32 0.0, %v2939
    %v2941 = vpop.f32.mrb[0].mxu0
    %2942 = vdwg.mxu0
    %2943 = vrot.lane.b32.xlu0 %v2248, 116
    %v2944 = vpop.permute.xlu0 %2943
    %2945 = vrot.lane.b32.xlu0 %v2365, 116
    %v2946 = vpop.permute.xlu0 %2945
    %2947 = vrot.lane.b32.xlu0 %v2366, 116
    %v2948 = vpop.permute.xlu0 %2947
    %2949 = vrot.lane.b32.xlu0 %v2367, 116
    %v2950 = vpop.permute.xlu0 %2949
    %2951 = vrot.lane.b32.xlu0 %v2368, 116
    %v2952 = vpop.permute.xlu0 %2951
    %2953 = vrot.lane.b32.xlu0 %v2369, 116
    %v2954 = vpop.permute.xlu0 %2953
    %2955 = vrot.lane.b32.xlu0 %v2370, 116
    %v2956 = vpop.permute.xlu0 %2955
    %v2958 = vsel %vm2477, %v2944, 0
    %v2961 = vsel %vm2477, %v2946, 0
    %v2964 = vsel %vm2477, %v2948, 0
    %v2967 = vsel %vm2477, %v2950, 0
    %v2970 = vsel %vm2477, %v2952, 0
    %v2973 = vsel %vm2477, %v2954, 0
    %v2976 = vsel %vm2477, %v2956, 0
    %2978 = vmatprep.subr.bf16.mxu0 0
    %2979 = vmatpush1.bf16.xpose.msra.mxu0 %v2961
    %2980 = vmatprep.subr.bf16.mxu0 0
    %2981 = vmatpush1.bf16.xpose.msra.mxu0 %v2964
    %2982 = vmatprep.subr.bf16.mxu0 0
    %2983 = vmatpush1.bf16.xpose.msra.mxu0 %v2967
    %2984 = vmatprep.subr.bf16.mxu0 0
    %2985 = vmatpush1.bf16.xpose.msra.mxu0 %v2970
    %2986 = vmatprep.subr.bf16.mxu0 0
    %2987 = vmatpush1.bf16.xpose.msra.mxu0 %v2973
    %2988 = vmatprep.subr.bf16.mxu0 0
    %2989 = vmatpush1.bf16.xpose.msra.mxu0 %v2976
    %2990 = vmatprep.subr.bf16.mxu0 0
    %2991 = vmatpush1.bf16.xpose.msra.mxu0 0
    %2992 = vmatprep.subr.bf16.mxu0 0
    %2993 = vmatpush1.bf16.xpose.msra.mxu0 0
    %2994 = vmatprep.subr.bf16.mxu0 0
    %2995 = vmatpush1.bf16.xpose.msra.mxu0 0
    %2996 = vmatprep.subr.bf16.mxu0 0
    %2997 = vmatpush1.bf16.xpose.msra.mxu0 0
    %2998 = vmatprep.subr.bf16.mxu0 0
    %2999 = vmatpush1.bf16.xpose.msra.mxu0 0
    %3000 = vmatprep.subr.bf16.mxu0 0
    %3001 = vmatpush1.bf16.xpose.msra.mxu0 0
    %3002 = vmatprep.subr.bf16.mxu0 0
    %3003 = vmatpush1.bf16.xpose.msra.mxu0 0
    %3004 = vmatprep.subr.bf16.mxu0 0
    %3005 = vmatpush1.bf16.xpose.msra.mxu0 0
    %3006 = vmatprep.subr.bf16.mxu0 0
    %3007 = vmatpush1.bf16.xpose.msra.mxu0 0
    %3008 = vmatprep.subr.bf16.mxu0 0
    %3009 = vmatpush1.bf16.xpose.msra.mxu0 0
    %3010 = vmatprep.mubr.bf16.mxu0 0
    %3011 = vmatmul.mubr.bf16.gmra.mrb[0].mxu0 %v2958
    %v3012 = vpop.f32.mrb[0].mxu0
    %v3013 = vadd.f32 %v2475, %v3012
    %v3014 = vpop.f32.mrb[0].mxu0
    %v3015 = vpop.f32.mrb[0].mxu0
    %v3016 = vadd.f32 %v2476, %v3015
    %v3017 = vpop.f32.mrb[0].mxu0
    %3018 = vdwg.mxu0
    %v3019 = vsel %vm2540, %v3013, -inf
    %3020 = vmax.xlane.f32.xlu0 %v3019
    %v3021 = vpop.xlane.xlu0 %3020
    %v3022 = vsel %vm2540, %v3016, -inf
    %3023 = vmax.xlane.f32.xlu0 %v3022
    %v3024 = vpop.xlane.xlu0 %3023
    %v3025 = vsub.f32 %v3013, %v3021
    %v3026 = vsub.f32 %v3016, %v3024
    %v3027 = vmul.f32 %v3025, 1.442695
    %v3028 = vpow.pop %v3027
    %v3029 = vmul.f32 %v3026, 1.442695
    %v3030 = vpow.pop %v3029
    %v3031 = vsel %vm2540, %v3028, 0.0
    %3032 = vadd.xlane.f32.xlu0 %v3031
    %v3033 = vpop.xlane.xlu0 %3032
    %v3034 = vsel %vm2540, %v3030, 0.0
    %3035 = vadd.xlane.f32.xlu0 %v3034
    %v3036 = vpop.xlane.xlu0 %3035
    %v3037 = vrcp.pop %v3033
    %v3038 = vmul.f32 %v3028, %v3037
    %v3039 = vrcp.pop %v3036
    %v3040 = vmul.f32 %v3030, %v3039
    %v3041 = vpack.c.bf16 %v3040, %v3038
    %3042 = vrot.lane.b32.xlu0 %v2469, 116
    %v3043 = vpop.permute.xlu0 %3042
    %3044 = vrot.lane.b32.xlu0 %v2470, 116
    %v3045 = vpop.permute.xlu0 %3044
    %3046 = vrot.lane.b32.xlu0 %v2471, 116
    %v3047 = vpop.permute.xlu0 %3046
    %3048 = vrot.lane.b32.xlu0 %v2472, 116
    %v3049 = vpop.permute.xlu0 %3048
    %3050 = vrot.lane.b32.xlu0 %v2473, 116
    %v3051 = vpop.permute.xlu0 %3050
    %3052 = vrot.lane.b32.xlu0 %v2474, 116
    %v3053 = vpop.permute.xlu0 %3052
    %v3061 = vsel %vm2540, %v3041, 0
    %3063 = vmatprep.subr.bf16.mxu0 0
    %3064 = vmatpush1.bf16.msra.mxu0 %v3043
    %3065 = vmatprep.subr.bf16.mxu0 0
    %3066 = vmatpush1.bf16.msra.mxu0 %v3045
    %3067 = vmatprep.subr.bf16.mxu0 0
    %3068 = vmatpush1.bf16.msra.mxu0 %v3047
    %3069 = vmatprep.subr.bf16.mxu0 0
    %3070 = vmatpush1.bf16.msra.mxu0 %v3049
    %3071 = vmatprep.subr.bf16.mxu0 0
    %3072 = vmatpush1.bf16.msra.mxu0 %v3051
    %3073 = vmatprep.subr.bf16.mxu0 0
    %3074 = vmatpush1.bf16.msra.mxu0 %v3053
    %3075 = vmatprep.subr.bf16.mxu0 0
    %3076 = vmatpush1.bf16.msra.mxu0 0
    %3077 = vmatprep.subr.bf16.mxu0 0
    %3078 = vmatpush1.bf16.msra.mxu0 0
    %3079 = vmatprep.subr.bf16.mxu0 0
    %3080 = vmatpush1.bf16.msra.mxu0 0
    %3081 = vmatprep.subr.bf16.mxu0 0
    %3082 = vmatpush1.bf16.msra.mxu0 0
    %3083 = vmatprep.subr.bf16.mxu0 0
    %3084 = vmatpush1.bf16.msra.mxu0 0
    %3085 = vmatprep.subr.bf16.mxu0 0
    %3086 = vmatpush1.bf16.msra.mxu0 0
    %3087 = vmatprep.subr.bf16.mxu0 0
    %3088 = vmatpush1.bf16.msra.mxu0 0
    %3089 = vmatprep.subr.bf16.mxu0 0
    %3090 = vmatpush1.bf16.msra.mxu0 0
    %3091 = vmatprep.subr.bf16.mxu0 0
    %3092 = vmatpush1.bf16.msra.mxu0 0
    %3093 = vmatprep.subr.bf16.mxu0 0
    %3094 = vmatpush1.bf16.msra.mxu0 0
    %3095 = vmatprep.mubr.bf16.mxu0 0
    %3096 = vmatmul.mubr.bf16.gmra.mrb[0].mxu0 %v3061
    %v3097 = vpop.f32.mrb[0].mxu0
    %v3098 = vadd.f32 0.0, %v3097
    %v3099 = vpop.f32.mrb[0].mxu0
    %v3100 = vpop.f32.mrb[0].mxu0
    %v3101 = vadd.f32 0.0, %v3100
    %v3102 = vpop.f32.mrb[0].mxu0
    %3103 = vdwg.mxu0
    %3104 = vrot.lane.b32.xlu0 %v2248, 112
    %v3105 = vpop.permute.xlu0 %3104
    %3106 = vrot.lane.b32.xlu0 %v2365, 112
    %v3107 = vpop.permute.xlu0 %3106
    %3108 = vrot.lane.b32.xlu0 %v2366, 112
    %v3109 = vpop.permute.xlu0 %3108
    %3110 = vrot.lane.b32.xlu0 %v2367, 112
    %v3111 = vpop.permute.xlu0 %3110
    %3112 = vrot.lane.b32.xlu0 %v2368, 112
    %v3113 = vpop.permute.xlu0 %3112
    %3114 = vrot.lane.b32.xlu0 %v2369, 112
    %v3115 = vpop.permute.xlu0 %3114
    %3116 = vrot.lane.b32.xlu0 %v2370, 112
    %v3117 = vpop.permute.xlu0 %3116
    %v3119 = vsel %vm2477, %v3105, 0
    %v3122 = vsel %vm2477, %v3107, 0
    %v3125 = vsel %vm2477, %v3109, 0
    %v3128 = vsel %vm2477, %v3111, 0
    %v3131 = vsel %vm2477, %v3113, 0
    %v3134 = vsel %vm2477, %v3115, 0
    %v3137 = vsel %vm2477, %v3117, 0
    %3139 = vmatprep.subr.bf16.mxu0 0
    %3140 = vmatpush1.bf16.xpose.msra.mxu0 %v3122
    %3141 = vmatprep.subr.bf16.mxu0 0
    %3142 = vmatpush1.bf16.xpose.msra.mxu0 %v3125
    %3143 = vmatprep.subr.bf16.mxu0 0
    %3144 = vmatpush1.bf16.xpose.msra.mxu0 %v3128
    %3145 = vmatprep.subr.bf16.mxu0 0
    %3146 = vmatpush1.bf16.xpose.msra.mxu0 %v3131
    %3147 = vmatprep.subr.bf16.mxu0 0
    %3148 = vmatpush1.bf16.xpose.msra.mxu0 %v3134
    %3149 = vmatprep.subr.bf16.mxu0 0
    %3150 = vmatpush1.bf16.xpose.msra.mxu0 %v3137
    %3151 = vmatprep.subr.bf16.mxu0 0
    %3152 = vmatpush1.bf16.xpose.msra.mxu0 0
    %3153 = vmatprep.subr.bf16.mxu0 0
    %3154 = vmatpush1.bf16.xpose.msra.mxu0 0
    %3155 = vmatprep.subr.bf16.mxu0 0
    %3156 = vmatpush1.bf16.xpose.msra.mxu0 0
    %3157 = vmatprep.subr.bf16.mxu0 0
    %3158 = vmatpush1.bf16.xpose.msra.mxu0 0
    %3159 = vmatprep.subr.bf16.mxu0 0
    %3160 = vmatpush1.bf16.xpose.msra.mxu0 0
    %3161 = vmatprep.subr.bf16.mxu0 0
    %3162 = vmatpush1.bf16.xpose.msra.mxu0 0
    %3163 = vmatprep.subr.bf16.mxu0 0
    %3164 = vmatpush1.bf16.xpose.msra.mxu0 0
    %3165 = vmatprep.subr.bf16.mxu0 0
    %3166 = vmatpush1.bf16.xpose.msra.mxu0 0
    %3167 = vmatprep.subr.bf16.mxu0 0
    %3168 = vmatpush1.bf16.xpose.msra.mxu0 0
    %3169 = vmatprep.subr.bf16.mxu0 0
    %3170 = vmatpush1.bf16.xpose.msra.mxu0 0
    %3171 = vmatprep.mubr.bf16.mxu0 0
    %3172 = vmatmul.mubr.bf16.gmra.mrb[0].mxu0 %v3119
    %v3173 = vpop.f32.mrb[0].mxu0
    %v3174 = vadd.f32 %v2475, %v3173
    %v3175 = vpop.f32.mrb[0].mxu0
    %v3176 = vpop.f32.mrb[0].mxu0
    %v3177 = vadd.f32 %v2476, %v3176
    %v3178 = vpop.f32.mrb[0].mxu0
    %3179 = vdwg.mxu0
    %v3180 = vsel %vm2540, %v3174, -inf
    %3181 = vmax.xlane.f32.xlu0 %v3180
    %v3182 = vpop.xlane.xlu0 %3181
    %v3183 = vsel %vm2540, %v3177, -inf
    %3184 = vmax.xlane.f32.xlu0 %v3183
    %v3185 = vpop.xlane.xlu0 %3184
    %v3186 = vsub.f32 %v3174, %v3182
    %v3187 = vsub.f32 %v3177, %v3185
    %v3188 = vmul.f32 %v3186, 1.442695
    %v3189 = vpow.pop %v3188
    %v3190 = vmul.f32 %v3187, 1.442695
    %v3191 = vpow.pop %v3190
    %v3192 = vsel %vm2540, %v3189, 0.0
    %3193 = vadd.xlane.f32.xlu0 %v3192
    %v3194 = vpop.xlane.xlu0 %3193
    %v3195 = vsel %vm2540, %v3191, 0.0
    %3196 = vadd.xlane.f32.xlu0 %v3195
    %v3197 = vpop.xlane.xlu0 %3196
    %v3198 = vrcp.pop %v3194
    %v3199 = vmul.f32 %v3189, %v3198
    %v3200 = vrcp.pop %v3197
    %v3201 = vmul.f32 %v3191, %v3200
    %v3202 = vpack.c.bf16 %v3201, %v3199
    %3203 = vrot.lane.b32.xlu0 %v2469, 112
    %v3204 = vpop.permute.xlu0 %3203
    %3205 = vrot.lane.b32.xlu0 %v2470, 112
    %v3206 = vpop.permute.xlu0 %3205
    %3207 = vrot.lane.b32.xlu0 %v2471, 112
    %v3208 = vpop.permute.xlu0 %3207
    %3209 = vrot.lane.b32.xlu0 %v2472, 112
    %v3210 = vpop.permute.xlu0 %3209
    %3211 = vrot.lane.b32.xlu0 %v2473, 112
    %v3212 = vpop.permute.xlu0 %3211
    %3213 = vrot.lane.b32.xlu0 %v2474, 112
    %v3214 = vpop.permute.xlu0 %3213
    %v3222 = vsel %vm2540, %v3202, 0
    %3224 = vmatprep.subr.bf16.mxu0 0
    %3225 = vmatpush1.bf16.msra.mxu0 %v3204
    %3226 = vmatprep.subr.bf16.mxu0 0
    %3227 = vmatpush1.bf16.msra.mxu0 %v3206
    %3228 = vmatprep.subr.bf16.mxu0 0
    %3229 = vmatpush1.bf16.msra.mxu0 %v3208
    %3230 = vmatprep.subr.bf16.mxu0 0
    %3231 = vmatpush1.bf16.msra.mxu0 %v3210
    %3232 = vmatprep.subr.bf16.mxu0 0
    %3233 = vmatpush1.bf16.msra.mxu0 %v3212
    %3234 = vmatprep.subr.bf16.mxu0 0
    %3235 = vmatpush1.bf16.msra.mxu0 %v3214
    %3236 = vmatprep.subr.bf16.mxu0 0
    %3237 = vmatpush1.bf16.msra.mxu0 0
    %3238 = vmatprep.subr.bf16.mxu0 0
    %3239 = vmatpush1.bf16.msra.mxu0 0
    %3240 = vmatprep.subr.bf16.mxu0 0
    %3241 = vmatpush1.bf16.msra.mxu0 0
    %3242 = vmatprep.subr.bf16.mxu0 0
    %3243 = vmatpush1.bf16.msra.mxu0 0
    %3244 = vmatprep.subr.bf16.mxu0 0
    %3245 = vmatpush1.bf16.msra.mxu0 0
    %3246 = vmatprep.subr.bf16.mxu0 0
    %3247 = vmatpush1.bf16.msra.mxu0 0
    %3248 = vmatprep.subr.bf16.mxu0 0
    %3249 = vmatpush1.bf16.msra.mxu0 0
    %3250 = vmatprep.subr.bf16.mxu0 0
    %3251 = vmatpush1.bf16.msra.mxu0 0
    %3252 = vmatprep.subr.bf16.mxu0 0
    %3253 = vmatpush1.bf16.msra.mxu0 0
    %3254 = vmatprep.subr.bf16.mxu0 0
    %3255 = vmatpush1.bf16.msra.mxu0 0
    %3256 = vmatprep.mubr.bf16.mxu0 0
    %3257 = vmatmul.mubr.bf16.gmra.mrb[0].mxu0 %v3222
    %v3258 = vpop.f32.mrb[0].mxu0
    %v3259 = vadd.f32 0.0, %v3258
    %v3260 = vpop.f32.mrb[0].mxu0
    %v3261 = vpop.f32.mrb[0].mxu0
    %v3262 = vadd.f32 0.0, %v3261
    %v3263 = vpop.f32.mrb[0].mxu0
    %3264 = vdwg.mxu0
    %3265 = vrot.lane.b32.xlu0 %v2248, 108
    %v3266 = vpop.permute.xlu0 %3265
    %3267 = vrot.lane.b32.xlu0 %v2365, 108
    %v3268 = vpop.permute.xlu0 %3267
    %3269 = vrot.lane.b32.xlu0 %v2366, 108
    %v3270 = vpop.permute.xlu0 %3269
    %3271 = vrot.lane.b32.xlu0 %v2367, 108
    %v3272 = vpop.permute.xlu0 %3271
    %3273 = vrot.lane.b32.xlu0 %v2368, 108
    %v3274 = vpop.permute.xlu0 %3273
    %3275 = vrot.lane.b32.xlu0 %v2369, 108
    %v3276 = vpop.permute.xlu0 %3275
    %3277 = vrot.lane.b32.xlu0 %v2370, 108
    %v3278 = vpop.permute.xlu0 %3277
    %v3280 = vsel %vm2477, %v3266, 0
    %v3283 = vsel %vm2477, %v3268, 0
    %v3286 = vsel %vm2477, %v3270, 0
    %v3289 = vsel %vm2477, %v3272, 0
    %v3292 = vsel %vm2477, %v3274, 0
    %v3295 = vsel %vm2477, %v3276, 0
    %v3298 = vsel %vm2477, %v3278, 0
    %3300 = vmatprep.subr.bf16.mxu0 0
    %3301 = vmatpush1.bf16.xpose.msra.mxu0 %v3283
    %3302 = vmatprep.subr.bf16.mxu0 0
    %3303 = vmatpush1.bf16.xpose.msra.mxu0 %v3286
    %3304 = vmatprep.subr.bf16.mxu0 0
    %3305 = vmatpush1.bf16.xpose.msra.mxu0 %v3289
    %3306 = vmatprep.subr.bf16.mxu0 0
    %3307 = vmatpush1.bf16.xpose.msra.mxu0 %v3292
    %3308 = vmatprep.subr.bf16.mxu0 0
    %3309 = vmatpush1.bf16.xpose.msra.mxu0 %v3295
    %3310 = vmatprep.subr.bf16.mxu0 0
    %3311 = vmatpush1.bf16.xpose.msra.mxu0 %v3298
    %3312 = vmatprep.subr.bf16.mxu0 0
    %3313 = vmatpush1.bf16.xpose.msra.mxu0 0
    %3314 = vmatprep.subr.bf16.mxu0 0
    %3315 = vmatpush1.bf16.xpose.msra.mxu0 0
    %3316 = vmatprep.subr.bf16.mxu0 0
    %3317 = vmatpush1.bf16.xpose.msra.mxu0 0
    %3318 = vmatprep.subr.bf16.mxu0 0
    %3319 = vmatpush1.bf16.xpose.msra.mxu0 0
    %3320 = vmatprep.subr.bf16.mxu0 0
    %3321 = vmatpush1.bf16.xpose.msra.mxu0 0
    %3322 = vmatprep.subr.bf16.mxu0 0
    %3323 = vmatpush1.bf16.xpose.msra.mxu0 0
    %3324 = vmatprep.subr.bf16.mxu0 0
    %3325 = vmatpush1.bf16.xpose.msra.mxu0 0
    %3326 = vmatprep.subr.bf16.mxu0 0
    %3327 = vmatpush1.bf16.xpose.msra.mxu0 0
    %3328 = vmatprep.subr.bf16.mxu0 0
    %3329 = vmatpush1.bf16.xpose.msra.mxu0 0
    %3330 = vmatprep.subr.bf16.mxu0 0
    %3331 = vmatpush1.bf16.xpose.msra.mxu0 0
    %3332 = vmatprep.mubr.bf16.mxu0 0
    %3333 = vmatmul.mubr.bf16.gmra.mrb[0].mxu0 %v3280
    %v3334 = vpop.f32.mrb[0].mxu0
    %v3335 = vadd.f32 %v2475, %v3334
    %v3336 = vpop.f32.mrb[0].mxu0
    %v3337 = vpop.f32.mrb[0].mxu0
    %v3338 = vadd.f32 %v2476, %v3337
    %v3339 = vpop.f32.mrb[0].mxu0
    %3340 = vdwg.mxu0
    %v3341 = vsel %vm2540, %v3335, -inf
    %3342 = vmax.xlane.f32.xlu0 %v3341
    %v3343 = vpop.xlane.xlu0 %3342
    %v3344 = vsel %vm2540, %v3338, -inf
    %3345 = vmax.xlane.f32.xlu0 %v3344
    %v3346 = vpop.xlane.xlu0 %3345
    %v3347 = vsub.f32 %v3335, %v3343
    %v3348 = vsub.f32 %v3338, %v3346
    %v3349 = vmul.f32 %v3347, 1.442695
    %v3350 = vpow.pop %v3349
    %v3351 = vmul.f32 %v3348, 1.442695
    %v3352 = vpow.pop %v3351
    %v3353 = vsel %vm2540, %v3350, 0.0
    %3354 = vadd.xlane.f32.xlu0 %v3353
    %v3355 = vpop.xlane.xlu0 %3354
    %v3356 = vsel %vm2540, %v3352, 0.0
    %3357 = vadd.xlane.f32.xlu0 %v3356
    %v3358 = vpop.xlane.xlu0 %3357
    %v3359 = vrcp.pop %v3355
    %v3360 = vmul.f32 %v3350, %v3359
    %v3361 = vrcp.pop %v3358
    %v3362 = vmul.f32 %v3352, %v3361
    %v3363 = vpack.c.bf16 %v3362, %v3360
    %3364 = vrot.lane.b32.xlu0 %v2469, 108
    %v3365 = vpop.permute.xlu0 %3364
    %3366 = vrot.lane.b32.xlu0 %v2470, 108
    %v3367 = vpop.permute.xlu0 %3366
    %3368 = vrot.lane.b32.xlu0 %v2471, 108
    %v3369 = vpop.permute.xlu0 %3368
    %3370 = vrot.lane.b32.xlu0 %v2472, 108
    %v3371 = vpop.permute.xlu0 %3370
    %3372 = vrot.lane.b32.xlu0 %v2473, 108
    %v3373 = vpop.permute.xlu0 %3372
    %3374 = vrot.lane.b32.xlu0 %v2474, 108
    %v3375 = vpop.permute.xlu0 %3374
    %v3383 = vsel %vm2540, %v3363, 0
    %3385 = vmatprep.subr.bf16.mxu0 0
    %3386 = vmatpush1.bf16.msra.mxu0 %v3365
    %3387 = vmatprep.subr.bf16.mxu0 0
    %3388 = vmatpush1.bf16.msra.mxu0 %v3367
    %3389 = vmatprep.subr.bf16.mxu0 0
    %3390 = vmatpush1.bf16.msra.mxu0 %v3369
    %3391 = vmatprep.subr.bf16.mxu0 0
    %3392 = vmatpush1.bf16.msra.mxu0 %v3371
    %3393 = vmatprep.subr.bf16.mxu0 0
    %3394 = vmatpush1.bf16.msra.mxu0 %v3373
    %3395 = vmatprep.subr.bf16.mxu0 0
    %3396 = vmatpush1.bf16.msra.mxu0 %v3375
    %3397 = vmatprep.subr.bf16.mxu0 0
    %3398 = vmatpush1.bf16.msra.mxu0 0
    %3399 = vmatprep.subr.bf16.mxu0 0
    %3400 = vmatpush1.bf16.msra.mxu0 0
    %3401 = vmatprep.subr.bf16.mxu0 0
    %3402 = vmatpush1.bf16.msra.mxu0 0
    %3403 = vmatprep.subr.bf16.mxu0 0
    %3404 = vmatpush1.bf16.msra.mxu0 0
    %3405 = vmatprep.subr.bf16.mxu0 0
    %3406 = vmatpush1.bf16.msra.mxu0 0
    %3407 = vmatprep.subr.bf16.mxu0 0
    %3408 = vmatpush1.bf16.msra.mxu0 0
    %3409 = vmatprep.subr.bf16.mxu0 0
    %3410 = vmatpush1.bf16.msra.mxu0 0
    %3411 = vmatprep.subr.bf16.mxu0 0
    %3412 = vmatpush1.bf16.msra.mxu0 0
    %3413 = vmatprep.subr.bf16.mxu0 0
    %3414 = vmatpush1.bf16.msra.mxu0 0
    %3415 = vmatprep.subr.bf16.mxu0 0
    %3416 = vmatpush1.bf16.msra.mxu0 0
    %3417 = vmatprep.mubr.bf16.mxu0 0
    %3418 = vmatmul.mubr.bf16.gmra.mrb[0].mxu0 %v3383
    %v3419 = vpop.f32.mrb[0].mxu0
    %v3420 = vadd.f32 0.0, %v3419
    %v3421 = vpop.f32.mrb[0].mxu0
    %v3422 = vpop.f32.mrb[0].mxu0
    %v3423 = vadd.f32 0.0, %v3422
    %v3424 = vpop.f32.mrb[0].mxu0
    %3425 = vdwg.mxu0
    %3426 = vrot.lane.b32.xlu0 %v2248, 104
    %v3427 = vpop.permute.xlu0 %3426
    %3428 = vrot.lane.b32.xlu0 %v2365, 104
    %v3429 = vpop.permute.xlu0 %3428
    %3430 = vrot.lane.b32.xlu0 %v2366, 104
    %v3431 = vpop.permute.xlu0 %3430
    %3432 = vrot.lane.b32.xlu0 %v2367, 104
    %v3433 = vpop.permute.xlu0 %3432
    %3434 = vrot.lane.b32.xlu0 %v2368, 104
    %v3435 = vpop.permute.xlu0 %3434
    %3436 = vrot.lane.b32.xlu0 %v2369, 104
    %v3437 = vpop.permute.xlu0 %3436
    %3438 = vrot.lane.b32.xlu0 %v2370, 104
    %v3439 = vpop.permute.xlu0 %3438
    %v3441 = vsel %vm2477, %v3427, 0
    %v3444 = vsel %vm2477, %v3429, 0
    %v3447 = vsel %vm2477, %v3431, 0
    %v3450 = vsel %vm2477, %v3433, 0
    %v3453 = vsel %vm2477, %v3435, 0
    %v3456 = vsel %vm2477, %v3437, 0
    %v3459 = vsel %vm2477, %v3439, 0
    %3461 = vmatprep.subr.bf16.mxu0 0
    %3462 = vmatpush1.bf16.xpose.msra.mxu0 %v3444
    %3463 = vmatprep.subr.bf16.mxu0 0
    %3464 = vmatpush1.bf16.xpose.msra.mxu0 %v3447
    %3465 = vmatprep.subr.bf16.mxu0 0
    %3466 = vmatpush1.bf16.xpose.msra.mxu0 %v3450
    %3467 = vmatprep.subr.bf16.mxu0 0
    %3468 = vmatpush1.bf16.xpose.msra.mxu0 %v3453
    %3469 = vmatprep.subr.bf16.mxu0 0
    %3470 = vmatpush1.bf16.xpose.msra.mxu0 %v3456
    %3471 = vmatprep.subr.bf16.mxu0 0
    %3472 = vmatpush1.bf16.xpose.msra.mxu0 %v3459
    %3473 = vmatprep.subr.bf16.mxu0 0
    %3474 = vmatpush1.bf16.xpose.msra.mxu0 0
    %3475 = vmatprep.subr.bf16.mxu0 0
    %3476 = vmatpush1.bf16.xpose.msra.mxu0 0
    %3477 = vmatprep.subr.bf16.mxu0 0
    %3478 = vmatpush1.bf16.xpose.msra.mxu0 0
    %3479 = vmatprep.subr.bf16.mxu0 0
    %3480 = vmatpush1.bf16.xpose.msra.mxu0 0
    %3481 = vmatprep.subr.bf16.mxu0 0
    %3482 = vmatpush1.bf16.xpose.msra.mxu0 0
    %3483 = vmatprep.subr.bf16.mxu0 0
    %3484 = vmatpush1.bf16.xpose.msra.mxu0 0
    %3485 = vmatprep.subr.bf16.mxu0 0
    %3486 = vmatpush1.bf16.xpose.msra.mxu0 0
    %3487 = vmatprep.subr.bf16.mxu0 0
    %3488 = vmatpush1.bf16.xpose.msra.mxu0 0
    %3489 = vmatprep.subr.bf16.mxu0 0
    %3490 = vmatpush1.bf16.xpose.msra.mxu0 0
    %3491 = vmatprep.subr.bf16.mxu0 0
    %3492 = vmatpush1.bf16.xpose.msra.mxu0 0
    %3493 = vmatprep.mubr.bf16.mxu0 0
    %3494 = vmatmul.mubr.bf16.gmra.mrb[0].mxu0 %v3441
    %v3495 = vpop.f32.mrb[0].mxu0
    %v3496 = vadd.f32 %v2475, %v3495
    %v3497 = vpop.f32.mrb[0].mxu0
    %v3498 = vpop.f32.mrb[0].mxu0
    %v3499 = vadd.f32 %v2476, %v3498
    %v3500 = vpop.f32.mrb[0].mxu0
    %3501 = vdwg.mxu0
    %v3502 = vsel %vm2540, %v3496, -inf
    %3503 = vmax.xlane.f32.xlu0 %v3502
    %v3504 = vpop.xlane.xlu0 %3503
    %v3505 = vsel %vm2540, %v3499, -inf
    %3506 = vmax.xlane.f32.xlu0 %v3505
    %v3507 = vpop.xlane.xlu0 %3506
    %v3508 = vsub.f32 %v3496, %v3504
    %v3509 = vsub.f32 %v3499, %v3507
    %v3510 = vmul.f32 %v3508, 1.442695
    %v3511 = vpow.pop %v3510
    %v3512 = vmul.f32 %v3509, 1.442695
    %v3513 = vpow.pop %v3512
    %v3514 = vsel %vm2540, %v3511, 0.0
    %3515 = vadd.xlane.f32.xlu0 %v3514
    %v3516 = vpop.xlane.xlu0 %3515
    %v3517 = vsel %vm2540, %v3513, 0.0
    %3518 = vadd.xlane.f32.xlu0 %v3517
    %v3519 = vpop.xlane.xlu0 %3518
    %v3520 = vrcp.pop %v3516
    %v3521 = vmul.f32 %v3511, %v3520
    %v3522 = vrcp.pop %v3519
    %v3523 = vmul.f32 %v3513, %v3522
    %v3524 = vpack.c.bf16 %v3523, %v3521
    %3525 = vrot.lane.b32.xlu0 %v2469, 104
    %v3526 = vpop.permute.xlu0 %3525
    %3527 = vrot.lane.b32.xlu0 %v2470, 104
    %v3528 = vpop.permute.xlu0 %3527
    %3529 = vrot.lane.b32.xlu0 %v2471, 104
    %v3530 = vpop.permute.xlu0 %3529
    %3531 = vrot.lane.b32.xlu0 %v2472, 104
    %v3532 = vpop.permute.xlu0 %3531
    %3533 = vrot.lane.b32.xlu0 %v2473, 104
    %v3534 = vpop.permute.xlu0 %3533
    %3535 = vrot.lane.b32.xlu0 %v2474, 104
    %v3536 = vpop.permute.xlu0 %3535
    %v3544 = vsel %vm2540, %v3524, 0
    %3546 = vmatprep.subr.bf16.mxu0 0
    %3547 = vmatpush1.bf16.msra.mxu0 %v3526
    %3548 = vmatprep.subr.bf16.mxu0 0
    %3549 = vmatpush1.bf16.msra.mxu0 %v3528
    %3550 = vmatprep.subr.bf16.mxu0 0
    %3551 = vmatpush1.bf16.msra.mxu0 %v3530
    %3552 = vmatprep.subr.bf16.mxu0 0
    %3553 = vmatpush1.bf16.msra.mxu0 %v3532
    %3554 = vmatprep.subr.bf16.mxu0 0
    %3555 = vmatpush1.bf16.msra.mxu0 %v3534
    %3556 = vmatprep.subr.bf16.mxu0 0
    %3557 = vmatpush1.bf16.msra.mxu0 %v3536
    %3558 = vmatprep.subr.bf16.mxu0 0
    %3559 = vmatpush1.bf16.msra.mxu0 0
    %3560 = vmatprep.subr.bf16.mxu0 0
    %3561 = vmatpush1.bf16.msra.mxu0 0
    %3562 = vmatprep.subr.bf16.mxu0 0
    %3563 = vmatpush1.bf16.msra.mxu0 0
    %3564 = vmatprep.subr.bf16.mxu0 0
    %3565 = vmatpush1.bf16.msra.mxu0 0
    %3566 = vmatprep.subr.bf16.mxu0 0
    %3567 = vmatpush1.bf16.msra.mxu0 0
    %3568 = vmatprep.subr.bf16.mxu0 0
    %3569 = vmatpush1.bf16.msra.mxu0 0
    %3570 = vmatprep.subr.bf16.mxu0 0
    %3571 = vmatpush1.bf16.msra.mxu0 0
    %3572 = vmatprep.subr.bf16.mxu0 0
    %3573 = vmatpush1.bf16.msra.mxu0 0
    %3574 = vmatprep.subr.bf16.mxu0 0
    %3575 = vmatpush1.bf16.msra.mxu0 0
    %3576 = vmatprep.subr.bf16.mxu0 0
    %3577 = vmatpush1.bf16.msra.mxu0 0
    %3578 = vmatprep.mubr.bf16.mxu0 0
    %3579 = vmatmul.mubr.bf16.gmra.mrb[0].mxu0 %v3544
    %v3580 = vpop.f32.mrb[0].mxu0
    %v3581 = vadd.f32 0.0, %v3580
    %v3582 = vpop.f32.mrb[0].mxu0
    %v3583 = vpop.f32.mrb[0].mxu0
    %v3584 = vadd.f32 0.0, %v3583
    %v3585 = vpop.f32.mrb[0].mxu0
    %3586 = vdwg.mxu0
    %3587 = vrot.lane.b32.xlu0 %v2248, 100
    %v3588 = vpop.permute.xlu0 %3587
    %3589 = vrot.lane.b32.xlu0 %v2365, 100
    %v3590 = vpop.permute.xlu0 %3589
    %3591 = vrot.lane.b32.xlu0 %v2366, 100
    %v3592 = vpop.permute.xlu0 %3591
    %3593 = vrot.lane.b32.xlu0 %v2367, 100
    %v3594 = vpop.permute.xlu0 %3593
    %3595 = vrot.lane.b32.xlu0 %v2368, 100
    %v3596 = vpop.permute.xlu0 %3595
    %3597 = vrot.lane.b32.xlu0 %v2369, 100
    %v3598 = vpop.permute.xlu0 %3597
    %3599 = vrot.lane.b32.xlu0 %v2370, 100
    %v3600 = vpop.permute.xlu0 %3599
    %v3602 = vsel %vm2477, %v3588, 0
    %v3605 = vsel %vm2477, %v3590, 0
    %v3608 = vsel %vm2477, %v3592, 0
    %v3611 = vsel %vm2477, %v3594, 0
    %v3614 = vsel %vm2477, %v3596, 0
    %v3617 = vsel %vm2477, %v3598, 0
    %v3620 = vsel %vm2477, %v3600, 0
    %3622 = vmatprep.subr.bf16.mxu0 0
    %3623 = vmatpush1.bf16.xpose.msra.mxu0 %v3605
    %3624 = vmatprep.subr.bf16.mxu0 0
    %3625 = vmatpush1.bf16.xpose.msra.mxu0 %v3608
    %3626 = vmatprep.subr.bf16.mxu0 0
    %3627 = vmatpush1.bf16.xpose.msra.mxu0 %v3611
    %3628 = vmatprep.subr.bf16.mxu0 0
    %3629 = vmatpush1.bf16.xpose.msra.mxu0 %v3614
    %3630 = vmatprep.subr.bf16.mxu0 0
    %3631 = vmatpush1.bf16.xpose.msra.mxu0 %v3617
    %3632 = vmatprep.subr.bf16.mxu0 0
    %3633 = vmatpush1.bf16.xpose.msra.mxu0 %v3620
    %3634 = vmatprep.subr.bf16.mxu0 0
    %3635 = vmatpush1.bf16.xpose.msra.mxu0 0
    %3636 = vmatprep.subr.bf16.mxu0 0
    %3637 = vmatpush1.bf16.xpose.msra.mxu0 0
    %3638 = vmatprep.subr.bf16.mxu0 0
    %3639 = vmatpush1.bf16.xpose.msra.mxu0 0
    %3640 = vmatprep.subr.bf16.mxu0 0
    %3641 = vmatpush1.bf16.xpose.msra.mxu0 0
    %3642 = vmatprep.subr.bf16.mxu0 0
    %3643 = vmatpush1.bf16.xpose.msra.mxu0 0
    %3644 = vmatprep.subr.bf16.mxu0 0
    %3645 = vmatpush1.bf16.xpose.msra.mxu0 0
    %3646 = vmatprep.subr.bf16.mxu0 0
    %3647 = vmatpush1.bf16.xpose.msra.mxu0 0
    %3648 = vmatprep.subr.bf16.mxu0 0
    %3649 = vmatpush1.bf16.xpose.msra.mxu0 0
    %3650 = vmatprep.subr.bf16.mxu0 0
    %3651 = vmatpush1.bf16.xpose.msra.mxu0 0
    %3652 = vmatprep.subr.bf16.mxu0 0
    %3653 = vmatpush1.bf16.xpose.msra.mxu0 0
    %3654 = vmatprep.mubr.bf16.mxu0 0
    %3655 = vmatmul.mubr.bf16.gmra.mrb[0].mxu0 %v3602
    %v3656 = vpop.f32.mrb[0].mxu0
    %v3657 = vadd.f32 %v2475, %v3656
    %v3658 = vpop.f32.mrb[0].mxu0
    %v3659 = vpop.f32.mrb[0].mxu0
    %v3660 = vadd.f32 %v2476, %v3659
    %v3661 = vpop.f32.mrb[0].mxu0
    %3662 = vdwg.mxu0
    %v3663 = vsel %vm2540, %v3657, -inf
    %3664 = vmax.xlane.f32.xlu0 %v3663
    %v3665 = vpop.xlane.xlu0 %3664
    %v3666 = vsel %vm2540, %v3660, -inf
    %3667 = vmax.xlane.f32.xlu0 %v3666
    %v3668 = vpop.xlane.xlu0 %3667
    %v3669 = vsub.f32 %v3657, %v3665
    %v3670 = vsub.f32 %v3660, %v3668
    %v3671 = vmul.f32 %v3669, 1.442695
    %v3672 = vpow.pop %v3671
    %v3673 = vmul.f32 %v3670, 1.442695
    %v3674 = vpow.pop %v3673
    %v3675 = vsel %vm2540, %v3672, 0.0
    %3676 = vadd.xlane.f32.xlu0 %v3675
    %v3677 = vpop.xlane.xlu0 %3676
    %v3678 = vsel %vm2540, %v3674, 0.0
    %3679 = vadd.xlane.f32.xlu0 %v3678
    %v3680 = vpop.xlane.xlu0 %3679
    %v3681 = vrcp.pop %v3677
    %v3682 = vmul.f32 %v3672, %v3681
    %v3683 = vrcp.pop %v3680
    %v3684 = vmul.f32 %v3674, %v3683
    %v3685 = vpack.c.bf16 %v3684, %v3682
    %3686 = vrot.lane.b32.xlu0 %v2469, 100
    %v3687 = vpop.permute.xlu0 %3686
    %3688 = vrot.lane.b32.xlu0 %v2470, 100
    %v3689 = vpop.permute.xlu0 %3688
    %3690 = vrot.lane.b32.xlu0 %v2471, 100
    %v3691 = vpop.permute.xlu0 %3690
    %3692 = vrot.lane.b32.xlu0 %v2472, 100
    %v3693 = vpop.permute.xlu0 %3692
    %3694 = vrot.lane.b32.xlu0 %v2473, 100
    %v3695 = vpop.permute.xlu0 %3694
    %3696 = vrot.lane.b32.xlu0 %v2474, 100
    %v3697 = vpop.permute.xlu0 %3696
    %v3705 = vsel %vm2540, %v3685, 0
    %3707 = vmatprep.subr.bf16.mxu0 0
    %3708 = vmatpush1.bf16.msra.mxu0 %v3687
    %3709 = vmatprep.subr.bf16.mxu0 0
    %3710 = vmatpush1.bf16.msra.mxu0 %v3689
    %3711 = vmatprep.subr.bf16.mxu0 0
    %3712 = vmatpush1.bf16.msra.mxu0 %v3691
    %3713 = vmatprep.subr.bf16.mxu0 0
    %3714 = vmatpush1.bf16.msra.mxu0 %v3693
    %3715 = vmatprep.subr.bf16.mxu0 0
    %3716 = vmatpush1.bf16.msra.mxu0 %v3695
    %3717 = vmatprep.subr.bf16.mxu0 0
    %3718 = vmatpush1.bf16.msra.mxu0 %v3697
    %3719 = vmatprep.subr.bf16.mxu0 0
    %3720 = vmatpush1.bf16.msra.mxu0 0
    %3721 = vmatprep.subr.bf16.mxu0 0
    %3722 = vmatpush1.bf16.msra.mxu0 0
    %3723 = vmatprep.subr.bf16.mxu0 0
    %3724 = vmatpush1.bf16.msra.mxu0 0
    %3725 = vmatprep.subr.bf16.mxu0 0
    %3726 = vmatpush1.bf16.msra.mxu0 0
    %3727 = vmatprep.subr.bf16.mxu0 0
    %3728 = vmatpush1.bf16.msra.mxu0 0
    %3729 = vmatprep.subr.bf16.mxu0 0
    %3730 = vmatpush1.bf16.msra.mxu0 0
    %3731 = vmatprep.subr.bf16.mxu0 0
    %3732 = vmatpush1.bf16.msra.mxu0 0
    %3733 = vmatprep.subr.bf16.mxu0 0
    %3734 = vmatpush1.bf16.msra.mxu0 0
    %3735 = vmatprep.subr.bf16.mxu0 0
    %3736 = vmatpush1.bf16.msra.mxu0 0
    %3737 = vmatprep.subr.bf16.mxu0 0
    %3738 = vmatpush1.bf16.msra.mxu0 0
    %3739 = vmatprep.mubr.bf16.mxu0 0
    %3740 = vmatmul.mubr.bf16.gmra.mrb[0].mxu0 %v3705
    %v3741 = vpop.f32.mrb[0].mxu0
    %v3742 = vadd.f32 0.0, %v3741
    %v3743 = vpop.f32.mrb[0].mxu0
    %v3744 = vpop.f32.mrb[0].mxu0
    %v3745 = vadd.f32 0.0, %v3744
    %v3746 = vpop.f32.mrb[0].mxu0
    %3747 = vdwg.mxu0
    %3750 = vrot.lane.b32.xlu0 %v2776, 4
    %v3751 = vpop.permute.xlu0 %3750
    %3752 = vrot.lane.b32.xlu0 %v2779, 4
    %v3753 = vpop.permute.xlu0 %3752
    %3758 = vrot.lane.b32.xlu0 %v2937, 8
    %v3759 = vpop.permute.xlu0 %3758
    %3760 = vrot.lane.b32.xlu0 %v2940, 8
    %v3761 = vpop.permute.xlu0 %3760
    %3766 = vrot.lane.b32.xlu0 %v3098, 12
    %v3767 = vpop.permute.xlu0 %3766
    %3768 = vrot.lane.b32.xlu0 %v3101, 12
    %v3769 = vpop.permute.xlu0 %3768
    %3774 = vrot.lane.b32.xlu0 %v3259, 16
    %v3775 = vpop.permute.xlu0 %3774
    %3776 = vrot.lane.b32.xlu0 %v3262, 16
    %v3777 = vpop.permute.xlu0 %3776
    %3782 = vrot.lane.b32.xlu0 %v3420, 20
    %v3783 = vpop.permute.xlu0 %3782
    %3784 = vrot.lane.b32.xlu0 %v3423, 20
    %v3785 = vpop.permute.xlu0 %3784
    %3790 = vrot.lane.b32.xlu0 %v3581, 24
    %v3791 = vpop.permute.xlu0 %3790
    %3792 = vrot.lane.b32.xlu0 %v3584, 24
    %v3793 = vpop.permute.xlu0 %3792
    %3798 = vrot.lane.b32.xlu0 %v3742, 28
    %v3799 = vpop.permute.xlu0 %3798
    %3800 = vrot.lane.b32.xlu0 %v3745, 28
    %v3801 = vpop.permute.xlu0 %3800
    %v3804 = vsel %vm2477, %v2602, %v3751
    %v3805 = vsel %vm2477, %v2605, %v3753
    %v3806 = vsel %vm958, %v3804, %v3759
    %v3807 = vsel %vm958, %v3805, %v3761
    %vm3808 = vcmask 97280
    %v3809 = vsel %vm3808, %v3806, %v3767
    %v3810 = vsel %vm3808, %v3807, %v3769
    %v3811 = vsel %vm1864, %v3809, %v3775
    %v3812 = vsel %vm1864, %v3810, %v3777
    %vm3813 = vcmask 162816
    %v3814 = vsel %vm3813, %v3811, %v3783
    %v3815 = vsel %vm3813, %v3812, %v3785
    %vm3816 = vcmask 195584
    %v3817 = vsel %vm3816, %v3814, %v3791
    %v3818 = vsel %vm3816, %v3815, %v3793
    %vm3819 = vcmask 228352
    %v3820 = vsel %vm3819, %v3817, %v3799
    %v3821 = vsel %vm3819, %v3818, %v3801
    %v3822 = vpack.c.bf16 %v3821, %v3820
    %s3823 = scalar_lea.vmem [#allocation6], 48
    %v3824 = vld [vmem:[%s3823] sm:$0xf]
    %v3825 = vld [vmem:[%s3823 + $0x4] sm:$0xf]
    %v3826 = vld [vmem:[%s3823 + $0x8] sm:$0xf]
    %v3827 = vld [vmem:[%s3823 + $0xc] sm:$0xf]
    %v3828 = vlaneseq
    %v3829 = vshrl.u32 %v3828, 7
    %v3830 = vsub.s32 7, %v3829
    %v3831 = vrot.slane %v793, %v3830
    %v3836 = vunpack.c.l.b16 %v3824
    %v3837 = vunpack.c.l.b16 %v3825
    %v3838 = vunpack.c.l.b16 %v3826
    %v3839 = vunpack.c.l.b16 %v3827
    %v3840 = vpack.c.b16 %v3837, %v3836
    %v3841 = vpack.c.b16 %v3839, %v3838
    %v3845 = vsel %vm858, %v3822, 0
    %3847 = vmatprep.subr.bf16.mxu0 0
    %3848 = vmatpush1.bf16.msra.mxu0 %v3840
    %3849 = vmatprep.subr.bf16.mxu0 0
    %3850 = vmatpush1.bf16.msra.mxu0 %v3841
    %3851 = vmatprep.subr.bf16.mxu0 0
    %3852 = vmatpush1.bf16.msra.mxu0 0
    %3853 = vmatprep.subr.bf16.mxu0 0
    %3854 = vmatpush1.bf16.msra.mxu0 0
    %3855 = vmatprep.subr.bf16.mxu0 0
    %3856 = vmatpush1.bf16.msra.mxu0 0
    %3857 = vmatprep.subr.bf16.mxu0 0
    %3858 = vmatpush1.bf16.msra.mxu0 0
    %3859 = vmatprep.subr.bf16.mxu0 0
    %3860 = vmatpush1.bf16.msra.mxu0 0
    %3861 = vmatprep.subr.bf16.mxu0 0
    %3862 = vmatpush1.bf16.msra.mxu0 0
    %3863 = vmatprep.subr.bf16.mxu0 0
    %3864 = vmatpush1.bf16.msra.mxu0 0
    %3865 = vmatprep.subr.bf16.mxu0 0
    %3866 = vmatpush1.bf16.msra.mxu0 0
    %3867 = vmatprep.subr.bf16.mxu0 0
    %3868 = vmatpush1.bf16.msra.mxu0 0
    %3869 = vmatprep.subr.bf16.mxu0 0
    %3870 = vmatpush1.bf16.msra.mxu0 0
    %3871 = vmatprep.subr.bf16.mxu0 0
    %3872 = vmatpush1.bf16.msra.mxu0 0
    %3873 = vmatprep.subr.bf16.mxu0 0
    %3874 = vmatpush1.bf16.msra.mxu0 0
    %3875 = vmatprep.subr.bf16.mxu0 0
    %3876 = vmatpush1.bf16.msra.mxu0 0
    %3877 = vmatprep.subr.bf16.mxu0 0
    %3878 = vmatpush1.bf16.msra.mxu0 0
    %3879 = vmatprep.mubr.bf16.mxu0 0
    %3880 = vmatmul.mubr.bf16.gmra.mrb[0].mxu0 %v3845
    %v3881 = vpop.f32.mrb[0].mxu0
    %v3882 = vadd.f32 %v3831, %v3881
    %v3883 = vpop.f32.mrb[0].mxu0
    %v3884 = vpop.f32.mrb[0].mxu0
    %v3885 = vadd.f32 %v3831, %v3884
    %v3886 = vpop.f32.mrb[0].mxu0
    %3887 = vdwg.mxu0
    %3888 = vst.msk [vmem:[#allocation9] sm:$0xff] %vm858, %v3882
    %3889 = vst.msk [vmem:[#allocation9 + $0x8] sm:$0xff] %vm858, %v3885
    // Predicated region
    $region46: #{p2m_attention_forward.1} parent=1 // pred_check
      _
    $region47: #{p2m_attention_forward.1} parent=1 // pred_check_branch
      %3891 = sbr.rel (0) target = $region49
    $region48: #{p2m_attention_forward.1} parent=1 // pred_region
      %s3893 = ssub.s32 256, 256
      %3894 = vsyncadd [#allocation5], %s3893
      %s3895 = sshll.u32 [#allocation9], 4
      %s3896 = int_to_ptr.vmem [resolvable:$true] %s3895
      %3901 = dma.vmem_to_hbm [thread:$0]  %s3896, 256, %s8, [#allocation5], 128, 128, 8
    $region49: #{p2m_attention_forward.1} parent=1 // pred_fallthru
      _
    // Predicated region
    $region50: #{p2m_attention_forward.1} parent=1 // pred_check
      _
    $region51: #{p2m_attention_forward.1} parent=1 // pred_check_branch
      %3903 = sbr.rel (0) target = $region53
    $region52: #{p2m_attention_forward.1} parent=1 // pred_region
      _
    $region53: #{p2m_attention_forward.1} parent=1 // pred_fallthru
      _
    // Predicated region
    $region54: #{p2m_attention_forward.1} parent=1 // pred_check
      _
    $region55: #{p2m_attention_forward.1} parent=1 // pred_check_branch
      %3905 = sbr.rel (0) target = $region57
    $region56: #{p2m_attention_forward.1} parent=1 // pred_region
      %3906 = dma.done [#allocation5], 256
    $region57: #{p2m_attention_forward.1} parent=1 // pred_fallthru
      _
    // Predicated region
    $region58: #{p2m_attention_forward.1} parent=1 // pred_check
      _
    $region59: #{p2m_attention_forward.1} parent=1 // pred_check_branch
      %3908 = sbr.rel (0) target = $region61
    $region60: #{p2m_attention_forward.1} parent=1 // pred_region
      _
    $region61: #{p2m_attention_forward.1} parent=1 // pred_fallthru
      _
    %3909 = vsyncpa [#allocation4], 1
    %3910 = vsyncpa [#allocation7], 1
    %3911 = vsyncpa [#allocation5], 1

</llo_original>
